<compile_context>
chip_gen: v7x
topology: tpu7x:2x2x1
jax: 0.10.0
libtpu: 0.0.40
codegen_flags: <defaults>
</compile_context>

<pallas_src>
import functools
import math

import jax
import jax.numpy as jnp
from jax.experimental import pallas as pl
from jax.experimental.pallas import tpu as pltpu


# --------------------------------------------------------------------------
# In-kernel helpers and kernels
# --------------------------------------------------------------------------
def _layer_norm(x, g, b, eps=1e-5):
    mu = jnp.mean(x, axis=-1, keepdims=True)
    var = jnp.mean((x - mu) ** 2, axis=-1, keepdims=True)
    return (x - mu) * jax.lax.rsqrt(var + eps) * g + b


def transformer_layer_kernel(n_heads, mlp_chunk,
                             x_ref, kv_ref,
                             ln1_g_ref, ln1_b_ref,
                             wq_ref, bq_ref, wk_ref, bk_ref,
                             wv_ref, bv_ref, wo_ref, bo_ref,
                             ln2_g_ref, ln2_b_ref,
                             w1_ref, b1_ref, w2_ref, b2_ref,
                             out_ref):
    """One pre-LN transformer encoder layer for a single batch element.

    Matmul operands are bf16 (native MXU path), accumulation is f32.
    """
    x = x_ref[0].astype(jnp.float32)                       # (S, W) residual f32
    S, W = x.shape
    dh = W // n_heads
    H = w1_ref.shape[1]
    scale = jnp.float32(1.0 / math.sqrt(dh))

    # Additive attention bias from the (1, S) key-validity row.  Built and
    # broadcast to (S, S) exactly ONCE, outside the unrolled head loop.
    kv = kv_ref[0]                                         # (1, S) f32
    bias = jnp.where(kv > 0.0, jnp.float32(0.0), jnp.float32(-1e9))
    bias = jnp.broadcast_to(bias, (S, S))                  # (S, S)

    # ---- Multi-head self attention (pre-LN) ----
    xn = _layer_norm(x, ln1_g_ref[...], ln1_b_ref[...]).astype(jnp.bfloat16)
    q = jnp.dot(xn, wq_ref[...], preferred_element_type=jnp.float32) + bq_ref[...]
    k = jnp.dot(xn, wk_ref[...], preferred_element_type=jnp.float32) + bk_ref[...]
    v = jnp.dot(xn, wv_ref[...], preferred_element_type=jnp.float32) + bv_ref[...]
    q = q * scale                                          # fold 1/sqrt(dh) once

    # TODO(synk): for long sequences, add flash-style query/key tiling
    # (online softmax) so the (S, S) scores never fully materialize in VMEM
    # and the grid gains a parallel query-block axis for v7x's two TCs.
    heads = []
    for h in range(n_heads):                               # static unroll
        sl = slice(h * dh, (h + 1) * dh)
        qh = q[:, sl].astype(jnp.bfloat16)
        kh = k[:, sl].astype(jnp.bfloat16)
        vh = v[:, sl].astype(jnp.bfloat16)
        # Contract the last dims directly -- no kh.T materialization.
        s = jax.lax.dot_general(qh, kh, (((1,), (1,)), ((), ())),
                                preferred_element_type=jnp.float32) + bias
        s = s - jnp.max(s, axis=-1, keepdims=True)
        p = jnp.exp(s)
        inv = pl.reciprocal(jnp.sum(p, axis=-1, keepdims=True), approx=True)
        heads.append(jnp.dot(p.astype(jnp.bfloat16), vh,
                             preferred_element_type=jnp.float32) * inv)
    # Single full-width Wo contraction instead of n_heads dh-wide matmuls
    # accumulated with VALU adds.
    ctx = jnp.concatenate(heads, axis=-1).astype(jnp.bfloat16)      # (S, W)
    attn = jnp.dot(ctx, wo_ref[...], preferred_element_type=jnp.float32)
    x = x + attn + bo_ref[...]

    # ---- MLP (pre-LN), hidden dim processed in static chunks ----
    xn2 = _layer_norm(x, ln2_g_ref[...], ln2_b_ref[...]).astype(jnp.bfloat16)
    mlp = jnp.zeros((S, W), jnp.float32)
    for c0 in range(0, H, mlp_chunk):                      # static unroll
        cs = slice(c0, c0 + mlp_chunk)
        h1 = (jnp.dot(xn2, w1_ref[:, cs], preferred_element_type=jnp.float32)
              + b1_ref[:, cs])
        # TODO(synk): PyTorch nn.GELU default is the exact erf form; tanh
        # approximation used here for a guaranteed TPU lowering.
        h1 = jax.nn.gelu(h1, approximate=True)
        mlp = mlp + jnp.dot(h1.astype(jnp.bfloat16), w2_ref[cs, :],
                            preferred_element_type=jnp.float32)
    x = x + mlp + b2_ref[...]

    out_ref[0] = x.astype(out_ref.dtype)


def project_norm_kernel(x_ref, proj_ref, out_ref):
    """pooled (B, W) @ proj (W, E_pad) followed by L2 normalization.

    proj's padding columns are zero, so they contribute nothing to the norm.
    """
    x = x_ref[...].astype(jnp.bfloat16)
    y = jnp.dot(x, proj_ref[...], preferred_element_type=jnp.float32)
    ss = jnp.sum(y * y, axis=-1, keepdims=True)
    out_ref[...] = (y * jax.lax.rsqrt(ss + 1e-12)).astype(out_ref.dtype)


# --------------------------------------------------------------------------
# Wrappers calling pallas_call
# --------------------------------------------------------------------------
def _layer_pallas_call(B, S, W, H, n_heads, mlp_chunk, out_dtype,
                       single_buffer_weights):
    def inv_spec(shape):
        nd = len(shape)
        idx = lambda b, nd=nd: (0,) * nd
        if single_buffer_weights:
            # Grid-invariant weights: one VMEM copy instead of double-buffer.
            return pl.BlockSpec(shape, idx, pipeline_mode=pl.Buffered(1))
        return pl.BlockSpec(shape, idx)

    in_specs = [
        pl.BlockSpec((1, S, W), lambda b: (b, 0, 0)),      # x
        pl.BlockSpec((1, 1, S), lambda b: (b, 0, 0)),      # key-validity row
        inv_spec((1, W)), inv_spec((1, W)),                # ln1 gamma, beta
        inv_spec((W, W)), inv_spec((1, W)),                # Wq, bq
        inv_spec((W, W)), inv_spec((1, W)),                # Wk, bk
        inv_spec((W, W)), inv_spec((1, W)),                # Wv, bv
        inv_spec((W, W)), inv_spec((1, W)),                # Wo, bo
        inv_spec((1, W)), inv_spec((1, W)),                # ln2 gamma, beta
        inv_spec((W, H)), inv_spec((1, H)),                # W1, b1
        inv_spec((H, W)), inv_spec((1, W)),                # W2, b2
    ]
    kernel = functools.partial(transformer_layer_kernel, n_heads, mlp_chunk)
    return pl.pallas_call(
        kernel,
        out_shape=jax.ShapeDtypeStruct((B, S, W), out_dtype),
        grid=(B,),
        in_specs=in_specs,
        out_specs=pl.BlockSpec((1, S, W), lambda b: (b, 0, 0)),
        compiler_params=pltpu.CompilerParams(
            dimension_semantics=("parallel",),             # batch independent
            vmem_limit_bytes=32 * 1024 * 1024),            # fits v5e/v6e/v7x
    )


def transformer_layer(x, key_valid, p, n_heads):
    # TODO(synk): fuse the layer stack / prefetch next-layer weights across
    # pallas_calls (P10) to hide per-layer weight DMA behind compute.
    B, S, W = x.shape
    H = p["w1"].shape[1]
    mlp_chunk = W if (H % W == 0 and H > W) else H
    args = (x, key_valid,
            p["ln1_g"], p["ln1_b"],
            p["wq"], p["bq"], p["wk"], p["bk"],
            p["wv"], p["bv"], p["wo"], p["bo"],
            p["ln2_g"], p["ln2_b"],
            p["w1"], p["b1"], p["w2"], p["b2"])
    try:
        return _layer_pallas_call(B, S, W, H, n_heads, mlp_chunk,
                                  x.dtype, True)(*args)
    except Exception:
        # Fallback if single-buffered (pl.Buffered(1)) specs are unsupported.
        return _layer_pallas_call(B, S, W, H, n_heads, mlp_chunk,
                                  x.dtype, False)(*args)


def project_and_normalize(pooled, proj_padded, emb_dim):
    B, W = pooled.shape
    E_pad = proj_padded.shape[1]
    out = pl.pallas_call(
        project_norm_kernel,
        out_shape=jax.ShapeDtypeStruct((B, E_pad), pooled.dtype),
        in_specs=[pl.BlockSpec((B, W), lambda: (0, 0)),
                  pl.BlockSpec((W, E_pad), lambda: (0, 0))],
        out_specs=pl.BlockSpec((B, E_pad), lambda: (0, 0)),
    )(pooled, proj_padded)
    return out[:, :emb_dim]


# --------------------------------------------------------------------------
# Model glue (plain JAX): embedding, positional encoding, pooling
# --------------------------------------------------------------------------
def sinusoidal_positional_encoding(max_seq, width):
    pos = jnp.arange(max_seq, dtype=jnp.float32)[:, None]
    i = jnp.arange(0, width, 2, dtype=jnp.float32)
    div = jnp.exp(-jnp.log(10000.0) * i / width)
    pe = jnp.zeros((max_seq, width), jnp.float32)
    pe = pe.at[:, 0::2].set(jnp.sin(pos * div))
    pe = pe.at[:, 1::2].set(jnp.cos(pos * div))
    return pe


def init_params(key, vocab_size, width, n_heads, n_layers, emb_dim):
    ks = jax.random.split(key, 2 + n_layers)
    scale = 1.0 / math.sqrt(width)
    params = {
        "embedding": 0.02 * jax.random.normal(ks[0], (vocab_size, width),
                                              jnp.float32),
        "projection": jax.random.normal(ks[1], (width, emb_dim), jnp.float32),
        "layers": [],
    }
    for l in range(n_layers):
        k = jax.random.split(ks[2 + l], 6)
        H = 4 * width
        params["layers"].append(dict(
            ln1_g=jnp.ones((1, width), jnp.float32),
            ln1_b=jnp.zeros((1, width), jnp.float32),
            wq=scale * jax.random.normal(k[0], (width, width), jnp.float32),
            bq=jnp.zeros((1, width), jnp.float32),
            wk=scale * jax.random.normal(k[1], (width, width), jnp.float32),
            bk=jnp.zeros((1, width), jnp.float32),
            wv=scale * jax.random.normal(k[2], (width, width), jnp.float32),
            bv=jnp.zeros((1, width), jnp.float32),
            wo=scale * jax.random.normal(k[3], (width, width), jnp.float32),
            bo=jnp.zeros((1, width), jnp.float32),
            ln2_g=jnp.ones((1, width), jnp.float32),
            ln2_b=jnp.zeros((1, width), jnp.float32),
            w1=scale * jax.random.normal(k[4], (width, H), jnp.float32),
            b1=jnp.zeros((1, H), jnp.float32),
            w2=(1.0 / math.sqrt(H)) * jax.random.normal(k[5], (H, width),
                                                        jnp.float32),
            b2=jnp.zeros((1, width), jnp.float32),
        ))
    return params


def prepare_params(params):
    """One-time inference prep: matmul weights -> bf16 (no per-call casts),
    and pre-build the lane-dense (W, 128*k) bf16 padded projection."""
    bf16 = jnp.bfloat16
    out = dict(params)
    out["layers"] = []
    for lp in params["layers"]:
        q = dict(lp)
        for name in ("wq", "wk", "wv", "wo", "w1", "w2"):
            q[name] = lp[name].astype(bf16)
        out["layers"].append(q)
    proj = params["projection"]
    W, E = proj.shape
    E_pad = max(128, ((E + 127) // 128) * 128)
    out["projection_padded"] = jnp.zeros((W, E_pad), bf16).at[:, :E].set(
        proj.astype(bf16))
    out["emb_dim"] = E
    return out


def text_encoder_forward(params, tokens, mask, n_heads):
    # TODO(synk): for production, pad W and S to lane/sublane-dense multiples
    # (128 / 8) with the key-validity bias neutralizing padded keys; the small
    # demo shapes below are left unpadded.
    B, S = tokens.shape
    width = params["embedding"].shape[1]
    # Embedding lookup + positional encoding (glue).
    x = jnp.take(params["embedding"], tokens, axis=0)              # (B, S, W)
    x = x + sinusoidal_positional_encoding(S, width)[None]
    # Kernel-side mask is the (B, 1, S) key-validity row (mask[b, i, j]
    # depends only on j in the reference), S x less traffic than (B, S, S).
    key_valid = mask[:, 0:1, :].astype(jnp.float32)                # (B, 1, S)
    # Transformer stack (Pallas kernels).
    for lp in params["layers"]:
        x = transformer_layer(x, key_valid, lp, n_heads)
    # Pool the last valid token:  text[arange(B), sum(mask[:,0], 1) - 1]
    last_idx = jnp.sum(mask[:, 0], axis=1).astype(jnp.int32) - 1
    pooled = x[jnp.arange(B), last_idx]                            # (B, W)
    # Projection + L2 normalization (Pallas kernel, lane-dense padded output).
    return project_and_normalize(pooled, params["projection_padded"],
                                 params["emb_dim"])


# --------------------------------------------------------------------------
if __name__ == "__main__":
    vocab_size, width, max_sequence = 100, 32, 8
    n_heads, n_layers, emb_dim = 4, 2, 16
    B, S = 2, max_sequence

    key = jax.random.PRNGKey(0)
    k_param, k_tok = jax.random.split(key)
    params = prepare_params(
        init_params(k_param, vocab_size, width, n_heads, n_layers, emb_dim))

    tokens = jax.random.randint(k_tok, (B, S), 0, vocab_size, dtype=jnp.int32)
    lengths = jnp.array([S, 5], dtype=jnp.int32)          # per-example lengths
    valid = (jnp.arange(S)[None, :] < lengths[:, None]).astype(jnp.float32)
    mask = jnp.broadcast_to(valid[:, None, :], (B, S, S))  # (B, S, S)

    out = text_encoder_forward(params, tokens, mask, n_heads)
    out = jax.block_until_ready(out)
    assert out.shape == (B, emb_dim)
    print("KERNEL_OK")
</pallas_src>

<mosaic_0001>
module attributes {stable_mosaic.version = 11 : i64} {
  func.func @transformer_layer_kernel(%arg0: i32, %arg1: memref<1x8x32xf32, #tpu.memory_space<vmem>>, %arg2: memref<1x1x8xf32, #tpu.memory_space<vmem>>, %arg3: memref<1x32xf32, #tpu.memory_space<vmem>>, %arg4: memref<1x32xf32, #tpu.memory_space<vmem>>, %arg5: memref<32x32xbf16, #tpu.memory_space<vmem>>, %arg6: memref<1x32xf32, #tpu.memory_space<vmem>>, %arg7: memref<32x32xbf16, #tpu.memory_space<vmem>>, %arg8: memref<1x32xf32, #tpu.memory_space<vmem>>, %arg9: memref<32x32xbf16, #tpu.memory_space<vmem>>, %arg10: memref<1x32xf32, #tpu.memory_space<vmem>>, %arg11: memref<32x32xbf16, #tpu.memory_space<vmem>>, %arg12: memref<1x32xf32, #tpu.memory_space<vmem>>, %arg13: memref<1x32xf32, #tpu.memory_space<vmem>>, %arg14: memref<1x32xf32, #tpu.memory_space<vmem>>, %arg15: memref<32x128xbf16, #tpu.memory_space<vmem>>, %arg16: memref<1x128xf32, #tpu.memory_space<vmem>>, %arg17: memref<128x32xbf16, #tpu.memory_space<vmem>>, %arg18: memref<1x32xf32, #tpu.memory_space<vmem>>, %arg19: memref<1x8x32xf32, #tpu.memory_space<vmem>>) attributes {dimension_semantics = [#tpu.dimension_semantics<parallel>], iteration_bounds = array<i64: 2>, scalar_prefetch = 0 : i64, scratch_operands = 0 : i64, tpu.core_type = #tpu.core_type<tc>, window_params = [{transform_indices = @transform_0, window_bounds = array<i64: 1, 8, 32>}, {transform_indices = @transform_1, window_bounds = array<i64: 1, 1, 8>}, {pipeline_mode = #tpu.pipeline_mode<synchronous>, transform_indices = @transform_2, window_bounds = array<i64: 1, 32>}, {pipeline_mode = #tpu.pipeline_mode<synchronous>, transform_indices = @transform_3, window_bounds = array<i64: 1, 32>}, {pipeline_mode = #tpu.pipeline_mode<synchronous>, transform_indices = @transform_4, window_bounds = array<i64: 32, 32>}, {pipeline_mode = #tpu.pipeline_mode<synchronous>, transform_indices = @transform_5, window_bounds = array<i64: 1, 32>}, {pipeline_mode = #tpu.pipeline_mode<synchronous>, transform_indices = @transform_6, window_bounds = array<i64: 32, 32>}, {pipeline_mode = #tpu.pipeline_mode<synchronous>, transform_indices = @transform_7, window_bounds = array<i64: 1, 32>}, {pipeline_mode = #tpu.pipeline_mode<synchronous>, transform_indices = @transform_8, window_bounds = array<i64: 32, 32>}, {pipeline_mode = #tpu.pipeline_mode<synchronous>, transform_indices = @transform_9, window_bounds = array<i64: 1, 32>}, {pipeline_mode = #tpu.pipeline_mode<synchronous>, transform_indices = @transform_10, window_bounds = array<i64: 32, 32>}, {pipeline_mode = #tpu.pipeline_mode<synchronous>, transform_indices = @transform_11, window_bounds = array<i64: 1, 32>}, {pipeline_mode = #tpu.pipeline_mode<synchronous>, transform_indices = @transform_12, window_bounds = array<i64: 1, 32>}, {pipeline_mode = #tpu.pipeline_mode<synchronous>, transform_indices = @transform_13, window_bounds = array<i64: 1, 32>}, {pipeline_mode = #tpu.pipeline_mode<synchronous>, transform_indices = @transform_14, window_bounds = array<i64: 32, 128>}, {pipeline_mode = #tpu.pipeline_mode<synchronous>, transform_indices = @transform_15, window_bounds = array<i64: 1, 128>}, {pipeline_mode = #tpu.pipeline_mode<synchronous>, transform_indices = @transform_16, window_bounds = array<i64: 128, 32>}, {pipeline_mode = #tpu.pipeline_mode<synchronous>, transform_indices = @transform_17, window_bounds = array<i64: 1, 32>}, {transform_indices = @transform_18, window_bounds = array<i64: 1, 8, 32>}]} {
    %c0 = arith.constant 0 : index
    %c0_0 = arith.constant 0 : index
    %c0_1 = arith.constant 0 : index
    %0 = vector.load %arg1[%c0, %c0_0, %c0_1] : memref<1x8x32xf32, #tpu.memory_space<vmem>>, vector<1x8x32xf32>
    %1 = vector.shape_cast %0 : vector<1x8x32xf32> to vector<8x32xf32>
    %c0_2 = arith.constant 0 : index
    %c0_3 = arith.constant 0 : index
    %c0_4 = arith.constant 0 : index
    %2 = vector.load %arg2[%c0_2, %c0_3, %c0_4] : memref<1x1x8xf32, #tpu.memory_space<vmem>>, vector<1x1x8xf32>
    %3 = vector.shape_cast %2 : vector<1x1x8xf32> to vector<1x8xf32>
    %cst = arith.constant 0.000000e+00 : f32
    %4 = vector.broadcast %cst : f32 to vector<1x8xf32>
    %5 = arith.cmpf ogt, %3, %4 : vector<1x8xf32>
    %cst_5 = arith.constant 0.000000e+00 : f32
    %cst_6 = arith.constant -1.000000e+09 : f32
    %6 = vector.broadcast %cst_5 : f32 to vector<1x8xf32>
    %7 = vector.broadcast %cst_6 : f32 to vector<1x8xf32>
    %8 = arith.select %5, %6, %7 : vector<1x8xi1>, vector<1x8xf32>
    %9 = vector.shape_cast %8 : vector<1x8xf32> to vector<1x8xf32>
    %10 = vector.broadcast %9 : vector<1x8xf32> to vector<8x8xf32>
    %c0_7 = arith.constant 0 : index
    %c0_8 = arith.constant 0 : index
    %11 = vector.load %arg3[%c0_7, %c0_8] : memref<1x32xf32, #tpu.memory_space<vmem>>, vector<1x32xf32>
    %c0_9 = arith.constant 0 : index
    %c0_10 = arith.constant 0 : index
    %12 = vector.load %arg4[%c0_9, %c0_10] : memref<1x32xf32, #tpu.memory_space<vmem>>, vector<1x32xf32>
    %cst_11 = arith.constant dense<0.000000e+00> : vector<8xf32>
    %13 = vector.multi_reduction <add>, %1, %cst_11 [1] : vector<8x32xf32> to vector<8xf32>
    %14 = vector.shape_cast %13 : vector<8xf32> to vector<8x1xf32>
    %cst_12 = arith.constant 3.200000e+01 : f32
    %15 = vector.broadcast %cst_12 : f32 to vector<8x1xf32>
    %16 = arith.divf %14, %15 : vector<8x1xf32>
    %17 = vector.broadcast %16 : vector<8x1xf32> to vector<8x32xf32>
    %18 = arith.subf %1, %17 : vector<8x32xf32>
    %19 = arith.mulf %18, %18 : vector<8x32xf32>
    %cst_13 = arith.constant dense<0.000000e+00> : vector<8xf32>
    %20 = vector.multi_reduction <add>, %19, %cst_13 [1] : vector<8x32xf32> to vector<8xf32>
    %21 = vector.shape_cast %20 : vector<8xf32> to vector<8x1xf32>
    %cst_14 = arith.constant 3.200000e+01 : f32
    %22 = vector.broadcast %cst_14 : f32 to vector<8x1xf32>
    %23 = arith.divf %21, %22 : vector<8x1xf32>
    %24 = vector.broadcast %16 : vector<8x1xf32> to vector<8x32xf32>
    %25 = arith.subf %1, %24 : vector<8x32xf32>
    %cst_15 = arith.constant 9.99999974E-6 : f32
    %26 = vector.broadcast %cst_15 : f32 to vector<8x1xf32>
    %27 = arith.addf %23, %26 : vector<8x1xf32>
    %28 = math.rsqrt %27 : vector<8x1xf32>
    %29 = vector.broadcast %28 : vector<8x1xf32> to vector<8x32xf32>
    %30 = arith.mulf %25, %29 : vector<8x32xf32>
    %31 = vector.broadcast %11 : vector<1x32xf32> to vector<8x32xf32>
    %32 = arith.mulf %30, %31 : vector<8x32xf32>
    %33 = vector.broadcast %12 : vector<1x32xf32> to vector<8x32xf32>
    %34 = arith.addf %32, %33 : vector<8x32xf32>
    %35 = arith.truncf %34 : vector<8x32xf32> to vector<8x32xbf16>
    %c0_16 = arith.constant 0 : index
    %c0_17 = arith.constant 0 : index
    %36 = vector.load %arg5[%c0_16, %c0_17] : memref<32x32xbf16, #tpu.memory_space<vmem>>, vector<32x32xbf16>
    %cst_18 = arith.constant dense<0.000000e+00> : vector<8x32xf32>
    %37 = tpu.matmul %35, %36, %cst_18 {dimension_numbers = #tpu.dot_dimension_numbers<[1], [0], [0], [1], [0, 0, 1, 1], [], []>} : vector<8x32xbf16>, vector<32x32xbf16>, vector<8x32xf32> -> vector<8x32xf32>
    %c0_19 = arith.constant 0 : index
    %c0_20 = arith.constant 0 : index
    %38 = vector.load %arg6[%c0_19, %c0_20] : memref<1x32xf32, #tpu.memory_space<vmem>>, vector<1x32xf32>
    %39 = vector.broadcast %38 : vector<1x32xf32> to vector<8x32xf32>
    %40 = arith.addf %37, %39 : vector<8x32xf32>
    %c0_21 = arith.constant 0 : index
    %c0_22 = arith.constant 0 : index
    %41 = vector.load %arg7[%c0_21, %c0_22] : memref<32x32xbf16, #tpu.memory_space<vmem>>, vector<32x32xbf16>
    %cst_23 = arith.constant dense<0.000000e+00> : vector<8x32xf32>
    %42 = tpu.matmul %35, %41, %cst_23 {dimension_numbers = #tpu.dot_dimension_numbers<[1], [0], [0], [1], [0, 0, 1, 1], [], []>} : vector<8x32xbf16>, vector<32x32xbf16>, vector<8x32xf32> -> vector<8x32xf32>
    %c0_24 = arith.constant 0 : index
    %c0_25 = arith.constant 0 : index
    %43 = vector.load %arg8[%c0_24, %c0_25] : memref<1x32xf32, #tpu.memory_space<vmem>>, vector<1x32xf32>
    %44 = vector.broadcast %43 : vector<1x32xf32> to vector<8x32xf32>
    %45 = arith.addf %42, %44 : vector<8x32xf32>
    %c0_26 = arith.constant 0 : index
    %c0_27 = arith.constant 0 : index
    %46 = vector.load %arg9[%c0_26, %c0_27] : memref<32x32xbf16, #tpu.memory_space<vmem>>, vector<32x32xbf16>
    %cst_28 = arith.constant dense<0.000000e+00> : vector<8x32xf32>
    %47 = tpu.matmul %35, %46, %cst_28 {dimension_numbers = #tpu.dot_dimension_numbers<[1], [0], [0], [1], [0, 0, 1, 1], [], []>} : vector<8x32xbf16>, vector<32x32xbf16>, vector<8x32xf32> -> vector<8x32xf32>
    %c0_29 = arith.constant 0 : index
    %c0_30 = arith.constant 0 : index
    %48 = vector.load %arg10[%c0_29, %c0_30] : memref<1x32xf32, #tpu.memory_space<vmem>>, vector<1x32xf32>
    %49 = vector.broadcast %48 : vector<1x32xf32> to vector<8x32xf32>
    %50 = arith.addf %47, %49 : vector<8x32xf32>
    %cst_31 = arith.constant 0.353553385 : f32
    %51 = vector.broadcast %cst_31 : f32 to vector<8x32xf32>
    %52 = arith.mulf %40, %51 : vector<8x32xf32>
    %53 = vector.extract_strided_slice %52 {offsets = [0, 0], sizes = [8, 8], strides = [1, 1]} : vector<8x32xf32> to vector<8x8xf32>
    %54 = arith.truncf %53 : vector<8x8xf32> to vector<8x8xbf16>
    %55 = vector.extract_strided_slice %45 {offsets = [0, 0], sizes = [8, 8], strides = [1, 1]} : vector<8x32xf32> to vector<8x8xf32>
    %56 = arith.truncf %55 : vector<8x8xf32> to vector<8x8xbf16>
    %57 = vector.extract_strided_slice %50 {offsets = [0, 0], sizes = [8, 8], strides = [1, 1]} : vector<8x32xf32> to vector<8x8xf32>
    %58 = arith.truncf %57 : vector<8x8xf32> to vector<8x8xbf16>
    %cst_32 = arith.constant dense<0.000000e+00> : vector<8x8xf32>
    %59 = tpu.matmul %54, %56, %cst_32 {dimension_numbers = #tpu.dot_dimension_numbers<[1], [1], [0], [0], [0, 0, 1, 0], [], []>} : vector<8x8xbf16>, vector<8x8xbf16>, vector<8x8xf32> -> vector<8x8xf32>
    %60 = arith.addf %59, %10 : vector<8x8xf32>
    %cst_33 = arith.constant dense<0xFF800000> : vector<8xf32>
    %61 = vector.multi_reduction <maximumf>, %60, %cst_33 [1] : vector<8x8xf32> to vector<8xf32>
    %62 = vector.shape_cast %61 : vector<8xf32> to vector<8x1xf32>
    %63 = vector.broadcast %62 : vector<8x1xf32> to vector<8x8xf32>
    %64 = arith.subf %60, %63 : vector<8x8xf32>
    %65 = math.exp %64 : vector<8x8xf32>
    %cst_34 = arith.constant dense<0.000000e+00> : vector<8xf32>
    %66 = vector.multi_reduction <add>, %65, %cst_34 [1] : vector<8x8xf32> to vector<8xf32>
    %67 = vector.shape_cast %66 : vector<8xf32> to vector<8x1xf32>
    %68 = tpu.reciprocal %67 {approx = true} : vector<8x1xf32> -> vector<8x1xf32>
    %69 = arith.truncf %65 : vector<8x8xf32> to vector<8x8xbf16>
    %cst_35 = arith.constant dense<0.000000e+00> : vector<8x8xf32>
    %70 = tpu.matmul %69, %58, %cst_35 {dimension_numbers = #tpu.dot_dimension_numbers<[1], [0], [0], [1], [0, 0, 1, 1], [], []>} : vector<8x8xbf16>, vector<8x8xbf16>, vector<8x8xf32> -> vector<8x8xf32>
    %71 = vector.broadcast %68 : vector<8x1xf32> to vector<8x8xf32>
    %72 = arith.mulf %70, %71 : vector<8x8xf32>
    %73 = vector.extract_strided_slice %52 {offsets = [0, 8], sizes = [8, 8], strides = [1, 1]} : vector<8x32xf32> to vector<8x8xf32>
    %74 = arith.truncf %73 : vector<8x8xf32> to vector<8x8xbf16>
    %75 = vector.extract_strided_slice %45 {offsets = [0, 8], sizes = [8, 8], strides = [1, 1]} : vector<8x32xf32> to vector<8x8xf32>
    %76 = arith.truncf %75 : vector<8x8xf32> to vector<8x8xbf16>
    %77 = vector.extract_strided_slice %50 {offsets = [0, 8], sizes = [8, 8], strides = [1, 1]} : vector<8x32xf32> to vector<8x8xf32>
    %78 = arith.truncf %77 : vector<8x8xf32> to vector<8x8xbf16>
    %cst_36 = arith.constant dense<0.000000e+00> : vector<8x8xf32>
    %79 = tpu.matmul %74, %76, %cst_36 {dimension_numbers = #tpu.dot_dimension_numbers<[1], [1], [0], [0], [0, 0, 1, 0], [], []>} : vector<8x8xbf16>, vector<8x8xbf16>, vector<8x8xf32> -> vector<8x8xf32>
    %80 = arith.addf %79, %10 : vector<8x8xf32>
    %cst_37 = arith.constant dense<0xFF800000> : vector<8xf32>
    %81 = vector.multi_reduction <maximumf>, %80, %cst_37 [1] : vector<8x8xf32> to vector<8xf32>
    %82 = vector.shape_cast %81 : vector<8xf32> to vector<8x1xf32>
    %83 = vector.broadcast %82 : vector<8x1xf32> to vector<8x8xf32>
    %84 = arith.subf %80, %83 : vector<8x8xf32>
    %85 = math.exp %84 : vector<8x8xf32>
    %cst_38 = arith.constant dense<0.000000e+00> : vector<8xf32>
    %86 = vector.multi_reduction <add>, %85, %cst_38 [1] : vector<8x8xf32> to vector<8xf32>
    %87 = vector.shape_cast %86 : vector<8xf32> to vector<8x1xf32>
    %88 = tpu.reciprocal %87 {approx = true} : vector<8x1xf32> -> vector<8x1xf32>
    %89 = arith.truncf %85 : vector<8x8xf32> to vector<8x8xbf16>
    %cst_39 = arith.constant dense<0.000000e+00> : vector<8x8xf32>
    %90 = tpu.matmul %89, %78, %cst_39 {dimension_numbers = #tpu.dot_dimension_numbers<[1], [0], [0], [1], [0, 0, 1, 1], [], []>} : vector<8x8xbf16>, vector<8x8xbf16>, vector<8x8xf32> -> vector<8x8xf32>
    %91 = vector.broadcast %88 : vector<8x1xf32> to vector<8x8xf32>
    %92 = arith.mulf %90, %91 : vector<8x8xf32>
    %93 = vector.extract_strided_slice %52 {offsets = [0, 16], sizes = [8, 8], strides = [1, 1]} : vector<8x32xf32> to vector<8x8xf32>
    %94 = arith.truncf %93 : vector<8x8xf32> to vector<8x8xbf16>
    %95 = vector.extract_strided_slice %45 {offsets = [0, 16], sizes = [8, 8], strides = [1, 1]} : vector<8x32xf32> to vector<8x8xf32>
    %96 = arith.truncf %95 : vector<8x8xf32> to vector<8x8xbf16>
    %97 = vector.extract_strided_slice %50 {offsets = [0, 16], sizes = [8, 8], strides = [1, 1]} : vector<8x32xf32> to vector<8x8xf32>
    %98 = arith.truncf %97 : vector<8x8xf32> to vector<8x8xbf16>
    %cst_40 = arith.constant dense<0.000000e+00> : vector<8x8xf32>
    %99 = tpu.matmul %94, %96, %cst_40 {dimension_numbers = #tpu.dot_dimension_numbers<[1], [1], [0], [0], [0, 0, 1, 0], [], []>} : vector<8x8xbf16>, vector<8x8xbf16>, vector<8x8xf32> -> vector<8x8xf32>
    %100 = arith.addf %99, %10 : vector<8x8xf32>
    %cst_41 = arith.constant dense<0xFF800000> : vector<8xf32>
    %101 = vector.multi_reduction <maximumf>, %100, %cst_41 [1] : vector<8x8xf32> to vector<8xf32>
    %102 = vector.shape_cast %101 : vector<8xf32> to vector<8x1xf32>
    %103 = vector.broadcast %102 : vector<8x1xf32> to vector<8x8xf32>
    %104 = arith.subf %100, %103 : vector<8x8xf32>
    %105 = math.exp %104 : vector<8x8xf32>
    %cst_42 = arith.constant dense<0.000000e+00> : vector<8xf32>
    %106 = vector.multi_reduction <add>, %105, %cst_42 [1] : vector<8x8xf32> to vector<8xf32>
    %107 = vector.shape_cast %106 : vector<8xf32> to vector<8x1xf32>
    %108 = tpu.reciprocal %107 {approx = true} : vector<8x1xf32> -> vector<8x1xf32>
    %109 = arith.truncf %105 : vector<8x8xf32> to vector<8x8xbf16>
    %cst_43 = arith.constant dense<0.000000e+00> : vector<8x8xf32>
    %110 = tpu.matmul %109, %98, %cst_43 {dimension_numbers = #tpu.dot_dimension_numbers<[1], [0], [0], [1], [0, 0, 1, 1], [], []>} : vector<8x8xbf16>, vector<8x8xbf16>, vector<8x8xf32> -> vector<8x8xf32>
    %111 = vector.broadcast %108 : vector<8x1xf32> to vector<8x8xf32>
    %112 = arith.mulf %110, %111 : vector<8x8xf32>
    %113 = vector.extract_strided_slice %52 {offsets = [0, 24], sizes = [8, 8], strides = [1, 1]} : vector<8x32xf32> to vector<8x8xf32>
    %114 = arith.truncf %113 : vector<8x8xf32> to vector<8x8xbf16>
    %115 = vector.extract_strided_slice %45 {offsets = [0, 24], sizes = [8, 8], strides = [1, 1]} : vector<8x32xf32> to vector<8x8xf32>
    %116 = arith.truncf %115 : vector<8x8xf32> to vector<8x8xbf16>
    %117 = vector.extract_strided_slice %50 {offsets = [0, 24], sizes = [8, 8], strides = [1, 1]} : vector<8x32xf32> to vector<8x8xf32>
    %118 = arith.truncf %117 : vector<8x8xf32> to vector<8x8xbf16>
    %cst_44 = arith.constant dense<0.000000e+00> : vector<8x8xf32>
    %119 = tpu.matmul %114, %116, %cst_44 {dimension_numbers = #tpu.dot_dimension_numbers<[1], [1], [0], [0], [0, 0, 1, 0], [], []>} : vector<8x8xbf16>, vector<8x8xbf16>, vector<8x8xf32> -> vector<8x8xf32>
    %120 = arith.addf %119, %10 : vector<8x8xf32>
    %cst_45 = arith.constant dense<0xFF800000> : vector<8xf32>
    %121 = vector.multi_reduction <maximumf>, %120, %cst_45 [1] : vector<8x8xf32> to vector<8xf32>
    %122 = vector.shape_cast %121 : vector<8xf32> to vector<8x1xf32>
    %123 = vector.broadcast %122 : vector<8x1xf32> to vector<8x8xf32>
    %124 = arith.subf %120, %123 : vector<8x8xf32>
    %125 = math.exp %124 : vector<8x8xf32>
    %cst_46 = arith.constant dense<0.000000e+00> : vector<8xf32>
    %126 = vector.multi_reduction <add>, %125, %cst_46 [1] : vector<8x8xf32> to vector<8xf32>
    %127 = vector.shape_cast %126 : vector<8xf32> to vector<8x1xf32>
    %128 = tpu.reciprocal %127 {approx = true} : vector<8x1xf32> -> vector<8x1xf32>
    %129 = arith.truncf %125 : vector<8x8xf32> to vector<8x8xbf16>
    %cst_47 = arith.constant dense<0.000000e+00> : vector<8x8xf32>
    %130 = tpu.matmul %129, %118, %cst_47 {dimension_numbers = #tpu.dot_dimension_numbers<[1], [0], [0], [1], [0, 0, 1, 1], [], []>} : vector<8x8xbf16>, vector<8x8xbf16>, vector<8x8xf32> -> vector<8x8xf32>
    %131 = vector.broadcast %128 : vector<8x1xf32> to vector<8x8xf32>
    %132 = arith.mulf %130, %131 : vector<8x8xf32>
    %133 = tpu.concatenate %72, %92, %112, %132 in 1 : vector<8x8xf32>, vector<8x8xf32>, vector<8x8xf32>, vector<8x8xf32> -> vector<8x32xf32>
    %134 = arith.truncf %133 : vector<8x32xf32> to vector<8x32xbf16>
    %c0_48 = arith.constant 0 : index
    %c0_49 = arith.constant 0 : index
    %135 = vector.load %arg11[%c0_48, %c0_49] : memref<32x32xbf16, #tpu.memory_space<vmem>>, vector<32x32xbf16>
    %cst_50 = arith.constant dense<0.000000e+00> : vector<8x32xf32>
    %136 = tpu.matmul %134, %135, %cst_50 {dimension_numbers = #tpu.dot_dimension_numbers<[1], [0], [0], [1], [0, 0, 1, 1], [], []>} : vector<8x32xbf16>, vector<32x32xbf16>, vector<8x32xf32> -> vector<8x32xf32>
    %137 = arith.addf %1, %136 : vector<8x32xf32>
    %c0_51 = arith.constant 0 : index
    %c0_52 = arith.constant 0 : index
    %138 = vector.load %arg12[%c0_51, %c0_52] : memref<1x32xf32, #tpu.memory_space<vmem>>, vector<1x32xf32>
    %139 = vector.broadcast %138 : vector<1x32xf32> to vector<8x32xf32>
    %140 = arith.addf %137, %139 : vector<8x32xf32>
    %c0_53 = arith.constant 0 : index
    %c0_54 = arith.constant 0 : index
    %141 = vector.load %arg13[%c0_53, %c0_54] : memref<1x32xf32, #tpu.memory_space<vmem>>, vector<1x32xf32>
    %c0_55 = arith.constant 0 : index
    %c0_56 = arith.constant 0 : index
    %142 = vector.load %arg14[%c0_55, %c0_56] : memref<1x32xf32, #tpu.memory_space<vmem>>, vector<1x32xf32>
    %cst_57 = arith.constant dense<0.000000e+00> : vector<8xf32>
    %143 = vector.multi_reduction <add>, %140, %cst_57 [1] : vector<8x32xf32> to vector<8xf32>
    %144 = vector.shape_cast %143 : vector<8xf32> to vector<8x1xf32>
    %cst_58 = arith.constant 3.200000e+01 : f32
    %145 = vector.broadcast %cst_58 : f32 to vector<8x1xf32>
    %146 = arith.divf %144, %145 : vector<8x1xf32>
    %147 = vector.broadcast %146 : vector<8x1xf32> to vector<8x32xf32>
    %148 = arith.subf %140, %147 : vector<8x32xf32>
    %149 = arith.mulf %148, %148 : vector<8x32xf32>
    %cst_59 = arith.constant dense<0.000000e+00> : vector<8xf32>
    %150 = vector.multi_reduction <add>, %149, %cst_59 [1] : vector<8x32xf32> to vector<8xf32>
    %151 = vector.shape_cast %150 : vector<8xf32> to vector<8x1xf32>
    %cst_60 = arith.constant 3.200000e+01 : f32
    %152 = vector.broadcast %cst_60 : f32 to vector<8x1xf32>
    %153 = arith.divf %151, %152 : vector<8x1xf32>
    %154 = vector.broadcast %146 : vector<8x1xf32> to vector<8x32xf32>
    %155 = arith.subf %140, %154 : vector<8x32xf32>
    %cst_61 = arith.constant 9.99999974E-6 : f32
    %156 = vector.broadcast %cst_61 : f32 to vector<8x1xf32>
    %157 = arith.addf %153, %156 : vector<8x1xf32>
    %158 = math.rsqrt %157 : vector<8x1xf32>
    %159 = vector.broadcast %158 : vector<8x1xf32> to vector<8x32xf32>
    %160 = arith.mulf %155, %159 : vector<8x32xf32>
    %161 = vector.broadcast %141 : vector<1x32xf32> to vector<8x32xf32>
    %162 = arith.mulf %160, %161 : vector<8x32xf32>
    %163 = vector.broadcast %142 : vector<1x32xf32> to vector<8x32xf32>
    %164 = arith.addf %162, %163 : vector<8x32xf32>
    %165 = arith.truncf %164 : vector<8x32xf32> to vector<8x32xbf16>
    %cst_62 = arith.constant 0.000000e+00 : f32
    %166 = vector.broadcast %cst_62 : f32 to vector<8x32xf32>
    %c0_63 = arith.constant 0 : index
    %c0_64 = arith.constant 0 : index
    %167 = vector.load %arg15[%c0_63, %c0_64] : memref<32x128xbf16, #tpu.memory_space<vmem>>, vector<32x32xbf16>
    %cst_65 = arith.constant dense<0.000000e+00> : vector<8x32xf32>
    %168 = tpu.matmul %165, %167, %cst_65 {dimension_numbers = #tpu.dot_dimension_numbers<[1], [0], [0], [1], [0, 0, 1, 1], [], []>} : vector<8x32xbf16>, vector<32x32xbf16>, vector<8x32xf32> -> vector<8x32xf32>
    %c0_66 = arith.constant 0 : index
    %c0_67 = arith.constant 0 : index
    %169 = vector.load %arg16[%c0_66, %c0_67] : memref<1x128xf32, #tpu.memory_space<vmem>>, vector<1x32xf32>
    %170 = vector.broadcast %169 : vector<1x32xf32> to vector<8x32xf32>
    %171 = arith.addf %168, %170 : vector<8x32xf32>
    %172 = arith.mulf %171, %171 : vector<8x32xf32>
    %173 = arith.mulf %171, %172 : vector<8x32xf32>
    %cst_68 = arith.constant 4.471500e-02 : f32
    %174 = vector.broadcast %cst_68 : f32 to vector<8x32xf32>
    %175 = arith.mulf %174, %173 : vector<8x32xf32>
    %176 = arith.addf %171, %175 : vector<8x32xf32>
    %cst_69 = arith.constant 0.797884583 : f32
    %177 = vector.broadcast %cst_69 : f32 to vector<8x32xf32>
    %178 = arith.mulf %177, %176 : vector<8x32xf32>
    %179 = math.tanh %178 : vector<8x32xf32>
    %cst_70 = arith.constant 1.000000e+00 : f32
    %180 = vector.broadcast %cst_70 : f32 to vector<8x32xf32>
    %181 = arith.addf %180, %179 : vector<8x32xf32>
    %cst_71 = arith.constant 5.000000e-01 : f32
    %182 = vector.broadcast %cst_71 : f32 to vector<8x32xf32>
    %183 = arith.mulf %182, %181 : vector<8x32xf32>
    %184 = arith.mulf %171, %183 : vector<8x32xf32>
    %185 = arith.truncf %184 : vector<8x32xf32> to vector<8x32xbf16>
    %c0_72 = arith.constant 0 : index
    %c0_73 = arith.constant 0 : index
    %186 = vector.load %arg17[%c0_72, %c0_73] : memref<128x32xbf16, #tpu.memory_space<vmem>>, vector<32x32xbf16>
    %cst_74 = arith.constant dense<0.000000e+00> : vector<8x32xf32>
    %187 = tpu.matmul %185, %186, %cst_74 {dimension_numbers = #tpu.dot_dimension_numbers<[1], [0], [0], [1], [0, 0, 1, 1], [], []>} : vector<8x32xbf16>, vector<32x32xbf16>, vector<8x32xf32> -> vector<8x32xf32>
    %188 = arith.addf %166, %187 : vector<8x32xf32>
    %c0_75 = arith.constant 0 : index
    %c32 = arith.constant 32 : index
    %189 = vector.load %arg15[%c0_75, %c32] : memref<32x128xbf16, #tpu.memory_space<vmem>>, vector<32x32xbf16>
    %cst_76 = arith.constant dense<0.000000e+00> : vector<8x32xf32>
    %190 = tpu.matmul %165, %189, %cst_76 {dimension_numbers = #tpu.dot_dimension_numbers<[1], [0], [0], [1], [0, 0, 1, 1], [], []>} : vector<8x32xbf16>, vector<32x32xbf16>, vector<8x32xf32> -> vector<8x32xf32>
    %c0_77 = arith.constant 0 : index
    %c32_78 = arith.constant 32 : index
    %191 = vector.load %arg16[%c0_77, %c32_78] : memref<1x128xf32, #tpu.memory_space<vmem>>, vector<1x32xf32>
    %192 = vector.broadcast %191 : vector<1x32xf32> to vector<8x32xf32>
    %193 = arith.addf %190, %192 : vector<8x32xf32>
    %194 = arith.mulf %193, %193 : vector<8x32xf32>
    %195 = arith.mulf %193, %194 : vector<8x32xf32>
    %cst_79 = arith.constant 4.471500e-02 : f32
    %196 = vector.broadcast %cst_79 : f32 to vector<8x32xf32>
    %197 = arith.mulf %196, %195 : vector<8x32xf32>
    %198 = arith.addf %193, %197 : vector<8x32xf32>
    %cst_80 = arith.constant 0.797884583 : f32
    %199 = vector.broadcast %cst_80 : f32 to vector<8x32xf32>
    %200 = arith.mulf %199, %198 : vector<8x32xf32>
    %201 = math.tanh %200 : vector<8x32xf32>
    %cst_81 = arith.constant 1.000000e+00 : f32
    %202 = vector.broadcast %cst_81 : f32 to vector<8x32xf32>
    %203 = arith.addf %202, %201 : vector<8x32xf32>
    %cst_82 = arith.constant 5.000000e-01 : f32
    %204 = vector.broadcast %cst_82 : f32 to vector<8x32xf32>
    %205 = arith.mulf %204, %203 : vector<8x32xf32>
    %206 = arith.mulf %193, %205 : vector<8x32xf32>
    %207 = arith.truncf %206 : vector<8x32xf32> to vector<8x32xbf16>
    %c32_83 = arith.constant 32 : index
    %c0_84 = arith.constant 0 : index
    %208 = vector.load %arg17[%c32_83, %c0_84] : memref<128x32xbf16, #tpu.memory_space<vmem>>, vector<32x32xbf16>
    %cst_85 = arith.constant dense<0.000000e+00> : vector<8x32xf32>
    %209 = tpu.matmul %207, %208, %cst_85 {dimension_numbers = #tpu.dot_dimension_numbers<[1], [0], [0], [1], [0, 0, 1, 1], [], []>} : vector<8x32xbf16>, vector<32x32xbf16>, vector<8x32xf32> -> vector<8x32xf32>
    %210 = arith.addf %188, %209 : vector<8x32xf32>
    %c0_86 = arith.constant 0 : index
    %c64 = arith.constant 64 : index
    %211 = vector.load %arg15[%c0_86, %c64] : memref<32x128xbf16, #tpu.memory_space<vmem>>, vector<32x32xbf16>
    %cst_87 = arith.constant dense<0.000000e+00> : vector<8x32xf32>
    %212 = tpu.matmul %165, %211, %cst_87 {dimension_numbers = #tpu.dot_dimension_numbers<[1], [0], [0], [1], [0, 0, 1, 1], [], []>} : vector<8x32xbf16>, vector<32x32xbf16>, vector<8x32xf32> -> vector<8x32xf32>
    %c0_88 = arith.constant 0 : index
    %c64_89 = arith.constant 64 : index
    %213 = vector.load %arg16[%c0_88, %c64_89] : memref<1x128xf32, #tpu.memory_space<vmem>>, vector<1x32xf32>
    %214 = vector.broadcast %213 : vector<1x32xf32> to vector<8x32xf32>
    %215 = arith.addf %212, %214 : vector<8x32xf32>
    %216 = arith.mulf %215, %215 : vector<8x32xf32>
    %217 = arith.mulf %215, %216 : vector<8x32xf32>
    %cst_90 = arith.constant 4.471500e-02 : f32
    %218 = vector.broadcast %cst_90 : f32 to vector<8x32xf32>
    %219 = arith.mulf %218, %217 : vector<8x32xf32>
    %220 = arith.addf %215, %219 : vector<8x32xf32>
    %cst_91 = arith.constant 0.797884583 : f32
    %221 = vector.broadcast %cst_91 : f32 to vector<8x32xf32>
    %222 = arith.mulf %221, %220 : vector<8x32xf32>
    %223 = math.tanh %222 : vector<8x32xf32>
    %cst_92 = arith.constant 1.000000e+00 : f32
    %224 = vector.broadcast %cst_92 : f32 to vector<8x32xf32>
    %225 = arith.addf %224, %223 : vector<8x32xf32>
    %cst_93 = arith.constant 5.000000e-01 : f32
    %226 = vector.broadcast %cst_93 : f32 to vector<8x32xf32>
    %227 = arith.mulf %226, %225 : vector<8x32xf32>
    %228 = arith.mulf %215, %227 : vector<8x32xf32>
    %229 = arith.truncf %228 : vector<8x32xf32> to vector<8x32xbf16>
    %c64_94 = arith.constant 64 : index
    %c0_95 = arith.constant 0 : index
    %230 = vector.load %arg17[%c64_94, %c0_95] : memref<128x32xbf16, #tpu.memory_space<vmem>>, vector<32x32xbf16>
    %cst_96 = arith.constant dense<0.000000e+00> : vector<8x32xf32>
    %231 = tpu.matmul %229, %230, %cst_96 {dimension_numbers = #tpu.dot_dimension_numbers<[1], [0], [0], [1], [0, 0, 1, 1], [], []>} : vector<8x32xbf16>, vector<32x32xbf16>, vector<8x32xf32> -> vector<8x32xf32>
    %232 = arith.addf %210, %231 : vector<8x32xf32>
    %c0_97 = arith.constant 0 : index
    %c96 = arith.constant 96 : index
    %233 = vector.load %arg15[%c0_97, %c96] : memref<32x128xbf16, #tpu.memory_space<vmem>>, vector<32x32xbf16>
    %cst_98 = arith.constant dense<0.000000e+00> : vector<8x32xf32>
    %234 = tpu.matmul %165, %233, %cst_98 {dimension_numbers = #tpu.dot_dimension_numbers<[1], [0], [0], [1], [0, 0, 1, 1], [], []>} : vector<8x32xbf16>, vector<32x32xbf16>, vector<8x32xf32> -> vector<8x32xf32>
    %c0_99 = arith.constant 0 : index
    %c96_100 = arith.constant 96 : index
    %235 = vector.load %arg16[%c0_99, %c96_100] : memref<1x128xf32, #tpu.memory_space<vmem>>, vector<1x32xf32>
    %236 = vector.broadcast %235 : vector<1x32xf32> to vector<8x32xf32>
    %237 = arith.addf %234, %236 : vector<8x32xf32>
    %238 = arith.mulf %237, %237 : vector<8x32xf32>
    %239 = arith.mulf %237, %238 : vector<8x32xf32>
    %cst_101 = arith.constant 4.471500e-02 : f32
    %240 = vector.broadcast %cst_101 : f32 to vector<8x32xf32>
    %241 = arith.mulf %240, %239 : vector<8x32xf32>
    %242 = arith.addf %237, %241 : vector<8x32xf32>
    %cst_102 = arith.constant 0.797884583 : f32
    %243 = vector.broadcast %cst_102 : f32 to vector<8x32xf32>
    %244 = arith.mulf %243, %242 : vector<8x32xf32>
    %245 = math.tanh %244 : vector<8x32xf32>
    %cst_103 = arith.constant 1.000000e+00 : f32
    %246 = vector.broadcast %cst_103 : f32 to vector<8x32xf32>
    %247 = arith.addf %246, %245 : vector<8x32xf32>
    %cst_104 = arith.constant 5.000000e-01 : f32
    %248 = vector.broadcast %cst_104 : f32 to vector<8x32xf32>
    %249 = arith.mulf %248, %247 : vector<8x32xf32>
    %250 = arith.mulf %237, %249 : vector<8x32xf32>
    %251 = arith.truncf %250 : vector<8x32xf32> to vector<8x32xbf16>
    %c96_105 = arith.constant 96 : index
    %c0_106 = arith.constant 0 : index
    %252 = vector.load %arg17[%c96_105, %c0_106] : memref<128x32xbf16, #tpu.memory_space<vmem>>, vector<32x32xbf16>
    %cst_107 = arith.constant dense<0.000000e+00> : vector<8x32xf32>
    %253 = tpu.matmul %251, %252, %cst_107 {dimension_numbers = #tpu.dot_dimension_numbers<[1], [0], [0], [1], [0, 0, 1, 1], [], []>} : vector<8x32xbf16>, vector<32x32xbf16>, vector<8x32xf32> -> vector<8x32xf32>
    %254 = arith.addf %232, %253 : vector<8x32xf32>
    %255 = arith.addf %140, %254 : vector<8x32xf32>
    %c0_108 = arith.constant 0 : index
    %c0_109 = arith.constant 0 : index
    %256 = vector.load %arg18[%c0_108, %c0_109] : memref<1x32xf32, #tpu.memory_space<vmem>>, vector<1x32xf32>
    %257 = vector.broadcast %256 : vector<1x32xf32> to vector<8x32xf32>
    %258 = arith.addf %255, %257 : vector<8x32xf32>
    %c0_110 = arith.constant 0 : index
    %c0_111 = arith.constant 0 : index
    %c0_112 = arith.constant 0 : index
    %259 = vector.load %arg19[%c0_110, %c0_111, %c0_112] : memref<1x8x32xf32, #tpu.memory_space<vmem>>, vector<1x8x32xf32>
    %260 = vector.shape_cast %259 : vector<1x8x32xf32> to vector<8x32xf32>
    %261 = vector.shape_cast %258 : vector<8x32xf32> to vector<1x8x32xf32>
    tpu.vector_store %arg19[%c0_110, %c0_111, %c0_112], %261 {strides = array<i32>} : memref<1x8x32xf32, #tpu.memory_space<vmem>>, vector<1x8x32xf32>,
    return
  }
  func.func @transform_0(%arg0: i32) -> (i32, i32, i32) {
    %c0_i32 = arith.constant 0 : i32
    %c0_i32_0 = arith.constant 0 : i32
    %c0_i32_1 = arith.constant 0 : i32
    return %arg0, %c0_i32, %c0_i32_0 : i32, i32, i32
  }
  func.func @transform_1(%arg0: i32) -> (i32, i32, i32) {
    %c0_i32 = arith.constant 0 : i32
    %c0_i32_0 = arith.constant 0 : i32
    %c0_i32_1 = arith.constant 0 : i32
    return %arg0, %c0_i32, %c0_i32_0 : i32, i32, i32
  }
  func.func @transform_2(%arg0: i32) -> (i32, i32) {
    %c0_i32 = arith.constant 0 : i32
    %c0_i32_0 = arith.constant 0 : i32
    %c0_i32_1 = arith.constant 0 : i32
    return %c0_i32, %c0_i32_0 : i32, i32
  }
  func.func @transform_3(%arg0: i32) -> (i32, i32) {
    %c0_i32 = arith.constant 0 : i32
    %c0_i32_0 = arith.constant 0 : i32
    %c0_i32_1 = arith.constant 0 : i32
    return %c0_i32, %c0_i32_0 : i32, i32
  }
  func.func @transform_4(%arg0: i32) -> (i32, i32) {
    %c0_i32 = arith.constant 0 : i32
    %c0_i32_0 = arith.constant 0 : i32
    %c0_i32_1 = arith.constant 0 : i32
    return %c0_i32, %c0_i32_0 : i32, i32
  }
  func.func @transform_5(%arg0: i32) -> (i32, i32) {
    %c0_i32 = arith.constant 0 : i32
    %c0_i32_0 = arith.constant 0 : i32
    %c0_i32_1 = arith.constant 0 : i32
    return %c0_i32, %c0_i32_0 : i32, i32
  }
  func.func @transform_6(%arg0: i32) -> (i32, i32) {
    %c0_i32 = arith.constant 0 : i32
    %c0_i32_0 = arith.constant 0 : i32
    %c0_i32_1 = arith.constant 0 : i32
    return %c0_i32, %c0_i32_0 : i32, i32
  }
  func.func @transform_7(%arg0: i32) -> (i32, i32) {
    %c0_i32 = arith.constant 0 : i32
    %c0_i32_0 = arith.constant 0 : i32
    %c0_i32_1 = arith.constant 0 : i32
    return %c0_i32, %c0_i32_0 : i32, i32
  }
  func.func @transform_8(%arg0: i32) -> (i32, i32) {
    %c0_i32 = arith.constant 0 : i32
    %c0_i32_0 = arith.constant 0 : i32
    %c0_i32_1 = arith.constant 0 : i32
    return %c0_i32, %c0_i32_0 : i32, i32
  }
  func.func @transform_9(%arg0: i32) -> (i32, i32) {
    %c0_i32 = arith.constant 0 : i32
    %c0_i32_0 = arith.constant 0 : i32
    %c0_i32_1 = arith.constant 0 : i32
    return %c0_i32, %c0_i32_0 : i32, i32
  }
  func.func @transform_10(%arg0: i32) -> (i32, i32) {
    %c0_i32 = arith.constant 0 : i32
    %c0_i32_0 = arith.constant 0 : i32
    %c0_i32_1 = arith.constant 0 : i32
    return %c0_i32, %c0_i32_0 : i32, i32
  }
  func.func @transform_11(%arg0: i32) -> (i32, i32) {
    %c0_i32 = arith.constant 0 : i32
    %c0_i32_0 = arith.constant 0 : i32
    %c0_i32_1 = arith.constant 0 : i32
    return %c0_i32, %c0_i32_0 : i32, i32
  }
  func.func @transform_12(%arg0: i32) -> (i32, i32) {
    %c0_i32 = arith.constant 0 : i32
    %c0_i32_0 = arith.constant 0 : i32
    %c0_i32_1 = arith.constant 0 : i32
    return %c0_i32, %c0_i32_0 : i32, i32
  }
  func.func @transform_13(%arg0: i32) -> (i32, i32) {
    %c0_i32 = arith.constant 0 : i32
    %c0_i32_0 = arith.constant 0 : i32
    %c0_i32_1 = arith.constant 0 : i32
    return %c0_i32, %c0_i32_0 : i32, i32
  }
  func.func @transform_14(%arg0: i32) -> (i32, i32) {
    %c0_i32 = arith.constant 0 : i32
    %c0_i32_0 = arith.constant 0 : i32
    %c0_i32_1 = arith.constant 0 : i32
    return %c0_i32, %c0_i32_0 : i32, i32
  }
  func.func @transform_15(%arg0: i32) -> (i32, i32) {
    %c0_i32 = arith.constant 0 : i32
    %c0_i32_0 = arith.constant 0 : i32
    %c0_i32_1 = arith.constant 0 : i32
    return %c0_i32, %c0_i32_0 : i32, i32
  }
  func.func @transform_16(%arg0: i32) -> (i32, i32) {
    %c0_i32 = arith.constant 0 : i32
    %c0_i32_0 = arith.constant 0 : i32
    %c0_i32_1 = arith.constant 0 : i32
    return %c0_i32, %c0_i32_0 : i32, i32
  }
  func.func @transform_17(%arg0: i32) -> (i32, i32) {
    %c0_i32 = arith.constant 0 : i32
    %c0_i32_0 = arith.constant 0 : i32
    %c0_i32_1 = arith.constant 0 : i32
    return %c0_i32, %c0_i32_0 : i32, i32
  }
  func.func @transform_18(%arg0: i32) -> (i32, i32, i32) {
    %c0_i32 = arith.constant 0 : i32
    %c0_i32_0 = arith.constant 0 : i32
    %c0_i32_1 = arith.constant 0 : i32
    return %arg0, %c0_i32, %c0_i32_0 : i32, i32, i32
  }
}

module attributes {stable_mosaic.version = 11 : i64} {
  func.func @transformer_layer_kernel(%arg0: i32, %arg1: memref<1x8x32xf32, #tpu.memory_space<vmem>>, %arg2: memref<1x1x8xf32, #tpu.memory_space<vmem>>, %arg3: memref<1x32xf32, #tpu.memory_space<vmem>>, %arg4: memref<1x32xf32, #tpu.memory_space<vmem>>, %arg5: memref<32x32xbf16, #tpu.memory_space<vmem>>, %arg6: memref<1x32xf32, #tpu.memory_space<vmem>>, %arg7: memref<32x32xbf16, #tpu.memory_space<vmem>>, %arg8: memref<1x32xf32, #tpu.memory_space<vmem>>, %arg9: memref<32x32xbf16, #tpu.memory_space<vmem>>, %arg10: memref<1x32xf32, #tpu.memory_space<vmem>>, %arg11: memref<32x32xbf16, #tpu.memory_space<vmem>>, %arg12: memref<1x32xf32, #tpu.memory_space<vmem>>, %arg13: memref<1x32xf32, #tpu.memory_space<vmem>>, %arg14: memref<1x32xf32, #tpu.memory_space<vmem>>, %arg15: memref<32x128xbf16, #tpu.memory_space<vmem>>, %arg16: memref<1x128xf32, #tpu.memory_space<vmem>>, %arg17: memref<128x32xbf16, #tpu.memory_space<vmem>>, %arg18: memref<1x32xf32, #tpu.memory_space<vmem>>, %arg19: memref<1x8x32xf32, #tpu.memory_space<vmem>>) attributes {dimension_semantics = [#tpu.dimension_semantics<parallel>], iteration_bounds = array<i64: 2>, scalar_prefetch = 0 : i64, scratch_operands = 0 : i64, tpu.core_type = #tpu.core_type<tc>, window_params = [{transform_indices = @transform_0, window_bounds = array<i64: 1, 8, 32>}, {transform_indices = @transform_1, window_bounds = array<i64: 1, 1, 8>}, {pipeline_mode = #tpu.pipeline_mode<synchronous>, transform_indices = @transform_2, window_bounds = array<i64: 1, 32>}, {pipeline_mode = #tpu.pipeline_mode<synchronous>, transform_indices = @transform_3, window_bounds = array<i64: 1, 32>}, {pipeline_mode = #tpu.pipeline_mode<synchronous>, transform_indices = @transform_4, window_bounds = array<i64: 32, 32>}, {pipeline_mode = #tpu.pipeline_mode<synchronous>, transform_indices = @transform_5, window_bounds = array<i64: 1, 32>}, {pipeline_mode = #tpu.pipeline_mode<synchronous>, transform_indices = @transform_6, window_bounds = array<i64: 32, 32>}, {pipeline_mode = #tpu.pipeline_mode<synchronous>, transform_indices = @transform_7, window_bounds = array<i64: 1, 32>}, {pipeline_mode = #tpu.pipeline_mode<synchronous>, transform_indices = @transform_8, window_bounds = array<i64: 32, 32>}, {pipeline_mode = #tpu.pipeline_mode<synchronous>, transform_indices = @transform_9, window_bounds = array<i64: 1, 32>}, {pipeline_mode = #tpu.pipeline_mode<synchronous>, transform_indices = @transform_10, window_bounds = array<i64: 32, 32>}, {pipeline_mode = #tpu.pipeline_mode<synchronous>, transform_indices = @transform_11, window_bounds = array<i64: 1, 32>}, {pipeline_mode = #tpu.pipeline_mode<synchronous>, transform_indices = @transform_12, window_bounds = array<i64: 1, 32>}, {pipeline_mode = #tpu.pipeline_mode<synchronous>, transform_indices = @transform_13, window_bounds = array<i64: 1, 32>}, {pipeline_mode = #tpu.pipeline_mode<synchronous>, transform_indices = @transform_14, window_bounds = array<i64: 32, 128>}, {pipeline_mode = #tpu.pipeline_mode<synchronous>, transform_indices = @transform_15, window_bounds = array<i64: 1, 128>}, {pipeline_mode = #tpu.pipeline_mode<synchronous>, transform_indices = @transform_16, window_bounds = array<i64: 128, 32>}, {pipeline_mode = #tpu.pipeline_mode<synchronous>, transform_indices = @transform_17, window_bounds = array<i64: 1, 32>}, {transform_indices = @transform_18, window_bounds = array<i64: 1, 8, 32>}]} {
    %c0 = arith.constant 0 : index
    %c0_0 = arith.constant 0 : index
    %c0_1 = arith.constant 0 : index
    %0 = vector.load %arg1[%c0, %c0_0, %c0_1] : memref<1x8x32xf32, #tpu.memory_space<vmem>>, vector<1x8x32xf32>
    %1 = vector.shape_cast %0 : vector<1x8x32xf32> to vector<8x32xf32>
    %c0_2 = arith.constant 0 : index
    %c0_3 = arith.constant 0 : index
    %c0_4 = arith.constant 0 : index
    %2 = vector.load %arg2[%c0_2, %c0_3, %c0_4] : memref<1x1x8xf32, #tpu.memory_space<vmem>>, vector<1x1x8xf32>
    %3 = vector.shape_cast %2 : vector<1x1x8xf32> to vector<1x8xf32>
    %cst = arith.constant 0.000000e+00 : f32
    %4 = vector.broadcast %cst : f32 to vector<1x8xf32>
    %5 = arith.cmpf ogt, %3, %4 : vector<1x8xf32>
    %cst_5 = arith.constant 0.000000e+00 : f32
    %cst_6 = arith.constant -1.000000e+09 : f32
    %6 = vector.broadcast %cst_5 : f32 to vector<1x8xf32>
    %7 = vector.broadcast %cst_6 : f32 to vector<1x8xf32>
    %8 = arith.select %5, %6, %7 : vector<1x8xi1>, vector<1x8xf32>
    %9 = vector.shape_cast %8 : vector<1x8xf32> to vector<1x8xf32>
    %10 = vector.broadcast %9 : vector<1x8xf32> to vector<8x8xf32>
    %c0_7 = arith.constant 0 : index
    %c0_8 = arith.constant 0 : index
    %11 = vector.load %arg3[%c0_7, %c0_8] : memref<1x32xf32, #tpu.memory_space<vmem>>, vector<1x32xf32>
    %c0_9 = arith.constant 0 : index
    %c0_10 = arith.constant 0 : index
    %12 = vector.load %arg4[%c0_9, %c0_10] : memref<1x32xf32, #tpu.memory_space<vmem>>, vector<1x32xf32>
    %cst_11 = arith.constant dense<0.000000e+00> : vector<8xf32>
    %13 = vector.multi_reduction <add>, %1, %cst_11 [1] : vector<8x32xf32> to vector<8xf32>
    %14 = vector.shape_cast %13 : vector<8xf32> to vector<8x1xf32>
    %cst_12 = arith.constant 3.200000e+01 : f32
    %15 = vector.broadcast %cst_12 : f32 to vector<8x1xf32>
    %16 = arith.divf %14, %15 : vector<8x1xf32>
    %17 = vector.broadcast %16 : vector<8x1xf32> to vector<8x32xf32>
    %18 = arith.subf %1, %17 : vector<8x32xf32>
    %19 = arith.mulf %18, %18 : vector<8x32xf32>
    %cst_13 = arith.constant dense<0.000000e+00> : vector<8xf32>
    %20 = vector.multi_reduction <add>, %19, %cst_13 [1] : vector<8x32xf32> to vector<8xf32>
    %21 = vector.shape_cast %20 : vector<8xf32> to vector<8x1xf32>
    %cst_14 = arith.constant 3.200000e+01 : f32
    %22 = vector.broadcast %cst_14 : f32 to vector<8x1xf32>
    %23 = arith.divf %21, %22 : vector<8x1xf32>
    %24 = vector.broadcast %16 : vector<8x1xf32> to vector<8x32xf32>
    %25 = arith.subf %1, %24 : vector<8x32xf32>
    %cst_15 = arith.constant 9.99999974E-6 : f32
    %26 = vector.broadcast %cst_15 : f32 to vector<8x1xf32>
    %27 = arith.addf %23, %26 : vector<8x1xf32>
    %28 = math.rsqrt %27 : vector<8x1xf32>
    %29 = vector.broadcast %28 : vector<8x1xf32> to vector<8x32xf32>
    %30 = arith.mulf %25, %29 : vector<8x32xf32>
    %31 = vector.broadcast %11 : vector<1x32xf32> to vector<8x32xf32>
    %32 = arith.mulf %30, %31 : vector<8x32xf32>
    %33 = vector.broadcast %12 : vector<1x32xf32> to vector<8x32xf32>
    %34 = arith.addf %32, %33 : vector<8x32xf32>
    %35 = arith.truncf %34 : vector<8x32xf32> to vector<8x32xbf16>
    %c0_16 = arith.constant 0 : index
    %c0_17 = arith.constant 0 : index
    %36 = vector.load %arg5[%c0_16, %c0_17] : memref<32x32xbf16, #tpu.memory_space<vmem>>, vector<32x32xbf16>
    %cst_18 = arith.constant dense<0.000000e+00> : vector<8x32xf32>
    %37 = tpu.matmul %35, %36, %cst_18 {dimension_numbers = #tpu.dot_dimension_numbers<[1], [0], [0], [1], [0, 0, 1, 1], [], []>} : vector<8x32xbf16>, vector<32x32xbf16>, vector<8x32xf32> -> vector<8x32xf32>
    %c0_19 = arith.constant 0 : index
    %c0_20 = arith.constant 0 : index
    %38 = vector.load %arg6[%c0_19, %c0_20] : memref<1x32xf32, #tpu.memory_space<vmem>>, vector<1x32xf32>
    %39 = vector.broadcast %38 : vector<1x32xf32> to vector<8x32xf32>
    %40 = arith.addf %37, %39 : vector<8x32xf32>
    %c0_21 = arith.constant 0 : index
    %c0_22 = arith.constant 0 : index
    %41 = vector.load %arg7[%c0_21, %c0_22] : memref<32x32xbf16, #tpu.memory_space<vmem>>, vector<32x32xbf16>
    %cst_23 = arith.constant dense<0.000000e+00> : vector<8x32xf32>
    %42 = tpu.matmul %35, %41, %cst_23 {dimension_numbers = #tpu.dot_dimension_numbers<[1], [0], [0], [1], [0, 0, 1, 1], [], []>} : vector<8x32xbf16>, vector<32x32xbf16>, vector<8x32xf32> -> vector<8x32xf32>
    %c0_24 = arith.constant 0 : index
    %c0_25 = arith.constant 0 : index
    %43 = vector.load %arg8[%c0_24, %c0_25] : memref<1x32xf32, #tpu.memory_space<vmem>>, vector<1x32xf32>
    %44 = vector.broadcast %43 : vector<1x32xf32> to vector<8x32xf32>
    %45 = arith.addf %42, %44 : vector<8x32xf32>
    %c0_26 = arith.constant 0 : index
    %c0_27 = arith.constant 0 : index
    %46 = vector.load %arg9[%c0_26, %c0_27] : memref<32x32xbf16, #tpu.memory_space<vmem>>, vector<32x32xbf16>
    %cst_28 = arith.constant dense<0.000000e+00> : vector<8x32xf32>
    %47 = tpu.matmul %35, %46, %cst_28 {dimension_numbers = #tpu.dot_dimension_numbers<[1], [0], [0], [1], [0, 0, 1, 1], [], []>} : vector<8x32xbf16>, vector<32x32xbf16>, vector<8x32xf32> -> vector<8x32xf32>
    %c0_29 = arith.constant 0 : index
    %c0_30 = arith.constant 0 : index
    %48 = vector.load %arg10[%c0_29, %c0_30] : memref<1x32xf32, #tpu.memory_space<vmem>>, vector<1x32xf32>
    %49 = vector.broadcast %48 : vector<1x32xf32> to vector<8x32xf32>
    %50 = arith.addf %47, %49 : vector<8x32xf32>
    %cst_31 = arith.constant 0.353553385 : f32
    %51 = vector.broadcast %cst_31 : f32 to vector<8x32xf32>
    %52 = arith.mulf %40, %51 : vector<8x32xf32>
    %53 = vector.extract_strided_slice %52 {offsets = [0, 0], sizes = [8, 8], strides = [1, 1]} : vector<8x32xf32> to vector<8x8xf32>
    %54 = arith.truncf %53 : vector<8x8xf32> to vector<8x8xbf16>
    %55 = vector.extract_strided_slice %45 {offsets = [0, 0], sizes = [8, 8], strides = [1, 1]} : vector<8x32xf32> to vector<8x8xf32>
    %56 = arith.truncf %55 : vector<8x8xf32> to vector<8x8xbf16>
    %57 = vector.extract_strided_slice %50 {offsets = [0, 0], sizes = [8, 8], strides = [1, 1]} : vector<8x32xf32> to vector<8x8xf32>
    %58 = arith.truncf %57 : vector<8x8xf32> to vector<8x8xbf16>
    %cst_32 = arith.constant dense<0.000000e+00> : vector<8x8xf32>
    %59 = tpu.matmul %54, %56, %cst_32 {dimension_numbers = #tpu.dot_dimension_numbers<[1], [1], [0], [0], [0, 0, 1, 0], [], []>} : vector<8x8xbf16>, vector<8x8xbf16>, vector<8x8xf32> -> vector<8x8xf32>
    %60 = arith.addf %59, %10 : vector<8x8xf32>
    %cst_33 = arith.constant dense<0xFF800000> : vector<8xf32>
    %61 = vector.multi_reduction <maximumf>, %60, %cst_33 [1] : vector<8x8xf32> to vector<8xf32>
    %62 = vector.shape_cast %61 : vector<8xf32> to vector<8x1xf32>
    %63 = vector.broadcast %62 : vector<8x1xf32> to vector<8x8xf32>
    %64 = arith.subf %60, %63 : vector<8x8xf32>
    %65 = math.exp %64 : vector<8x8xf32>
    %cst_34 = arith.constant dense<0.000000e+00> : vector<8xf32>
    %66 = vector.multi_reduction <add>, %65, %cst_34 [1] : vector<8x8xf32> to vector<8xf32>
    %67 = vector.shape_cast %66 : vector<8xf32> to vector<8x1xf32>
    %68 = tpu.reciprocal %67 {approx = true} : vector<8x1xf32> -> vector<8x1xf32>
    %69 = arith.truncf %65 : vector<8x8xf32> to vector<8x8xbf16>
    %cst_35 = arith.constant dense<0.000000e+00> : vector<8x8xf32>
    %70 = tpu.matmul %69, %58, %cst_35 {dimension_numbers = #tpu.dot_dimension_numbers<[1], [0], [0], [1], [0, 0, 1, 1], [], []>} : vector<8x8xbf16>, vector<8x8xbf16>, vector<8x8xf32> -> vector<8x8xf32>
    %71 = vector.broadcast %68 : vector<8x1xf32> to vector<8x8xf32>
    %72 = arith.mulf %70, %71 : vector<8x8xf32>
    %73 = vector.extract_strided_slice %52 {offsets = [0, 8], sizes = [8, 8], strides = [1, 1]} : vector<8x32xf32> to vector<8x8xf32>
    %74 = arith.truncf %73 : vector<8x8xf32> to vector<8x8xbf16>
    %75 = vector.extract_strided_slice %45 {offsets = [0, 8], sizes = [8, 8], strides = [1, 1]} : vector<8x32xf32> to vector<8x8xf32>
    %76 = arith.truncf %75 : vector<8x8xf32> to vector<8x8xbf16>
    %77 = vector.extract_strided_slice %50 {offsets = [0, 8], sizes = [8, 8], strides = [1, 1]} : vector<8x32xf32> to vector<8x8xf32>
    %78 = arith.truncf %77 : vector<8x8xf32> to vector<8x8xbf16>
    %cst_36 = arith.constant dense<0.000000e+00> : vector<8x8xf32>
    %79 = tpu.matmul %74, %76, %cst_36 {dimension_numbers = #tpu.dot_dimension_numbers<[1], [1], [0], [0], [0, 0, 1, 0], [], []>} : vector<8x8xbf16>, vector<8x8xbf16>, vector<8x8xf32> -> vector<8x8xf32>
    %80 = arith.addf %79, %10 : vector<8x8xf32>
    %cst_37 = arith.constant dense<0xFF800000> : vector<8xf32>
    %81 = vector.multi_reduction <maximumf>, %80, %cst_37 [1] : vector<8x8xf32> to vector<8xf32>
    %82 = vector.shape_cast %81 : vector<8xf32> to vector<8x1xf32>
    %83 = vector.broadcast %82 : vector<8x1xf32> to vector<8x8xf32>
    %84 = arith.subf %80, %83 : vector<8x8xf32>
    %85 = math.exp %84 : vector<8x8xf32>
    %cst_38 = arith.constant dense<0.000000e+00> : vector<8xf32>
    %86 = vector.multi_reduction <add>, %85, %cst_38 [1] : vector<8x8xf32> to vector<8xf32>
    %87 = vector.shape_cast %86 : vector<8xf32> to vector<8x1xf32>
    %88 = tpu.reciprocal %87 {approx = true} : vector<8x1xf32> -> vector<8x1xf32>
    %89 = arith.truncf %85 : vector<8x8xf32> to vector<8x8xbf16>
    %cst_39 = arith.constant dense<0.000000e+00> : vector<8x8xf32>
    %90 = tpu.matmul %89, %78, %cst_39 {dimension_numbers = #tpu.dot_dimension_numbers<[1], [0], [0], [1], [0, 0, 1, 1], [], []>} : vector<8x8xbf16>, vector<8x8xbf16>, vector<8x8xf32> -> vector<8x8xf32>
    %91 = vector.broadcast %88 : vector<8x1xf32> to vector<8x8xf32>
    %92 = arith.mulf %90, %91 : vector<8x8xf32>
    %93 = vector.extract_strided_slice %52 {offsets = [0, 16], sizes = [8, 8], strides = [1, 1]} : vector<8x32xf32> to vector<8x8xf32>
    %94 = arith.truncf %93 : vector<8x8xf32> to vector<8x8xbf16>
    %95 = vector.extract_strided_slice %45 {offsets = [0, 16], sizes = [8, 8], strides = [1, 1]} : vector<8x32xf32> to vector<8x8xf32>
    %96 = arith.truncf %95 : vector<8x8xf32> to vector<8x8xbf16>
    %97 = vector.extract_strided_slice %50 {offsets = [0, 16], sizes = [8, 8], strides = [1, 1]} : vector<8x32xf32> to vector<8x8xf32>
    %98 = arith.truncf %97 : vector<8x8xf32> to vector<8x8xbf16>
    %cst_40 = arith.constant dense<0.000000e+00> : vector<8x8xf32>
    %99 = tpu.matmul %94, %96, %cst_40 {dimension_numbers = #tpu.dot_dimension_numbers<[1], [1], [0], [0], [0, 0, 1, 0], [], []>} : vector<8x8xbf16>, vector<8x8xbf16>, vector<8x8xf32> -> vector<8x8xf32>
    %100 = arith.addf %99, %10 : vector<8x8xf32>
    %cst_41 = arith.constant dense<0xFF800000> : vector<8xf32>
    %101 = vector.multi_reduction <maximumf>, %100, %cst_41 [1] : vector<8x8xf32> to vector<8xf32>
    %102 = vector.shape_cast %101 : vector<8xf32> to vector<8x1xf32>
    %103 = vector.broadcast %102 : vector<8x1xf32> to vector<8x8xf32>
    %104 = arith.subf %100, %103 : vector<8x8xf32>
    %105 = math.exp %104 : vector<8x8xf32>
    %cst_42 = arith.constant dense<0.000000e+00> : vector<8xf32>
    %106 = vector.multi_reduction <add>, %105, %cst_42 [1] : vector<8x8xf32> to vector<8xf32>
    %107 = vector.shape_cast %106 : vector<8xf32> to vector<8x1xf32>
    %108 = tpu.reciprocal %107 {approx = true} : vector<8x1xf32> -> vector<8x1xf32>
    %109 = arith.truncf %105 : vector<8x8xf32> to vector<8x8xbf16>
    %cst_43 = arith.constant dense<0.000000e+00> : vector<8x8xf32>
    %110 = tpu.matmul %109, %98, %cst_43 {dimension_numbers = #tpu.dot_dimension_numbers<[1], [0], [0], [1], [0, 0, 1, 1], [], []>} : vector<8x8xbf16>, vector<8x8xbf16>, vector<8x8xf32> -> vector<8x8xf32>
    %111 = vector.broadcast %108 : vector<8x1xf32> to vector<8x8xf32>
    %112 = arith.mulf %110, %111 : vector<8x8xf32>
    %113 = vector.extract_strided_slice %52 {offsets = [0, 24], sizes = [8, 8], strides = [1, 1]} : vector<8x32xf32> to vector<8x8xf32>
    %114 = arith.truncf %113 : vector<8x8xf32> to vector<8x8xbf16>
    %115 = vector.extract_strided_slice %45 {offsets = [0, 24], sizes = [8, 8], strides = [1, 1]} : vector<8x32xf32> to vector<8x8xf32>
    %116 = arith.truncf %115 : vector<8x8xf32> to vector<8x8xbf16>
    %117 = vector.extract_strided_slice %50 {offsets = [0, 24], sizes = [8, 8], strides = [1, 1]} : vector<8x32xf32> to vector<8x8xf32>
    %118 = arith.truncf %117 : vector<8x8xf32> to vector<8x8xbf16>
    %cst_44 = arith.constant dense<0.000000e+00> : vector<8x8xf32>
    %119 = tpu.matmul %114, %116, %cst_44 {dimension_numbers = #tpu.dot_dimension_numbers<[1], [1], [0], [0], [0, 0, 1, 0], [], []>} : vector<8x8xbf16>, vector<8x8xbf16>, vector<8x8xf32> -> vector<8x8xf32>
    %120 = arith.addf %119, %10 : vector<8x8xf32>
    %cst_45 = arith.constant dense<0xFF800000> : vector<8xf32>
    %121 = vector.multi_reduction <maximumf>, %120, %cst_45 [1] : vector<8x8xf32> to vector<8xf32>
    %122 = vector.shape_cast %121 : vector<8xf32> to vector<8x1xf32>
    %123 = vector.broadcast %122 : vector<8x1xf32> to vector<8x8xf32>
    %124 = arith.subf %120, %123 : vector<8x8xf32>
    %125 = math.exp %124 : vector<8x8xf32>
    %cst_46 = arith.constant dense<0.000000e+00> : vector<8xf32>
    %126 = vector.multi_reduction <add>, %125, %cst_46 [1] : vector<8x8xf32> to vector<8xf32>
    %127 = vector.shape_cast %126 : vector<8xf32> to vector<8x1xf32>
    %128 = tpu.reciprocal %127 {approx = true} : vector<8x1xf32> -> vector<8x1xf32>
    %129 = arith.truncf %125 : vector<8x8xf32> to vector<8x8xbf16>
    %cst_47 = arith.constant dense<0.000000e+00> : vector<8x8xf32>
    %130 = tpu.matmul %129, %118, %cst_47 {dimension_numbers = #tpu.dot_dimension_numbers<[1], [0], [0], [1], [0, 0, 1, 1], [], []>} : vector<8x8xbf16>, vector<8x8xbf16>, vector<8x8xf32> -> vector<8x8xf32>
    %131 = vector.broadcast %128 : vector<8x1xf32> to vector<8x8xf32>
    %132 = arith.mulf %130, %131 : vector<8x8xf32>
    %133 = tpu.concatenate %72, %92, %112, %132 in 1 : vector<8x8xf32>, vector<8x8xf32>, vector<8x8xf32>, vector<8x8xf32> -> vector<8x32xf32>
    %134 = arith.truncf %133 : vector<8x32xf32> to vector<8x32xbf16>
    %c0_48 = arith.constant 0 : index
    %c0_49 = arith.constant 0 : index
    %135 = vector.load %arg11[%c0_48, %c0_49] : memref<32x32xbf16, #tpu.memory_space<vmem>>, vector<32x32xbf16>
    %cst_50 = arith.constant dense<0.000000e+00> : vector<8x32xf32>
    %136 = tpu.matmul %134, %135, %cst_50 {dimension_numbers = #tpu.dot_dimension_numbers<[1], [0], [0], [1], [0, 0, 1, 1], [], []>} : vector<8x32xbf16>, vector<32x32xbf16>, vector<8x32xf32> -> vector<8x32xf32>
    %137 = arith.addf %1, %136 : vector<8x32xf32>
    %c0_51 = arith.constant 0 : index
    %c0_52 = arith.constant 0 : index
    %138 = vector.load %arg12[%c0_51, %c0_52] : memref<1x32xf32, #tpu.memory_space<vmem>>, vector<1x32xf32>
    %139 = vector.broadcast %138 : vector<1x32xf32> to vector<8x32xf32>
    %140 = arith.addf %137, %139 : vector<8x32xf32>
    %c0_53 = arith.constant 0 : index
    %c0_54 = arith.constant 0 : index
    %141 = vector.load %arg13[%c0_53, %c0_54] : memref<1x32xf32, #tpu.memory_space<vmem>>, vector<1x32xf32>
    %c0_55 = arith.constant 0 : index
    %c0_56 = arith.constant 0 : index
    %142 = vector.load %arg14[%c0_55, %c0_56] : memref<1x32xf32, #tpu.memory_space<vmem>>, vector<1x32xf32>
    %cst_57 = arith.constant dense<0.000000e+00> : vector<8xf32>
    %143 = vector.multi_reduction <add>, %140, %cst_57 [1] : vector<8x32xf32> to vector<8xf32>
    %144 = vector.shape_cast %143 : vector<8xf32> to vector<8x1xf32>
    %cst_58 = arith.constant 3.200000e+01 : f32
    %145 = vector.broadcast %cst_58 : f32 to vector<8x1xf32>
    %146 = arith.divf %144, %145 : vector<8x1xf32>
    %147 = vector.broadcast %146 : vector<8x1xf32> to vector<8x32xf32>
    %148 = arith.subf %140, %147 : vector<8x32xf32>
    %149 = arith.mulf %148, %148 : vector<8x32xf32>
    %cst_59 = arith.constant dense<0.000000e+00> : vector<8xf32>
    %150 = vector.multi_reduction <add>, %149, %cst_59 [1] : vector<8x32xf32> to vector<8xf32>
    %151 = vector.shape_cast %150 : vector<8xf32> to vector<8x1xf32>
    %cst_60 = arith.constant 3.200000e+01 : f32
    %152 = vector.broadcast %cst_60 : f32 to vector<8x1xf32>
    %153 = arith.divf %151, %152 : vector<8x1xf32>
    %154 = vector.broadcast %146 : vector<8x1xf32> to vector<8x32xf32>
    %155 = arith.subf %140, %154 : vector<8x32xf32>
    %cst_61 = arith.constant 9.99999974E-6 : f32
    %156 = vector.broadcast %cst_61 : f32 to vector<8x1xf32>
    %157 = arith.addf %153, %156 : vector<8x1xf32>
    %158 = math.rsqrt %157 : vector<8x1xf32>
    %159 = vector.broadcast %158 : vector<8x1xf32> to vector<8x32xf32>
    %160 = arith.mulf %155, %159 : vector<8x32xf32>
    %161 = vector.broadcast %141 : vector<1x32xf32> to vector<8x32xf32>
    %162 = arith.mulf %160, %161 : vector<8x32xf32>
    %163 = vector.broadcast %142 : vector<1x32xf32> to vector<8x32xf32>
    %164 = arith.addf %162, %163 : vector<8x32xf32>
    %165 = arith.truncf %164 : vector<8x32xf32> to vector<8x32xbf16>
    %cst_62 = arith.constant 0.000000e+00 : f32
    %166 = vector.broadcast %cst_62 : f32 to vector<8x32xf32>
    %c0_63 = arith.constant 0 : index
    %c0_64 = arith.constant 0 : index
    %167 = vector.load %arg15[%c0_63, %c0_64] : memref<32x128xbf16, #tpu.memory_space<vmem>>, vector<32x32xbf16>
    %cst_65 = arith.constant dense<0.000000e+00> : vector<8x32xf32>
    %168 = tpu.matmul %165, %167, %cst_65 {dimension_numbers = #tpu.dot_dimension_numbers<[1], [0], [0], [1], [0, 0, 1, 1], [], []>} : vector<8x32xbf16>, vector<32x32xbf16>, vector<8x32xf32> -> vector<8x32xf32>
    %c0_66 = arith.constant 0 : index
    %c0_67 = arith.constant 0 : index
    %169 = vector.load %arg16[%c0_66, %c0_67] : memref<1x128xf32, #tpu.memory_space<vmem>>, vector<1x32xf32>
    %170 = vector.broadcast %169 : vector<1x32xf32> to vector<8x32xf32>
    %171 = arith.addf %168, %170 : vector<8x32xf32>
    %172 = arith.mulf %171, %171 : vector<8x32xf32>
    %173 = arith.mulf %171, %172 : vector<8x32xf32>
    %cst_68 = arith.constant 4.471500e-02 : f32
    %174 = vector.broadcast %cst_68 : f32 to vector<8x32xf32>
    %175 = arith.mulf %174, %173 : vector<8x32xf32>
    %176 = arith.addf %171, %175 : vector<8x32xf32>
    %cst_69 = arith.constant 0.797884583 : f32
    %177 = vector.broadcast %cst_69 : f32 to vector<8x32xf32>
    %178 = arith.mulf %177, %176 : vector<8x32xf32>
    %179 = math.tanh %178 : vector<8x32xf32>
    %cst_70 = arith.constant 1.000000e+00 : f32
    %180 = vector.broadcast %cst_70 : f32 to vector<8x32xf32>
    %181 = arith.addf %180, %179 : vector<8x32xf32>
    %cst_71 = arith.constant 5.000000e-01 : f32
    %182 = vector.broadcast %cst_71 : f32 to vector<8x32xf32>
    %183 = arith.mulf %182, %181 : vector<8x32xf32>
    %184 = arith.mulf %171, %183 : vector<8x32xf32>
    %185 = arith.truncf %184 : vector<8x32xf32> to vector<8x32xbf16>
    %c0_72 = arith.constant 0 : index
    %c0_73 = arith.constant 0 : index
    %186 = vector.load %arg17[%c0_72, %c0_73] : memref<128x32xbf16, #tpu.memory_space<vmem>>, vector<32x32xbf16>
    %cst_74 = arith.constant dense<0.000000e+00> : vector<8x32xf32>
    %187 = tpu.matmul %185, %186, %cst_74 {dimension_numbers = #tpu.dot_dimension_numbers<[1], [0], [0], [1], [0, 0, 1, 1], [], []>} : vector<8x32xbf16>, vector<32x32xbf16>, vector<8x32xf32> -> vector<8x32xf32>
    %188 = arith.addf %166, %187 : vector<8x32xf32>
    %c0_75 = arith.constant 0 : index
    %c32 = arith.constant 32 : index
    %189 = vector.load %arg15[%c0_75, %c32] : memref<32x128xbf16, #tpu.memory_space<vmem>>, vector<32x32xbf16>
    %cst_76 = arith.constant dense<0.000000e+00> : vector<8x32xf32>
    %190 = tpu.matmul %165, %189, %cst_76 {dimension_numbers = #tpu.dot_dimension_numbers<[1], [0], [0], [1], [0, 0, 1, 1], [], []>} : vector<8x32xbf16>, vector<32x32xbf16>, vector<8x32xf32> -> vector<8x32xf32>
    %c0_77 = arith.constant 0 : index
    %c32_78 = arith.constant 32 : index
    %191 = vector.load %arg16[%c0_77, %c32_78] : memref<1x128xf32, #tpu.memory_space<vmem>>, vector<1x32xf32>
    %192 = vector.broadcast %191 : vector<1x32xf32> to vector<8x32xf32>
    %193 = arith.addf %190, %192 : vector<8x32xf32>
    %194 = arith.mulf %193, %193 : vector<8x32xf32>
    %195 = arith.mulf %193, %194 : vector<8x32xf32>
    %cst_79 = arith.constant 4.471500e-02 : f32
    %196 = vector.broadcast %cst_79 : f32 to vector<8x32xf32>
    %197 = arith.mulf %196, %195 : vector<8x32xf32>
    %198 = arith.addf %193, %197 : vector<8x32xf32>
    %cst_80 = arith.constant 0.797884583 : f32
    %199 = vector.broadcast %cst_80 : f32 to vector<8x32xf32>
    %200 = arith.mulf %199, %198 : vector<8x32xf32>
    %201 = math.tanh %200 : vector<8x32xf32>
    %cst_81 = arith.constant 1.000000e+00 : f32
    %202 = vector.broadcast %cst_81 : f32 to vector<8x32xf32>
    %203 = arith.addf %202, %201 : vector<8x32xf32>
    %cst_82 = arith.constant 5.000000e-01 : f32
    %204 = vector.broadcast %cst_82 : f32 to vector<8x32xf32>
    %205 = arith.mulf %204, %203 : vector<8x32xf32>
    %206 = arith.mulf %193, %205 : vector<8x32xf32>
    %207 = arith.truncf %206 : vector<8x32xf32> to vector<8x32xbf16>
    %c32_83 = arith.constant 32 : index
    %c0_84 = arith.constant 0 : index
    %208 = vector.load %arg17[%c32_83, %c0_84] : memref<128x32xbf16, #tpu.memory_space<vmem>>, vector<32x32xbf16>
    %cst_85 = arith.constant dense<0.000000e+00> : vector<8x32xf32>
    %209 = tpu.matmul %207, %208, %cst_85 {dimension_numbers = #tpu.dot_dimension_numbers<[1], [0], [0], [1], [0, 0, 1, 1], [], []>} : vector<8x32xbf16>, vector<32x32xbf16>, vector<8x32xf32> -> vector<8x32xf32>
    %210 = arith.addf %188, %209 : vector<8x32xf32>
    %c0_86 = arith.constant 0 : index
    %c64 = arith.constant 64 : index
    %211 = vector.load %arg15[%c0_86, %c64] : memref<32x128xbf16, #tpu.memory_space<vmem>>, vector<32x32xbf16>
    %cst_87 = arith.constant dense<0.000000e+00> : vector<8x32xf32>
    %212 = tpu.matmul %165, %211, %cst_87 {dimension_numbers = #tpu.dot_dimension_numbers<[1], [0], [0], [1], [0, 0, 1, 1], [], []>} : vector<8x32xbf16>, vector<32x32xbf16>, vector<8x32xf32> -> vector<8x32xf32>
    %c0_88 = arith.constant 0 : index
    %c64_89 = arith.constant 64 : index
    %213 = vector.load %arg16[%c0_88, %c64_89] : memref<1x128xf32, #tpu.memory_space<vmem>>, vector<1x32xf32>
    %214 = vector.broadcast %213 : vector<1x32xf32> to vector<8x32xf32>
    %215 = arith.addf %212, %214 : vector<8x32xf32>
    %216 = arith.mulf %215, %215 : vector<8x32xf32>
    %217 = arith.mulf %215, %216 : vector<8x32xf32>
    %cst_90 = arith.constant 4.471500e-02 : f32
    %218 = vector.broadcast %cst_90 : f32 to vector<8x32xf32>
    %219 = arith.mulf %218, %217 : vector<8x32xf32>
    %220 = arith.addf %215, %219 : vector<8x32xf32>
    %cst_91 = arith.constant 0.797884583 : f32
    %221 = vector.broadcast %cst_91 : f32 to vector<8x32xf32>
    %222 = arith.mulf %221, %220 : vector<8x32xf32>
    %223 = math.tanh %222 : vector<8x32xf32>
    %cst_92 = arith.constant 1.000000e+00 : f32
    %224 = vector.broadcast %cst_92 : f32 to vector<8x32xf32>
    %225 = arith.addf %224, %223 : vector<8x32xf32>
    %cst_93 = arith.constant 5.000000e-01 : f32
    %226 = vector.broadcast %cst_93 : f32 to vector<8x32xf32>
    %227 = arith.mulf %226, %225 : vector<8x32xf32>
    %228 = arith.mulf %215, %227 : vector<8x32xf32>
    %229 = arith.truncf %228 : vector<8x32xf32> to vector<8x32xbf16>
    %c64_94 = arith.constant 64 : index
    %c0_95 = arith.constant 0 : index
    %230 = vector.load %arg17[%c64_94, %c0_95] : memref<128x32xbf16, #tpu.memory_space<vmem>>, vector<32x32xbf16>
    %cst_96 = arith.constant dense<0.000000e+00> : vector<8x32xf32>
    %231 = tpu.matmul %229, %230, %cst_96 {dimension_numbers = #tpu.dot_dimension_numbers<[1], [0], [0], [1], [0, 0, 1, 1], [], []>} : vector<8x32xbf16>, vector<32x32xbf16>, vector<8x32xf32> -> vector<8x32xf32>
    %232 = arith.addf %210, %231 : vector<8x32xf32>
    %c0_97 = arith.constant 0 : index
    %c96 = arith.constant 96 : index
    %233 = vector.load %arg15[%c0_97, %c96] : memref<32x128xbf16, #tpu.memory_space<vmem>>, vector<32x32xbf16>
    %cst_98 = arith.constant dense<0.000000e+00> : vector<8x32xf32>
    %234 = tpu.matmul %165, %233, %cst_98 {dimension_numbers = #tpu.dot_dimension_numbers<[1], [0], [0], [1], [0, 0, 1, 1], [], []>} : vector<8x32xbf16>, vector<32x32xbf16>, vector<8x32xf32> -> vector<8x32xf32>
    %c0_99 = arith.constant 0 : index
    %c96_100 = arith.constant 96 : index
    %235 = vector.load %arg16[%c0_99, %c96_100] : memref<1x128xf32, #tpu.memory_space<vmem>>, vector<1x32xf32>
    %236 = vector.broadcast %235 : vector<1x32xf32> to vector<8x32xf32>
    %237 = arith.addf %234, %236 : vector<8x32xf32>
    %238 = arith.mulf %237, %237 : vector<8x32xf32>
    %239 = arith.mulf %237, %238 : vector<8x32xf32>
    %cst_101 = arith.constant 4.471500e-02 : f32
    %240 = vector.broadcast %cst_101 : f32 to vector<8x32xf32>
    %241 = arith.mulf %240, %239 : vector<8x32xf32>
    %242 = arith.addf %237, %241 : vector<8x32xf32>
    %cst_102 = arith.constant 0.797884583 : f32
    %243 = vector.broadcast %cst_102 : f32 to vector<8x32xf32>
    %244 = arith.mulf %243, %242 : vector<8x32xf32>
    %245 = math.tanh %244 : vector<8x32xf32>
    %cst_103 = arith.constant 1.000000e+00 : f32
    %246 = vector.broadcast %cst_103 : f32 to vector<8x32xf32>
    %247 = arith.addf %246, %245 : vector<8x32xf32>
    %cst_104 = arith.constant 5.000000e-01 : f32
    %248 = vector.broadcast %cst_104 : f32 to vector<8x32xf32>
    %249 = arith.mulf %248, %247 : vector<8x32xf32>
    %250 = arith.mulf %237, %249 : vector<8x32xf32>
    %251 = arith.truncf %250 : vector<8x32xf32> to vector<8x32xbf16>
    %c96_105 = arith.constant 96 : index
    %c0_106 = arith.constant 0 : index
    %252 = vector.load %arg17[%c96_105, %c0_106] : memref<128x32xbf16, #tpu.memory_space<vmem>>, vector<32x32xbf16>
    %cst_107 = arith.constant dense<0.000000e+00> : vector<8x32xf32>
    %253 = tpu.matmul %251, %252, %cst_107 {dimension_numbers = #tpu.dot_dimension_numbers<[1], [0], [0], [1], [0, 0, 1, 1], [], []>} : vector<8x32xbf16>, vector<32x32xbf16>, vector<8x32xf32> -> vector<8x32xf32>
    %254 = arith.addf %232, %253 : vector<8x32xf32>
    %255 = arith.addf %140, %254 : vector<8x32xf32>
    %c0_108 = arith.constant 0 : index
    %c0_109 = arith.constant 0 : index
    %256 = vector.load %arg18[%c0_108, %c0_109] : memref<1x32xf32, #tpu.memory_space<vmem>>, vector<1x32xf32>
    %257 = vector.broadcast %256 : vector<1x32xf32> to vector<8x32xf32>
    %258 = arith.addf %255, %257 : vector<8x32xf32>
    %c0_110 = arith.constant 0 : index
    %c0_111 = arith.constant 0 : index
    %c0_112 = arith.constant 0 : index
    %259 = vector.load %arg19[%c0_110, %c0_111, %c0_112] : memref<1x8x32xf32, #tpu.memory_space<vmem>>, vector<1x8x32xf32>
    %260 = vector.shape_cast %259 : vector<1x8x32xf32> to vector<8x32xf32>
    %261 = vector.shape_cast %258 : vector<8x32xf32> to vector<1x8x32xf32>
    tpu.vector_store %arg19[%c0_110, %c0_111, %c0_112], %261 {strides = array<i32>} : memref<1x8x32xf32, #tpu.memory_space<vmem>>, vector<1x8x32xf32>,
    return
  }
  func.func @transform_0(%arg0: i32) -> (i32, i32, i32) {
    %c0_i32 = arith.constant 0 : i32
    %c0_i32_0 = arith.constant 0 : i32
    %c0_i32_1 = arith.constant 0 : i32
    return %arg0, %c0_i32, %c0_i32_0 : i32, i32, i32
  }
  func.func @transform_1(%arg0: i32) -> (i32, i32, i32) {
    %c0_i32 = arith.constant 0 : i32
    %c0_i32_0 = arith.constant 0 : i32
    %c0_i32_1 = arith.constant 0 : i32
    return %arg0, %c0_i32, %c0_i32_0 : i32, i32, i32
  }
  func.func @transform_2(%arg0: i32) -> (i32, i32) {
    %c0_i32 = arith.constant 0 : i32
    %c0_i32_0 = arith.constant 0 : i32
    %c0_i32_1 = arith.constant 0 : i32
    return %c0_i32, %c0_i32_0 : i32, i32
  }
  func.func @transform_3(%arg0: i32) -> (i32, i32) {
    %c0_i32 = arith.constant 0 : i32
    %c0_i32_0 = arith.constant 0 : i32
    %c0_i32_1 = arith.constant 0 : i32
    return %c0_i32, %c0_i32_0 : i32, i32
  }
  func.func @transform_4(%arg0: i32) -> (i32, i32) {
    %c0_i32 = arith.constant 0 : i32
    %c0_i32_0 = arith.constant 0 : i32
    %c0_i32_1 = arith.constant 0 : i32
    return %c0_i32, %c0_i32_0 : i32, i32
  }
  func.func @transform_5(%arg0: i32) -> (i32, i32) {
    %c0_i32 = arith.constant 0 : i32
    %c0_i32_0 = arith.constant 0 : i32
    %c0_i32_1 = arith.constant 0 : i32
    return %c0_i32, %c0_i32_0 : i32, i32
  }
  func.func @transform_6(%arg0: i32) -> (i32, i32) {
    %c0_i32 = arith.constant 0 : i32
    %c0_i32_0 = arith.constant 0 : i32
    %c0_i32_1 = arith.constant 0 : i32
    return %c0_i32, %c0_i32_0 : i32, i32
  }
  func.func @transform_7(%arg0: i32) -> (i32, i32) {
    %c0_i32 = arith.constant 0 : i32
    %c0_i32_0 = arith.constant 0 : i32
    %c0_i32_1 = arith.constant 0 : i32
    return %c0_i32, %c0_i32_0 : i32, i32
  }
  func.func @transform_8(%arg0: i32) -> (i32, i32) {
    %c0_i32 = arith.constant 0 : i32
    %c0_i32_0 = arith.constant 0 : i32
    %c0_i32_1 = arith.constant 0 : i32
    return %c0_i32, %c0_i32_0 : i32, i32
  }
  func.func @transform_9(%arg0: i32) -> (i32, i32) {
    %c0_i32 = arith.constant 0 : i32
    %c0_i32_0 = arith.constant 0 : i32
    %c0_i32_1 = arith.constant 0 : i32
    return %c0_i32, %c0_i32_0 : i32, i32
  }
  func.func @transform_10(%arg0: i32) -> (i32, i32) {
    %c0_i32 = arith.constant 0 : i32
    %c0_i32_0 = arith.constant 0 : i32
    %c0_i32_1 = arith.constant 0 : i32
    return %c0_i32, %c0_i32_0 : i32, i32
  }
  func.func @transform_11(%arg0: i32) -> (i32, i32) {
    %c0_i32 = arith.constant 0 : i32
    %c0_i32_0 = arith.constant 0 : i32
    %c0_i32_1 = arith.constant 0 : i32
    return %c0_i32, %c0_i32_0 : i32, i32
  }
  func.func @transform_12(%arg0: i32) -> (i32, i32) {
    %c0_i32 = arith.constant 0 : i32
    %c0_i32_0 = arith.constant 0 : i32
    %c0_i32_1 = arith.constant 0 : i32
    return %c0_i32, %c0_i32_0 : i32, i32
  }
  func.func @transform_13(%arg0: i32) -> (i32, i32) {
    %c0_i32 = arith.constant 0 : i32
    %c0_i32_0 = arith.constant 0 : i32
    %c0_i32_1 = arith.constant 0 : i32
    return %c0_i32, %c0_i32_0 : i32, i32
  }
  func.func @transform_14(%arg0: i32) -> (i32, i32) {
    %c0_i32 = arith.constant 0 : i32
    %c0_i32_0 = arith.constant 0 : i32
    %c0_i32_1 = arith.constant 0 : i32
    return %c0_i32, %c0_i32_0 : i32, i32
  }
  func.func @transform_15(%arg0: i32) -> (i32, i32) {
    %c0_i32 = arith.constant 0 : i32
    %c0_i32_0 = arith.constant 0 : i32
    %c0_i32_1 = arith.constant 0 : i32
    return %c0_i32, %c0_i32_0 : i32, i32
  }
  func.func @transform_16(%arg0: i32) -> (i32, i32) {
    %c0_i32 = arith.constant 0 : i32
    %c0_i32_0 = arith.constant 0 : i32
    %c0_i32_1 = arith.constant 0 : i32
    return %c0_i32, %c0_i32_0 : i32, i32
  }
  func.func @transform_17(%arg0: i32) -> (i32, i32) {
    %c0_i32 = arith.constant 0 : i32
    %c0_i32_0 = arith.constant 0 : i32
    %c0_i32_1 = arith.constant 0 : i32
    return %c0_i32, %c0_i32_0 : i32, i32
  }
  func.func @transform_18(%arg0: i32) -> (i32, i32, i32) {
    %c0_i32 = arith.constant 0 : i32
    %c0_i32_0 = arith.constant 0 : i32
    %c0_i32_1 = arith.constant 0 : i32
    return %arg0, %c0_i32, %c0_i32_0 : i32, i32, i32
  }
}

</mosaic_0001>

<llo_original>
// kernel: tpu_custom_call.1
$region0: #{tpu_custom_call.1}
  #allocation0 [shape = 'u32[]', space=smem, size = 0x4, offset = 0x4, fixed_abs, tag = 'smem constant byte address 0x4 - core index']
  #allocation1 [shape = 'u32[144,128]{1,0:T(1,128)}', space=vmem, size = 0x12000, scoped, tag = 'internal scratch']
  %s0 = inlined_call_operand.vmem [shape: f32[2,8,32], index: 0, kind: input, shape index: {}]
  %s1 = inlined_call_operand.vmem [shape: f32[2,1,8], index: 1, kind: input, shape index: {}]
  %s2 = inlined_call_operand.hbm [shape: f32[1,32], index: 2, kind: input, shape index: {}]
  %s3 = inlined_call_operand.hbm [shape: f32[1,32], index: 3, kind: input, shape index: {}]
  %s4 = inlined_call_operand.vmem [shape: bf16[32,32], index: 4, kind: input, shape index: {}]
  %s5 = inlined_call_operand.hbm [shape: f32[1,32], index: 5, kind: input, shape index: {}]
  %s6 = inlined_call_operand.vmem [shape: bf16[32,32], index: 6, kind: input, shape index: {}]
  %s7 = inlined_call_operand.hbm [shape: f32[1,32], index: 7, kind: input, shape index: {}]
  %s8 = inlined_call_operand.vmem [shape: bf16[32,32], index: 8, kind: input, shape index: {}]
  %s9 = inlined_call_operand.hbm [shape: f32[1,32], index: 9, kind: input, shape index: {}]
  %s10 = inlined_call_operand.vmem [shape: bf16[32,32], index: 10, kind: input, shape index: {}]
  %s11 = inlined_call_operand.vmem [shape: f32[1,32], index: 11, kind: input, shape index: {}]
  %s12 = inlined_call_operand.vmem [shape: f32[1,32], index: 12, kind: input, shape index: {}]
  %s13 = inlined_call_operand.vmem [shape: f32[1,32], index: 13, kind: input, shape index: {}]
  %s14 = inlined_call_operand.vmem [shape: bf16[32,128], index: 14, kind: input, shape index: {}]
  %s15 = inlined_call_operand.vmem [shape: f32[1,128], index: 15, kind: input, shape index: {}]
  %s16 = inlined_call_operand.vmem [shape: bf16[128,32], index: 16, kind: input, shape index: {}]
  %s17 = inlined_call_operand.vmem [shape: f32[1,32], index: 17, kind: input, shape index: {}]
  %s18 = inlined_call_operand.hbm [shape: f32[2,8,32], index: 18, kind: output, shape index: {}]
  %s19 = sld [smem:[#allocation0]]
  $region125: #{tpu_custom_call.1} parent=0
    _
  %s21 = ssub.s32 1, %s19
  %s22 = scalar_select 0, %s21, %s19
  $region1: #{tpu_custom_call.1} parent=0
    #allocation2 [shape = 'u8[512]{0}', space=vmem, size = 0x400, scoped, tag = 'input window, operand 2, single buffered']
    #allocation3 [shape = 's32[2]{0}', space=sflag, size = 0x8, scoped, tag = 'scoped memory for tpu_custom_call.1']
    #allocation4 [shape = 's32[2]{0}', space=sflag, size = 0x8, scoped, tag = 'scoped memory for tpu_custom_call.1']
    #allocation5 [shape = 'u8[512]{0}', space=vmem, size = 0x400, scoped, tag = 'input window, operand 3, single buffered']
    #allocation6 [shape = 's32[1]{0}', space=sflag, size = 0x4, scoped, tag = 'scoped memory for tpu_custom_call.1']
    #allocation7 [shape = 'u8[512]{0}', space=vmem, size = 0x400, scoped, tag = 'input window, operand 5, single buffered']
    #allocation8 [shape = 'u8[512]{0}', space=vmem, size = 0x400, scoped, tag = 'input window, operand 7, single buffered']
    #allocation9 [shape = 's32[1]{0}', space=sflag, size = 0x4, scoped, tag = 'scoped memory for tpu_custom_call.1']
    #allocation10 [shape = 'u8[512]{0}', space=vmem, size = 0x400, scoped, tag = 'input window, operand 9, single buffered']
    #allocation11 [shape = 'u8[8192]{0}', space=vmem, size = 0x2000, scoped, tag = 'output window, operand 0']
    %23 = vsyncpa [#allocation3], 0
    %24 = vsyncpa [#allocation6], 0
    %25 = vsyncpa [#allocation9], 0
    %26 = vsyncpa [#allocation4], 0
    %s27 = scalar_lea.sflag [#allocation4], 1
    %28 = vsyncpa %s27, 0
    loop: start=0, step=1, limit=4
    $region2: #{tpu_custom_call.1} parent=1 // loop_pre_header
      _
    $region3: #{tpu_custom_call.1} parent=1 // loop_header
      %s30 = sphi 0, %s34
      %p31 = scmp.ge.s32.totalorder %s30, 4
      %s40 = sphi 0, %s42
      %s43 = sphi 0, %s40
      %s44 = sphi 0, %s43
      %s60 = sphi 0, %s44
      %s66 = sphi 0, %s68
      %s69 = sphi 0, %s66
      %s70 = sphi 0, %s69
      %s86 = sphi 0, %s70
      %s90 = sphi 0, %s90
      %s92 = sphi 0, %s90
      %s93 = sphi 0, %s92
      %s107 = sphi 0, %s93
      %s111 = sphi 0, %s111
      %s113 = sphi 0, %s111
      %s114 = sphi 0, %s113
      %s128 = sphi 0, %s114
      %s132 = sphi 0, %s132
      %s134 = sphi 0, %s132
      %s135 = sphi 0, %s134
      %s149 = sphi 0, %s135
      %s153 = sphi 0, %s153
      %s155 = sphi 0, %s153
      %s156 = sphi 0, %s155
      %s170 = sphi 0, %s156
      %s174 = sphi 0, %s174
      %s176 = sphi 0, %s174
      %s177 = sphi 0, %s176
      %s191 = sphi 0, %s177
      %s195 = sphi 0, %s195
      %s197 = sphi 0, %s195
      %s198 = sphi 0, %s197
      %s212 = sphi 0, %s198
      %s216 = sphi 0, %s216
      %s218 = sphi 0, %s216
      %s219 = sphi 0, %s218
      %s233 = sphi 0, %s219
      %s237 = sphi 0, %s237
      %s239 = sphi 0, %s237
      %s240 = sphi 0, %s239
      %s254 = sphi 0, %s240
      %s258 = sphi 0, %s258
      %s260 = sphi 0, %s258
      %s261 = sphi 0, %s260
      %s275 = sphi 0, %s261
      %s279 = sphi 0, %s279
      %s281 = sphi 0, %s279
      %s282 = sphi 0, %s281
      %s296 = sphi 0, %s282
      %s300 = sphi 0, %s300
      %s302 = sphi 0, %s300
      %s303 = sphi 0, %s302
      %s317 = sphi 0, %s303
      %s321 = sphi 0, %s321
      %s323 = sphi 0, %s321
      %s324 = sphi 0, %s323
      %s338 = sphi 0, %s324
      %s342 = sphi 0, %s342
      %s344 = sphi 0, %s342
      %s345 = sphi 0, %s344
      %s359 = sphi 0, %s345
      %s363 = sphi 0, %s363
      %s365 = sphi 0, %s363
      %s366 = sphi 0, %s365
      %s380 = sphi 0, %s366
      %s384 = sphi 0, %s384
      %s386 = sphi 0, %s384
      %s387 = sphi 0, %s386
      %s401 = sphi 0, %s387
      %s405 = sphi 0, %s405
      %s407 = sphi 0, %s405
      %s408 = sphi 0, %s407
      %s422 = sphi 0, %s408
      %s428 = sphi 0, %s430
      %s431 = sphi 0, %s428
      %s432 = sphi 0, %s431
      %s448 = sphi 0, %s432
    $region4: #{tpu_custom_call.1} parent=1 // loop_header_branch
      %33 = sbr.rel (%p31) target = $region8
    $region5: #{tpu_custom_call.1} parent=1 // loop_body
      %s35 = ssub.s32 %s30, 1
      %s36 = ssub.s32 %s30, 2
      %s37 = sadd.s32 %s30, 1
      %s38 = ssub.s32 %s30, %s37
      %p39 = scmp.eq.s32.totalorder %s38, 0
      %s41 = sadd.s32 %s40, 1
      %s42 = scalar_select %p39, %s40, %s41
      %p45 = pneg %p39
      %p46 = scmp.eq.s32.totalorder %s30, 1
      %p47 = por %p45, %p46
      %p48 = scmp.ne.s32.totalorder %s40, %s43
      %p49 = scmp.eq.s32.totalorder %s30, 0
      %p50 = por %p48, %p49
      %p51 = scmp.ne.s32.totalorder %s40, %s43
      %p52 = scmp.eq.s32.totalorder %s35, 1
      %p53 = por %p51, %p52
      %p54 = scmp.ne.s32.totalorder %s43, %s44
      %p55 = scmp.eq.s32.totalorder %s35, 0
      %p56 = por %p54, %p55
      %p57 = scmp.ne.s32.totalorder %s43, %s44
      %p58 = scmp.eq.s32.totalorder %s36, 1
      %p59 = por %p57, %p58
      %p61 = scmp.ne.s32.totalorder %s44, %s60
      %p62 = scmp.eq.s32.totalorder %s36, 0
      %p63 = por %p61, %p62
      %s64 = ssub.s32 %s30, %s37
      %p65 = scmp.eq.s32.totalorder %s64, 0
      %s67 = sadd.s32 %s66, 1
      %s68 = scalar_select %p65, %s66, %s67
      %p71 = pneg %p65
      %p72 = scmp.eq.s32.totalorder %s30, 1
      %p73 = por %p71, %p72
      %p74 = scmp.ne.s32.totalorder %s66, %s69
      %p75 = scmp.eq.s32.totalorder %s30, 0
      %p76 = por %p74, %p75
      %p77 = scmp.ne.s32.totalorder %s66, %s69
      %p78 = scmp.eq.s32.totalorder %s35, 1
      %p79 = por %p77, %p78
      %p80 = scmp.ne.s32.totalorder %s69, %s70
      %p81 = scmp.eq.s32.totalorder %s35, 0
      %p82 = por %p80, %p81
      %p83 = scmp.ne.s32.totalorder %s69, %s70
      %p84 = scmp.eq.s32.totalorder %s36, 1
      %p85 = por %p83, %p84
      %p87 = scmp.ne.s32.totalorder %s70, %s86
      %p88 = scmp.eq.s32.totalorder %s36, 0
      %p89 = por %p87, %p88
      %s91 = sadd.s32 %s90, 1
      %p94 = scmp.eq.s32.totalorder %s30, 1
      %p95 = scmp.ne.s32.totalorder %s90, %s92
      %p96 = scmp.eq.s32.totalorder %s30, 0
      %p97 = por %p95, %p96
      %p98 = scmp.ne.s32.totalorder %s90, %s92
      %p99 = scmp.eq.s32.totalorder %s35, 1
      %p100 = por %p98, %p99
      %p101 = scmp.ne.s32.totalorder %s92, %s93
      %p102 = scmp.eq.s32.totalorder %s35, 0
      %p103 = por %p101, %p102
      %p104 = scmp.ne.s32.totalorder %s92, %s93
      %p105 = scmp.eq.s32.totalorder %s36, 1
      %p106 = por %p104, %p105
      %p108 = scmp.ne.s32.totalorder %s93, %s107
      %p109 = scmp.eq.s32.totalorder %s36, 0
      %p110 = por %p108, %p109
      %s112 = sadd.s32 %s111, 1
      %p115 = scmp.eq.s32.totalorder %s30, 1
      %p116 = scmp.ne.s32.totalorder %s111, %s113
      %p117 = scmp.eq.s32.totalorder %s30, 0
      %p118 = por %p116, %p117
      %p119 = scmp.ne.s32.totalorder %s111, %s113
      %p120 = scmp.eq.s32.totalorder %s35, 1
      %p121 = por %p119, %p120
      %p122 = scmp.ne.s32.totalorder %s113, %s114
      %p123 = scmp.eq.s32.totalorder %s35, 0
      %p124 = por %p122, %p123
      %p125 = scmp.ne.s32.totalorder %s113, %s114
      %p126 = scmp.eq.s32.totalorder %s36, 1
      %p127 = por %p125, %p126
      %p129 = scmp.ne.s32.totalorder %s114, %s128
      %p130 = scmp.eq.s32.totalorder %s36, 0
      %p131 = por %p129, %p130
      %s133 = sadd.s32 %s132, 1
      %p136 = scmp.eq.s32.totalorder %s30, 1
      %p137 = scmp.ne.s32.totalorder %s132, %s134
      %p138 = scmp.eq.s32.totalorder %s30, 0
      %p139 = por %p137, %p138
      %p140 = scmp.ne.s32.totalorder %s132, %s134
      %p141 = scmp.eq.s32.totalorder %s35, 1
      %p142 = por %p140, %p141
      %p143 = scmp.ne.s32.totalorder %s134, %s135
      %p144 = scmp.eq.s32.totalorder %s35, 0
      %p145 = por %p143, %p144
      %p146 = scmp.ne.s32.totalorder %s134, %s135
      %p147 = scmp.eq.s32.totalorder %s36, 1
      %p148 = por %p146, %p147
      %p150 = scmp.ne.s32.totalorder %s135, %s149
      %p151 = scmp.eq.s32.totalorder %s36, 0
      %p152 = por %p150, %p151
      %s154 = sadd.s32 %s153, 1
      %p157 = scmp.eq.s32.totalorder %s30, 1
      %p158 = scmp.ne.s32.totalorder %s153, %s155
      %p159 = scmp.eq.s32.totalorder %s30, 0
      %p160 = por %p158, %p159
      %p161 = scmp.ne.s32.totalorder %s153, %s155
      %p162 = scmp.eq.s32.totalorder %s35, 1
      %p163 = por %p161, %p162
      %p164 = scmp.ne.s32.totalorder %s155, %s156
      %p165 = scmp.eq.s32.totalorder %s35, 0
      %p166 = por %p164, %p165
      %p167 = scmp.ne.s32.totalorder %s155, %s156
      %p168 = scmp.eq.s32.totalorder %s36, 1
      %p169 = por %p167, %p168
      %p171 = scmp.ne.s32.totalorder %s156, %s170
      %p172 = scmp.eq.s32.totalorder %s36, 0
      %p173 = por %p171, %p172
      %s175 = sadd.s32 %s174, 1
      %p178 = scmp.eq.s32.totalorder %s30, 1
      %p179 = scmp.ne.s32.totalorder %s174, %s176
      %p180 = scmp.eq.s32.totalorder %s30, 0
      %p181 = por %p179, %p180
      %p182 = scmp.ne.s32.totalorder %s174, %s176
      %p183 = scmp.eq.s32.totalorder %s35, 1
      %p184 = por %p182, %p183
      %p185 = scmp.ne.s32.totalorder %s176, %s177
      %p186 = scmp.eq.s32.totalorder %s35, 0
      %p187 = por %p185, %p186
      %p188 = scmp.ne.s32.totalorder %s176, %s177
      %p189 = scmp.eq.s32.totalorder %s36, 1
      %p190 = por %p188, %p189
      %p192 = scmp.ne.s32.totalorder %s177, %s191
      %p193 = scmp.eq.s32.totalorder %s36, 0
      %p194 = por %p192, %p193
      %s196 = sadd.s32 %s195, 1
      %p199 = scmp.eq.s32.totalorder %s30, 1
      %p200 = scmp.ne.s32.totalorder %s195, %s197
      %p201 = scmp.eq.s32.totalorder %s30, 0
      %p202 = por %p200, %p201
      %p203 = scmp.ne.s32.totalorder %s195, %s197
      %p204 = scmp.eq.s32.totalorder %s35, 1
      %p205 = por %p203, %p204
      %p206 = scmp.ne.s32.totalorder %s197, %s198
      %p207 = scmp.eq.s32.totalorder %s35, 0
      %p208 = por %p206, %p207
      %p209 = scmp.ne.s32.totalorder %s197, %s198
      %p210 = scmp.eq.s32.totalorder %s36, 1
      %p211 = por %p209, %p210
      %p213 = scmp.ne.s32.totalorder %s198, %s212
      %p214 = scmp.eq.s32.totalorder %s36, 0
      %p215 = por %p213, %p214
      %s217 = sadd.s32 %s216, 1
      %p220 = scmp.eq.s32.totalorder %s30, 1
      %p221 = scmp.ne.s32.totalorder %s216, %s218
      %p222 = scmp.eq.s32.totalorder %s30, 0
      %p223 = por %p221, %p222
      %p224 = scmp.ne.s32.totalorder %s216, %s218
      %p225 = scmp.eq.s32.totalorder %s35, 1
      %p226 = por %p224, %p225
      %p227 = scmp.ne.s32.totalorder %s218, %s219
      %p228 = scmp.eq.s32.totalorder %s35, 0
      %p229 = por %p227, %p228
      %p230 = scmp.ne.s32.totalorder %s218, %s219
      %p231 = scmp.eq.s32.totalorder %s36, 1
      %p232 = por %p230, %p231
      %p234 = scmp.ne.s32.totalorder %s219, %s233
      %p235 = scmp.eq.s32.totalorder %s36, 0
      %p236 = por %p234, %p235
      %s238 = sadd.s32 %s237, 1
      %p241 = scmp.eq.s32.totalorder %s30, 1
      %p242 = scmp.ne.s32.totalorder %s237, %s239
      %p243 = scmp.eq.s32.totalorder %s30, 0
      %p244 = por %p242, %p243
      %p245 = scmp.ne.s32.totalorder %s237, %s239
      %p246 = scmp.eq.s32.totalorder %s35, 1
      %p247 = por %p245, %p246
      %p248 = scmp.ne.s32.totalorder %s239, %s240
      %p249 = scmp.eq.s32.totalorder %s35, 0
      %p250 = por %p248, %p249
      %p251 = scmp.ne.s32.totalorder %s239, %s240
      %p252 = scmp.eq.s32.totalorder %s36, 1
      %p253 = por %p251, %p252
      %p255 = scmp.ne.s32.totalorder %s240, %s254
      %p256 = scmp.eq.s32.totalorder %s36, 0
      %p257 = por %p255, %p256
      %s259 = sadd.s32 %s258, 1
      %p262 = scmp.eq.s32.totalorder %s30, 1
      %p263 = scmp.ne.s32.totalorder %s258, %s260
      %p264 = scmp.eq.s32.totalorder %s30, 0
      %p265 = por %p263, %p264
      %p266 = scmp.ne.s32.totalorder %s258, %s260
      %p267 = scmp.eq.s32.totalorder %s35, 1
      %p268 = por %p266, %p267
      %p269 = scmp.ne.s32.totalorder %s260, %s261
      %p270 = scmp.eq.s32.totalorder %s35, 0
      %p271 = por %p269, %p270
      %p272 = scmp.ne.s32.totalorder %s260, %s261
      %p273 = scmp.eq.s32.totalorder %s36, 1
      %p274 = por %p272, %p273
      %p276 = scmp.ne.s32.totalorder %s261, %s275
      %p277 = scmp.eq.s32.totalorder %s36, 0
      %p278 = por %p276, %p277
      %s280 = sadd.s32 %s279, 1
      %p283 = scmp.eq.s32.totalorder %s30, 1
      %p284 = scmp.ne.s32.totalorder %s279, %s281
      %p285 = scmp.eq.s32.totalorder %s30, 0
      %p286 = por %p284, %p285
      %p287 = scmp.ne.s32.totalorder %s279, %s281
      %p288 = scmp.eq.s32.totalorder %s35, 1
      %p289 = por %p287, %p288
      %p290 = scmp.ne.s32.totalorder %s281, %s282
      %p291 = scmp.eq.s32.totalorder %s35, 0
      %p292 = por %p290, %p291
      %p293 = scmp.ne.s32.totalorder %s281, %s282
      %p294 = scmp.eq.s32.totalorder %s36, 1
      %p295 = por %p293, %p294
      %p297 = scmp.ne.s32.totalorder %s282, %s296
      %p298 = scmp.eq.s32.totalorder %s36, 0
      %p299 = por %p297, %p298
      %s301 = sadd.s32 %s300, 1
      %p304 = scmp.eq.s32.totalorder %s30, 1
      %p305 = scmp.ne.s32.totalorder %s300, %s302
      %p306 = scmp.eq.s32.totalorder %s30, 0
      %p307 = por %p305, %p306
      %p308 = scmp.ne.s32.totalorder %s300, %s302
      %p309 = scmp.eq.s32.totalorder %s35, 1
      %p310 = por %p308, %p309
      %p311 = scmp.ne.s32.totalorder %s302, %s303
      %p312 = scmp.eq.s32.totalorder %s35, 0
      %p313 = por %p311, %p312
      %p314 = scmp.ne.s32.totalorder %s302, %s303
      %p315 = scmp.eq.s32.totalorder %s36, 1
      %p316 = por %p314, %p315
      %p318 = scmp.ne.s32.totalorder %s303, %s317
      %p319 = scmp.eq.s32.totalorder %s36, 0
      %p320 = por %p318, %p319
      %s322 = sadd.s32 %s321, 1
      %p325 = scmp.eq.s32.totalorder %s30, 1
      %p326 = scmp.ne.s32.totalorder %s321, %s323
      %p327 = scmp.eq.s32.totalorder %s30, 0
      %p328 = por %p326, %p327
      %p329 = scmp.ne.s32.totalorder %s321, %s323
      %p330 = scmp.eq.s32.totalorder %s35, 1
      %p331 = por %p329, %p330
      %p332 = scmp.ne.s32.totalorder %s323, %s324
      %p333 = scmp.eq.s32.totalorder %s35, 0
      %p334 = por %p332, %p333
      %p335 = scmp.ne.s32.totalorder %s323, %s324
      %p336 = scmp.eq.s32.totalorder %s36, 1
      %p337 = por %p335, %p336
      %p339 = scmp.ne.s32.totalorder %s324, %s338
      %p340 = scmp.eq.s32.totalorder %s36, 0
      %p341 = por %p339, %p340
      %s343 = sadd.s32 %s342, 1
      %p346 = scmp.eq.s32.totalorder %s30, 1
      %p347 = scmp.ne.s32.totalorder %s342, %s344
      %p348 = scmp.eq.s32.totalorder %s30, 0
      %p349 = por %p347, %p348
      %p350 = scmp.ne.s32.totalorder %s342, %s344
      %p351 = scmp.eq.s32.totalorder %s35, 1
      %p352 = por %p350, %p351
      %p353 = scmp.ne.s32.totalorder %s344, %s345
      %p354 = scmp.eq.s32.totalorder %s35, 0
      %p355 = por %p353, %p354
      %p356 = scmp.ne.s32.totalorder %s344, %s345
      %p357 = scmp.eq.s32.totalorder %s36, 1
      %p358 = por %p356, %p357
      %p360 = scmp.ne.s32.totalorder %s345, %s359
      %p361 = scmp.eq.s32.totalorder %s36, 0
      %p362 = por %p360, %p361
      %s364 = sadd.s32 %s363, 1
      %p367 = scmp.eq.s32.totalorder %s30, 1
      %p368 = scmp.ne.s32.totalorder %s363, %s365
      %p369 = scmp.eq.s32.totalorder %s30, 0
      %p370 = por %p368, %p369
      %p371 = scmp.ne.s32.totalorder %s363, %s365
      %p372 = scmp.eq.s32.totalorder %s35, 1
      %p373 = por %p371, %p372
      %p374 = scmp.ne.s32.totalorder %s365, %s366
      %p375 = scmp.eq.s32.totalorder %s35, 0
      %p376 = por %p374, %p375
      %p377 = scmp.ne.s32.totalorder %s365, %s366
      %p378 = scmp.eq.s32.totalorder %s36, 1
      %p379 = por %p377, %p378
      %p381 = scmp.ne.s32.totalorder %s366, %s380
      %p382 = scmp.eq.s32.totalorder %s36, 0
      %p383 = por %p381, %p382
      %s385 = sadd.s32 %s384, 1
      %p388 = scmp.eq.s32.totalorder %s30, 1
      %p389 = scmp.ne.s32.totalorder %s384, %s386
      %p390 = scmp.eq.s32.totalorder %s30, 0
      %p391 = por %p389, %p390
      %p392 = scmp.ne.s32.totalorder %s384, %s386
      %p393 = scmp.eq.s32.totalorder %s35, 1
      %p394 = por %p392, %p393
      %p395 = scmp.ne.s32.totalorder %s386, %s387
      %p396 = scmp.eq.s32.totalorder %s35, 0
      %p397 = por %p395, %p396
      %p398 = scmp.ne.s32.totalorder %s386, %s387
      %p399 = scmp.eq.s32.totalorder %s36, 1
      %p400 = por %p398, %p399
      %p402 = scmp.ne.s32.totalorder %s387, %s401
      %p403 = scmp.eq.s32.totalorder %s36, 0
      %p404 = por %p402, %p403
      %s406 = sadd.s32 %s405, 1
      %p409 = scmp.eq.s32.totalorder %s30, 1
      %p410 = scmp.ne.s32.totalorder %s405, %s407
      %p411 = scmp.eq.s32.totalorder %s30, 0
      %p412 = por %p410, %p411
      %p413 = scmp.ne.s32.totalorder %s405, %s407
      %p414 = scmp.eq.s32.totalorder %s35, 1
      %p415 = por %p413, %p414
      %p416 = scmp.ne.s32.totalorder %s407, %s408
      %p417 = scmp.eq.s32.totalorder %s35, 0
      %p418 = por %p416, %p417
      %p419 = scmp.ne.s32.totalorder %s407, %s408
      %p420 = scmp.eq.s32.totalorder %s36, 1
      %p421 = por %p419, %p420
      %p423 = scmp.ne.s32.totalorder %s408, %s422
      %p424 = scmp.eq.s32.totalorder %s36, 0
      %p425 = por %p423, %p424
      %s426 = ssub.s32 %s30, %s37
      %p427 = scmp.eq.s32.totalorder %s426, 0
      %s429 = sadd.s32 %s428, 1
      %s430 = scalar_select %p427, %s428, %s429
      %p433 = pneg %p427
      %p434 = scmp.eq.s32.totalorder %s30, 1
      %p435 = por %p433, %p434
      %p436 = scmp.ne.s32.totalorder %s428, %s431
      %p437 = scmp.eq.s32.totalorder %s30, 0
      %p438 = por %p436, %p437
      %p439 = scmp.ne.s32.totalorder %s428, %s431
      %p440 = scmp.eq.s32.totalorder %s35, 1
      %p441 = por %p439, %p440
      %p442 = scmp.ne.s32.totalorder %s431, %s432
      %p443 = scmp.eq.s32.totalorder %s35, 0
      %p444 = por %p442, %p443
      %p445 = scmp.ne.s32.totalorder %s431, %s432
      %p446 = scmp.eq.s32.totalorder %s36, 1
      %p447 = por %p445, %p446
      %p449 = scmp.ne.s32.totalorder %s432, %s448
      %p450 = scmp.eq.s32.totalorder %s36, 0
      %p451 = por %p449, %p450
      %p452 = scmp.le.s32.totalorder 1, %s30
      %p453 = scmp.lt.s32.totalorder %s30, 3
      %p454 = pnand %p452, %p453
      %p455 = pneg %p454
      // Predicated region
      $region9: #{tpu_custom_call.1} parent=5 // pred_check
        _
      $region10: #{tpu_custom_call.1} parent=5 // pred_check_branch
        %457 = sbr.rel (%p454) target = $region12
      $region11: #{tpu_custom_call.1} parent=5 // pred_region
        %s458 = ssub.s32 %s30, 1
        // Predicated region
        $region13: #{tpu_custom_call.1} parent=11 // pred_check
          %p459 = pneg %p103
        $region14: #{tpu_custom_call.1} parent=11 // pred_check_branch
          %461 = sbr.rel (%p459) target = $region16
        $region15: #{tpu_custom_call.1} parent=11 // pred_region
          %s463 = ssub.s32 16, 16
          %464 = vsyncadd [#allocation3], %s463
          %s466 = sshll.u32 [#allocation2], 4
          %s467 = int_to_ptr.vmem [resolvable:$true] %s466
          %469 = dma.hbm_to_vmem [thread:$0]  %s2, 16, %s467, [#allocation3]
        $region16: #{tpu_custom_call.1} parent=11 // pred_fallthru
          _
        // Predicated region
        $region17: #{tpu_custom_call.1} parent=11 // pred_check
          %p470 = pneg %p124
        $region18: #{tpu_custom_call.1} parent=11 // pred_check_branch
          %472 = sbr.rel (%p470) target = $region20
        $region19: #{tpu_custom_call.1} parent=11 // pred_region
          %s474 = ssub.s32 16, 16
          %475 = vsyncadd [#allocation6], %s474
          %s477 = sshll.u32 [#allocation5], 4
          %s478 = int_to_ptr.vmem [resolvable:$true] %s477
          %480 = dma.hbm_to_vmem [thread:$0]  %s3, 16, %s478, [#allocation6]
        $region20: #{tpu_custom_call.1} parent=11 // pred_fallthru
          _
        // Predicated region
        $region21: #{tpu_custom_call.1} parent=11 // pred_check
          %p481 = pneg %p145
        $region22: #{tpu_custom_call.1} parent=11 // pred_check_branch
          %483 = sbr.rel (%p481) target = $region24
        $region23: #{tpu_custom_call.1} parent=11 // pred_region
          _
        $region24: #{tpu_custom_call.1} parent=11 // pred_fallthru
          _
        // Predicated region
        $region25: #{tpu_custom_call.1} parent=11 // pred_check
          %p484 = pneg %p166
        $region26: #{tpu_custom_call.1} parent=11 // pred_check_branch
          %486 = sbr.rel (%p484) target = $region28
        $region27: #{tpu_custom_call.1} parent=11 // pred_region
          %s488 = ssub.s32 16, 16
          %489 = vsyncadd [#allocation6], %s488
          %s491 = sshll.u32 [#allocation7], 4
          %s492 = int_to_ptr.vmem [resolvable:$true] %s491
          %494 = dma.hbm_to_vmem [thread:$0]  %s5, 16, %s492, [#allocation6]
        $region28: #{tpu_custom_call.1} parent=11 // pred_fallthru
          _
        // Predicated region
        $region29: #{tpu_custom_call.1} parent=11 // pred_check
          %p495 = pneg %p187
        $region30: #{tpu_custom_call.1} parent=11 // pred_check_branch
          %497 = sbr.rel (%p495) target = $region32
        $region31: #{tpu_custom_call.1} parent=11 // pred_region
          _
        $region32: #{tpu_custom_call.1} parent=11 // pred_fallthru
          _
        // Predicated region
        $region33: #{tpu_custom_call.1} parent=11 // pred_check
          %p498 = pneg %p208
        $region34: #{tpu_custom_call.1} parent=11 // pred_check_branch
          %500 = sbr.rel (%p498) target = $region36
        $region35: #{tpu_custom_call.1} parent=11 // pred_region
          %s502 = ssub.s32 16, 16
          %503 = vsyncadd [#allocation9], %s502
          %s505 = sshll.u32 [#allocation8], 4
          %s506 = int_to_ptr.vmem [resolvable:$true] %s505
          %508 = dma.hbm_to_vmem [thread:$0]  %s7, 16, %s506, [#allocation9]
        $region36: #{tpu_custom_call.1} parent=11 // pred_fallthru
          _
        // Predicated region
        $region37: #{tpu_custom_call.1} parent=11 // pred_check
          %p509 = pneg %p229
        $region38: #{tpu_custom_call.1} parent=11 // pred_check_branch
          %511 = sbr.rel (%p509) target = $region40
        $region39: #{tpu_custom_call.1} parent=11 // pred_region
          _
        $region40: #{tpu_custom_call.1} parent=11 // pred_fallthru
          _
        // Predicated region
        $region41: #{tpu_custom_call.1} parent=11 // pred_check
          %p512 = pneg %p250
        $region42: #{tpu_custom_call.1} parent=11 // pred_check_branch
          %514 = sbr.rel (%p512) target = $region44
        $region43: #{tpu_custom_call.1} parent=11 // pred_region
          %s516 = ssub.s32 16, 16
          %517 = vsyncadd [#allocation9], %s516
          %s519 = sshll.u32 [#allocation10], 4
          %s520 = int_to_ptr.vmem [resolvable:$true] %s519
          %522 = dma.hbm_to_vmem [thread:$0]  %s9, 16, %s520, [#allocation9]
        $region44: #{tpu_custom_call.1} parent=11 // pred_fallthru
          _
        // Predicated region
        $region45: #{tpu_custom_call.1} parent=11 // pred_check
          %p523 = pneg %p271
        $region46: #{tpu_custom_call.1} parent=11 // pred_check_branch
          %525 = sbr.rel (%p523) target = $region48
        $region47: #{tpu_custom_call.1} parent=11 // pred_region
          _
        $region48: #{tpu_custom_call.1} parent=11 // pred_fallthru
          _
        // Predicated region
        $region49: #{tpu_custom_call.1} parent=11 // pred_check
          %p526 = pneg %p292
        $region50: #{tpu_custom_call.1} parent=11 // pred_check_branch
          %528 = sbr.rel (%p526) target = $region52
        $region51: #{tpu_custom_call.1} parent=11 // pred_region
          _
        $region52: #{tpu_custom_call.1} parent=11 // pred_fallthru
          _
        // Predicated region
        $region53: #{tpu_custom_call.1} parent=11 // pred_check
          %p529 = pneg %p313
        $region54: #{tpu_custom_call.1} parent=11 // pred_check_branch
          %531 = sbr.rel (%p529) target = $region56
        $region55: #{tpu_custom_call.1} parent=11 // pred_region
          _
        $region56: #{tpu_custom_call.1} parent=11 // pred_fallthru
          _
        // Predicated region
        $region57: #{tpu_custom_call.1} parent=11 // pred_check
          %p532 = pneg %p334
        $region58: #{tpu_custom_call.1} parent=11 // pred_check_branch
          %534 = sbr.rel (%p532) target = $region60
        $region59: #{tpu_custom_call.1} parent=11 // pred_region
          _
        $region60: #{tpu_custom_call.1} parent=11 // pred_fallthru
          _
        // Predicated region
        $region61: #{tpu_custom_call.1} parent=11 // pred_check
          %p535 = pneg %p355
        $region62: #{tpu_custom_call.1} parent=11 // pred_check_branch
          %537 = sbr.rel (%p535) target = $region64
        $region63: #{tpu_custom_call.1} parent=11 // pred_region
          _
        $region64: #{tpu_custom_call.1} parent=11 // pred_fallthru
          _
        // Predicated region
        $region65: #{tpu_custom_call.1} parent=11 // pred_check
          %p538 = pneg %p376
        $region66: #{tpu_custom_call.1} parent=11 // pred_check_branch
          %540 = sbr.rel (%p538) target = $region68
        $region67: #{tpu_custom_call.1} parent=11 // pred_region
          _
        $region68: #{tpu_custom_call.1} parent=11 // pred_fallthru
          _
        // Predicated region
        $region69: #{tpu_custom_call.1} parent=11 // pred_check
          %p541 = pneg %p397
        $region70: #{tpu_custom_call.1} parent=11 // pred_check_branch
          %543 = sbr.rel (%p541) target = $region72
        $region71: #{tpu_custom_call.1} parent=11 // pred_region
          _
        $region72: #{tpu_custom_call.1} parent=11 // pred_fallthru
          _
        // Predicated region
        $region73: #{tpu_custom_call.1} parent=11 // pred_check
          %p544 = pneg %p418
        $region74: #{tpu_custom_call.1} parent=11 // pred_check_branch
          %546 = sbr.rel (%p544) target = $region76
        $region75: #{tpu_custom_call.1} parent=11 // pred_region
          _
        $region76: #{tpu_custom_call.1} parent=11 // pred_fallthru
          _
      $region12: #{tpu_custom_call.1} parent=5 // pred_fallthru
        _
      %p547 = scmp.lt.s32.totalorder %s30, 2
      // Predicated region
      $region77: #{tpu_custom_call.1} parent=5 // pred_check
        %p548 = pneg %p547
      $region78: #{tpu_custom_call.1} parent=5 // pred_check_branch
        %550 = sbr.rel (%p548) target = $region80
      $region79: #{tpu_custom_call.1} parent=5 // pred_region
        // Predicated region
        $region81: #{tpu_custom_call.1} parent=79 // pred_check
          %p551 = pneg %p50
        $region82: #{tpu_custom_call.1} parent=79 // pred_check_branch
          %553 = sbr.rel (%p551) target = $region84
        $region83: #{tpu_custom_call.1} parent=79 // pred_region
          %p554 = scmp.lt.s32.totalorder %s30, 1
          %s555 = scalar_select %p554, %s30, 1
          %s556 = smul.addr %s555, 8
          %s557 = scalar_lea.vmem %s0, %s556
        $region84: #{tpu_custom_call.1} parent=79 // pred_fallthru
          _
        // Predicated region
        $region85: #{tpu_custom_call.1} parent=79 // pred_check
          %p558 = pneg %p76
        $region86: #{tpu_custom_call.1} parent=79 // pred_check_branch
          %560 = sbr.rel (%p558) target = $region88
        $region87: #{tpu_custom_call.1} parent=79 // pred_region
          %p561 = scmp.lt.s32.totalorder %s30, 1
          %s562 = scalar_select %p561, %s30, 1
          %s563 = scalar_lea.vmem %s1, %s562
        $region88: #{tpu_custom_call.1} parent=79 // pred_fallthru
          _
      $region80: #{tpu_custom_call.1} parent=5 // pred_fallthru
        _
      %p564 = scmp.le.s32.totalorder 1, %s30
      %p565 = scmp.lt.s32.totalorder %s30, 3
      %p566 = pnand %p564, %p565
      %p567 = pneg %p566
      // Predicated region
      $region89: #{tpu_custom_call.1} parent=5 // pred_check
        _
      $region90: #{tpu_custom_call.1} parent=5 // pred_check_branch
        %569 = sbr.rel (%p566) target = $region92
      $region91: #{tpu_custom_call.1} parent=5 // pred_region
        %s570 = ssub.s32 %s30, 1
        // Predicated region
        $region93: #{tpu_custom_call.1} parent=91 // pred_check
          %p571 = pneg %p103
        $region94: #{tpu_custom_call.1} parent=91 // pred_check_branch
          %573 = sbr.rel (%p571) target = $region96
        $region95: #{tpu_custom_call.1} parent=91 // pred_region
          %574 = dma.done [#allocation3], 16
        $region96: #{tpu_custom_call.1} parent=91 // pred_fallthru
          _
        // Predicated region
        $region97: #{tpu_custom_call.1} parent=91 // pred_check
          %p575 = pneg %p124
        $region98: #{tpu_custom_call.1} parent=91 // pred_check_branch
          %577 = sbr.rel (%p575) target = $region100
        $region99: #{tpu_custom_call.1} parent=91 // pred_region
          %578 = dma.done [#allocation6], 16
        $region100: #{tpu_custom_call.1} parent=91 // pred_fallthru
          _
        // Predicated region
        $region101: #{tpu_custom_call.1} parent=91 // pred_check
          %p579 = pneg %p166
        $region102: #{tpu_custom_call.1} parent=91 // pred_check_branch
          %581 = sbr.rel (%p579) target = $region104
        $region103: #{tpu_custom_call.1} parent=91 // pred_region
          %582 = dma.done [#allocation6], 16
        $region104: #{tpu_custom_call.1} parent=91 // pred_fallthru
          _
        // Predicated region
        $region105: #{tpu_custom_call.1} parent=91 // pred_check
          %p583 = pneg %p208
        $region106: #{tpu_custom_call.1} parent=91 // pred_check_branch
          %585 = sbr.rel (%p583) target = $region108
        $region107: #{tpu_custom_call.1} parent=91 // pred_region
          %586 = dma.done [#allocation9], 16
        $region108: #{tpu_custom_call.1} parent=91 // pred_fallthru
          _
        // Predicated region
        $region109: #{tpu_custom_call.1} parent=91 // pred_check
          %p587 = pneg %p250
        $region110: #{tpu_custom_call.1} parent=91 // pred_check_branch
          %589 = sbr.rel (%p587) target = $region112
        $region111: #{tpu_custom_call.1} parent=91 // pred_region
          %590 = dma.done [#allocation9], 16
        $region112: #{tpu_custom_call.1} parent=91 // pred_fallthru
          _
        %p591 = scmp.lt.s32.totalorder %s35, 1
        %s592 = scalar_select %p591, %s35, 1
        %s593 = smul.addr %s592, 8
        %s594 = scalar_lea.vmem %s0, %s593
        %p595 = pneg %p56
        %p596 = pneg %p53
        %p597 = scmp.lt.s32.totalorder %s35, 1
        %s598 = scalar_select %p597, %s35, 1
        %s599 = scalar_lea.vmem %s1, %s598
        %p600 = pneg %p82
        %p601 = pneg %p79
        %p602 = pneg %p103
        %p603 = pneg %p100
        %p604 = pneg %p124
        %p605 = pneg %p121
        %p606 = pneg %p145
        %p607 = pneg %p142
        %p608 = pneg %p166
        %p609 = pneg %p163
        %p610 = pneg %p187
        %p611 = pneg %p184
        %p612 = pneg %p208
        %p613 = pneg %p205
        %p614 = pneg %p229
        %p615 = pneg %p226
        %p616 = pneg %p250
        %p617 = pneg %p247
        %p618 = pneg %p271
        %p619 = pneg %p268
        %p620 = pneg %p292
        %p621 = pneg %p289
        %p622 = pneg %p313
        %p623 = pneg %p310
        %p624 = pneg %p334
        %p625 = pneg %p331
        %p626 = pneg %p355
        %p627 = pneg %p352
        %p628 = pneg %p376
        %p629 = pneg %p373
        %p630 = pneg %p397
        %p631 = pneg %p394
        %p632 = pneg %p418
        %p633 = pneg %p415
        %p634 = pneg %p444
        %p635 = pneg %p441
        %s636 = sand.u32 %s431, 1
        %s637 = scalar_lea.sflag [#allocation4], %s636
        %s638 = sand.u32 %s431, 1
        %s639 = smul.addr %s638, 8
        %s640 = scalar_lea.vmem [#allocation11], %s639
        %p641 = scmp.lt.s32.totalorder %s35, 1
        %s642 = scalar_select %p641, %s35, 1
        %s643 = smul.addr %s642, 8
        %s644 = scalar_lea.vmem %s0, %s643
        %p645 = scmp.lt.s32.totalorder %s35, 1
        %s646 = scalar_select %p645, %s35, 1
        %s647 = scalar_lea.vmem %s1, %s646
        %v649 = vld [vmem:[%s644] sm:$0xff]
        %v650 = vld [vmem:[%s647] sm:$0x1]
        %vm651 = vcmp.gt.f32.partialorder %v650, 0.0
        %v652 = vsel %vm651, 0.0, -1e+09
        %v654 = vlaneseq
        %v655 = vshrl.u32 %v654, 7
        %v656 = vsub.s32 0, %v655
        %v657 = vrot.slane %v652, %v656
        %v659 = vld [vmem:[#allocation2] sm:$0x1]
        %v660 = vld [vmem:[#allocation5] sm:$0x1]
        %vm661 = vcmask 261120
        %v662 = vsel %vm661, %v649, 0.0
        %663 = vadd.xlane.f32.xlu0 %v662
        %v664 = vpop.xlane.xlu0 %663
        %v665 = vrcp.pop 32.0
        %v666 = vmul.f32 %v664, %v665
        %v667 = vsub.f32 %v649, %v666
        %v668 = vmul.f32 %v667, %v667
        %v669 = vsel %vm661, %v668, 0.0
        %670 = vadd.xlane.f32.xlu0 %v669
        %v671 = vpop.xlane.xlu0 %670
        %v672 = vmul.f32 %v671, %v665
        %v673 = vadd.f32 %v672, 1e-05
        %v674 = vrsqrt.pop %v673
        %v675 = vmul.f32 %v667, %v674
        %v677 = vlaneseq
        %v678 = vshrl.u32 %v677, 7
        %v679 = vsub.s32 0, %v678
        %v680 = vrot.slane %v659, %v679
        %v682 = vmul.f32 %v675, %v680
        %v684 = vlaneseq
        %v685 = vshrl.u32 %v684, 7
        %v686 = vsub.s32 0, %v685
        %v687 = vrot.slane %v660, %v686
        %v689 = vadd.f32 %v682, %v687
        %v690 = vpack.c.bf16 %v689, %v689
        %v691 = vld [vmem:[%s4] sm:$0xf]
        %v692 = vld [vmem:[%s4 + $0x4] sm:$0xf]
        %v693 = vld [vmem:[%s4 + $0x8] sm:$0xf]
        %v694 = vld [vmem:[%s4 + $0xc] sm:$0xf]
        %v695 = vld [vmem:[#allocation7] sm:$0x1]
        %v697 = vlaneseq
        %v698 = vshrl.u32 %v697, 7
        %v699 = vsub.s32 0, %v698
        %v700 = vrot.slane %v695, %v699
        %v706 = vunpack.c.l.b16 %v691
        %v707 = vunpack.c.l.b16 %v692
        %v708 = vunpack.c.l.b16 %v693
        %v709 = vunpack.c.l.b16 %v694
        %v710 = vpack.c.b16 %v707, %v706
        %v711 = vpack.c.b16 %v709, %v708
        %v715 = vsel %vm661, %v690, 0
        %717 = vmatprep.subr.bf16.mxu0 0
        %718 = vmatpush1.bf16.msra.mxu0 %v710
        %719 = vmatprep.subr.bf16.mxu0 0
        %720 = vmatpush1.bf16.msra.mxu0 %v711
        %721 = vmatprep.subr.bf16.mxu0 0
        %722 = vmatpush1.bf16.msra.mxu0 0
        %723 = vmatprep.subr.bf16.mxu0 0
        %724 = vmatpush1.bf16.msra.mxu0 0
        %725 = vmatprep.subr.bf16.mxu0 0
        %726 = vmatpush1.bf16.msra.mxu0 0
        %727 = vmatprep.subr.bf16.mxu0 0
        %728 = vmatpush1.bf16.msra.mxu0 0
        %729 = vmatprep.subr.bf16.mxu0 0
        %730 = vmatpush1.bf16.msra.mxu0 0
        %731 = vmatprep.subr.bf16.mxu0 0
        %732 = vmatpush1.bf16.msra.mxu0 0
        %733 = vmatprep.subr.bf16.mxu0 0
        %734 = vmatpush1.bf16.msra.mxu0 0
        %735 = vmatprep.subr.bf16.mxu0 0
        %736 = vmatpush1.bf16.msra.mxu0 0
        %737 = vmatprep.subr.bf16.mxu0 0
        %738 = vmatpush1.bf16.msra.mxu0 0
        %739 = vmatprep.subr.bf16.mxu0 0
        %740 = vmatpush1.bf16.msra.mxu0 0
        %741 = vmatprep.subr.bf16.mxu0 0
        %742 = vmatpush1.bf16.msra.mxu0 0
        %743 = vmatprep.subr.bf16.mxu0 0
        %744 = vmatpush1.bf16.msra.mxu0 0
        %745 = vmatprep.subr.bf16.mxu0 0
        %746 = vmatpush1.bf16.msra.mxu0 0
        %747 = vmatprep.subr.bf16.mxu0 0
        %748 = vmatpush1.bf16.msra.mxu0 0
        %749 = vmatprep.mubr.bf16.mxu0 0
        %750 = vmatmul.mubr.bf16.gmra.mrb[0].mxu0 %v715
        %v751 = vpop.f32.mrb[0].mxu0
        %v752 = vadd.f32 %v700, %v751
        %v753 = vpop.f32.mrb[0].mxu0
        %v754 = vpop.f32.mrb[0].mxu0
        %v755 = vpop.f32.mrb[0].mxu0
        %756 = vdwg.mxu0
        %v757 = vld [vmem:[%s6] sm:$0xf]
        %v758 = vld [vmem:[%s6 + $0x4] sm:$0xf]
        %v759 = vld [vmem:[%s6 + $0x8] sm:$0xf]
        %v760 = vld [vmem:[%s6 + $0xc] sm:$0xf]
        %v761 = vld [vmem:[#allocation8] sm:$0x1]
        %v763 = vlaneseq
        %v764 = vshrl.u32 %v763, 7
        %v765 = vsub.s32 0, %v764
        %v766 = vrot.slane %v761, %v765
        %v772 = vunpack.c.l.b16 %v757
        %v773 = vunpack.c.l.b16 %v758
        %v774 = vunpack.c.l.b16 %v759
        %v775 = vunpack.c.l.b16 %v760
        %v776 = vpack.c.b16 %v773, %v772
        %v777 = vpack.c.b16 %v775, %v774
        %780 = vmatprep.subr.bf16.mxu0 0
        %781 = vmatpush1.bf16.msra.mxu0 %v776
        %782 = vmatprep.subr.bf16.mxu0 0
        %783 = vmatpush1.bf16.msra.mxu0 %v777
        %784 = vmatprep.subr.bf16.mxu0 0
        %785 = vmatpush1.bf16.msra.mxu0 0
        %786 = vmatprep.subr.bf16.mxu0 0
        %787 = vmatpush1.bf16.msra.mxu0 0
        %788 = vmatprep.subr.bf16.mxu0 0
        %789 = vmatpush1.bf16.msra.mxu0 0
        %790 = vmatprep.subr.bf16.mxu0 0
        %791 = vmatpush1.bf16.msra.mxu0 0
        %792 = vmatprep.subr.bf16.mxu0 0
        %793 = vmatpush1.bf16.msra.mxu0 0
        %794 = vmatprep.subr.bf16.mxu0 0
        %795 = vmatpush1.bf16.msra.mxu0 0
        %796 = vmatprep.subr.bf16.mxu0 0
        %797 = vmatpush1.bf16.msra.mxu0 0
        %798 = vmatprep.subr.bf16.mxu0 0
        %799 = vmatpush1.bf16.msra.mxu0 0
        %800 = vmatprep.subr.bf16.mxu0 0
        %801 = vmatpush1.bf16.msra.mxu0 0
        %802 = vmatprep.subr.bf16.mxu0 0
        %803 = vmatpush1.bf16.msra.mxu0 0
        %804 = vmatprep.subr.bf16.mxu0 0
        %805 = vmatpush1.bf16.msra.mxu0 0
        %806 = vmatprep.subr.bf16.mxu0 0
        %807 = vmatpush1.bf16.msra.mxu0 0
        %808 = vmatprep.subr.bf16.mxu0 0
        %809 = vmatpush1.bf16.msra.mxu0 0
        %810 = vmatprep.subr.bf16.mxu0 0
        %811 = vmatpush1.bf16.msra.mxu0 0
        %812 = vmatprep.mubr.bf16.mxu0 0
        %813 = vmatmul.mubr.bf16.gmra.mrb[0].mxu0 %v715
        %v814 = vpop.f32.mrb[0].mxu0
        %v815 = vadd.f32 %v766, %v814
        %v816 = vpop.f32.mrb[0].mxu0
        %v817 = vpop.f32.mrb[0].mxu0
        %v818 = vpop.f32.mrb[0].mxu0
        %819 = vdwg.mxu0
        %v820 = vld [vmem:[%s8] sm:$0xf]
        %v821 = vld [vmem:[%s8 + $0x4] sm:$0xf]
        %v822 = vld [vmem:[%s8 + $0x8] sm:$0xf]
        %v823 = vld [vmem:[%s8 + $0xc] sm:$0xf]
        %v824 = vld [vmem:[#allocation10] sm:$0x1]
        %v826 = vlaneseq
        %v827 = vshrl.u32 %v826, 7
        %v828 = vsub.s32 0, %v827
        %v829 = vrot.slane %v824, %v828
        %v835 = vunpack.c.l.b16 %v820
        %v836 = vunpack.c.l.b16 %v821
        %v837 = vunpack.c.l.b16 %v822
        %v838 = vunpack.c.l.b16 %v823
        %v839 = vpack.c.b16 %v836, %v835
        %v840 = vpack.c.b16 %v838, %v837
        %843 = vmatprep.subr.bf16.mxu0 0
        %844 = vmatpush1.bf16.msra.mxu0 %v839
        %845 = vmatprep.subr.bf16.mxu0 0
        %846 = vmatpush1.bf16.msra.mxu0 %v840
        %847 = vmatprep.subr.bf16.mxu0 0
        %848 = vmatpush1.bf16.msra.mxu0 0
        %849 = vmatprep.subr.bf16.mxu0 0
        %850 = vmatpush1.bf16.msra.mxu0 0
        %851 = vmatprep.subr.bf16.mxu0 0
        %852 = vmatpush1.bf16.msra.mxu0 0
        %853 = vmatprep.subr.bf16.mxu0 0
        %854 = vmatpush1.bf16.msra.mxu0 0
        %855 = vmatprep.subr.bf16.mxu0 0
        %856 = vmatpush1.bf16.msra.mxu0 0
        %857 = vmatprep.subr.bf16.mxu0 0
        %858 = vmatpush1.bf16.msra.mxu0 0
        %859 = vmatprep.subr.bf16.mxu0 0
        %860 = vmatpush1.bf16.msra.mxu0 0
        %861 = vmatprep.subr.bf16.mxu0 0
        %862 = vmatpush1.bf16.msra.mxu0 0
        %863 = vmatprep.subr.bf16.mxu0 0
        %864 = vmatpush1.bf16.msra.mxu0 0
        %865 = vmatprep.subr.bf16.mxu0 0
        %866 = vmatpush1.bf16.msra.mxu0 0
        %867 = vmatprep.subr.bf16.mxu0 0
        %868 = vmatpush1.bf16.msra.mxu0 0
        %869 = vmatprep.subr.bf16.mxu0 0
        %870 = vmatpush1.bf16.msra.mxu0 0
        %871 = vmatprep.subr.bf16.mxu0 0
        %872 = vmatpush1.bf16.msra.mxu0 0
        %873 = vmatprep.subr.bf16.mxu0 0
        %874 = vmatpush1.bf16.msra.mxu0 0
        %875 = vmatprep.mubr.bf16.mxu0 0
        %876 = vmatmul.mubr.bf16.gmra.mrb[0].mxu0 %v715
        %v877 = vpop.f32.mrb[0].mxu0
        %v878 = vadd.f32 %v829, %v877
        %v879 = vpop.f32.mrb[0].mxu0
        %v880 = vpop.f32.mrb[0].mxu0
        %v881 = vpop.f32.mrb[0].mxu0
        %882 = vdwg.mxu0
        %v883 = vmul.f32 %v752, 0.35355338
        %v884 = vpack.c.bf16 %v883, %v883
        %v885 = vpack.c.bf16 %v815, %v815
        %v886 = vpack.c.bf16 %v878, %v878
        %vm887 = vcmask 64512
        %v889 = vsel %vm887, %v884, 0
        %v892 = vsel %vm887, %v885, 0
        %894 = vmatprep.subr.bf16.mxu0 0
        %895 = vmatpush1.bf16.xpose.msra.mxu0 %v892
        %896 = vmatprep.subr.bf16.mxu0 0
        %897 = vmatpush1.bf16.xpose.msra.mxu0 0
        %898 = vmatprep.subr.bf16.mxu0 0
        %899 = vmatpush1.bf16.xpose.msra.mxu0 0
        %900 = vmatprep.subr.bf16.mxu0 0
        %901 = vmatpush1.bf16.xpose.msra.mxu0 0
        %902 = vmatprep.subr.bf16.mxu0 0
        %903 = vmatpush1.bf16.xpose.msra.mxu0 0
        %904 = vmatprep.subr.bf16.mxu0 0
        %905 = vmatpush1.bf16.xpose.msra.mxu0 0
        %906 = vmatprep.subr.bf16.mxu0 0
        %907 = vmatpush1.bf16.xpose.msra.mxu0 0
        %908 = vmatprep.subr.bf16.mxu0 0
        %909 = vmatpush1.bf16.xpose.msra.mxu0 0
        %910 = vmatprep.subr.bf16.mxu0 0
        %911 = vmatpush1.bf16.xpose.msra.mxu0 0
        %912 = vmatprep.subr.bf16.mxu0 0
        %913 = vmatpush1.bf16.xpose.msra.mxu0 0
        %914 = vmatprep.subr.bf16.mxu0 0
        %915 = vmatpush1.bf16.xpose.msra.mxu0 0
        %916 = vmatprep.subr.bf16.mxu0 0
        %917 = vmatpush1.bf16.xpose.msra.mxu0 0
        %918 = vmatprep.subr.bf16.mxu0 0
        %919 = vmatpush1.bf16.xpose.msra.mxu0 0
        %920 = vmatprep.subr.bf16.mxu0 0
        %921 = vmatpush1.bf16.xpose.msra.mxu0 0
        %922 = vmatprep.subr.bf16.mxu0 0
        %923 = vmatpush1.bf16.xpose.msra.mxu0 0
        %924 = vmatprep.subr.bf16.mxu0 0
        %925 = vmatpush1.bf16.xpose.msra.mxu0 0
        %926 = vmatprep.mubr.bf16.mxu0 0
        %927 = vmatmul.mubr.bf16.gmra.mrb[0].mxu0 %v889
        %v928 = vpop.f32.mrb[0].mxu0
        %v929 = vadd.f32 %v657, %v928
        %v930 = vpop.f32.mrb[0].mxu0
        %v931 = vpop.f32.mrb[0].mxu0
        %v932 = vpop.f32.mrb[0].mxu0
        %933 = vdwg.mxu0
        %v934 = vsel %vm887, %v929, -inf
        %935 = vmax.xlane.f32.xlu0 %v934
        %v936 = vpop.xlane.xlu0 %935
        %v937 = vsub.f32 %v929, %v936
        %v938 = vmul.f32 %v937, 1.442695
        %v939 = vpow.pop %v938
        %v940 = vsel %vm887, %v939, 0.0
        %941 = vadd.xlane.f32.xlu0 %v940
        %v942 = vpop.xlane.xlu0 %941
        %v943 = vrcp.pop %v942
        %v944 = vpack.c.bf16 %v939, %v939
        %v946 = vsel %vm887, %v944, 0
        %vm948 = vcmask 1043456
        %v950 = vsel %vm948, %v886, 0
        %952 = vmatprep.subr.bf16.mxu0 0
        %953 = vmatpush1.bf16.msra.mxu0 %v950
        %954 = vmatprep.subr.bf16.mxu0 0
        %955 = vmatpush1.bf16.msra.mxu0 0
        %956 = vmatprep.subr.bf16.mxu0 0
        %957 = vmatpush1.bf16.msra.mxu0 0
        %958 = vmatprep.subr.bf16.mxu0 0
        %959 = vmatpush1.bf16.msra.mxu0 0
        %960 = vmatprep.subr.bf16.mxu0 0
        %961 = vmatpush1.bf16.msra.mxu0 0
        %962 = vmatprep.subr.bf16.mxu0 0
        %963 = vmatpush1.bf16.msra.mxu0 0
        %964 = vmatprep.subr.bf16.mxu0 0
        %965 = vmatpush1.bf16.msra.mxu0 0
        %966 = vmatprep.subr.bf16.mxu0 0
        %967 = vmatpush1.bf16.msra.mxu0 0
        %968 = vmatprep.subr.bf16.mxu0 0
        %969 = vmatpush1.bf16.msra.mxu0 0
        %970 = vmatprep.subr.bf16.mxu0 0
        %971 = vmatpush1.bf16.msra.mxu0 0
        %972 = vmatprep.subr.bf16.mxu0 0
        %973 = vmatpush1.bf16.msra.mxu0 0
        %974 = vmatprep.subr.bf16.mxu0 0
        %975 = vmatpush1.bf16.msra.mxu0 0
        %976 = vmatprep.subr.bf16.mxu0 0
        %977 = vmatpush1.bf16.msra.mxu0 0
        %978 = vmatprep.subr.bf16.mxu0 0
        %979 = vmatpush1.bf16.msra.mxu0 0
        %980 = vmatprep.subr.bf16.mxu0 0
        %981 = vmatpush1.bf16.msra.mxu0 0
        %982 = vmatprep.subr.bf16.mxu0 0
        %983 = vmatpush1.bf16.msra.mxu0 0
        %984 = vmatprep.mubr.bf16.mxu0 0
        %985 = vmatmul.mubr.bf16.gmra.mrb[0].mxu0 %v946
        %v986 = vpop.f32.mrb[0].mxu0
        %v987 = vadd.f32 0.0, %v986
        %v988 = vpop.f32.mrb[0].mxu0
        %v989 = vpop.f32.mrb[0].mxu0
        %v990 = vpop.f32.mrb[0].mxu0
        %991 = vdwg.mxu0
        %v992 = vmul.f32 %v987, %v943
        %994 = vrot.lane.b32.xlu0 %v884, 120
        %v995 = vpop.permute.xlu0 %994
        %997 = vrot.lane.b32.xlu0 %v885, 120
        %v998 = vpop.permute.xlu0 %997
        %v1000 = vsel %vm887, %v995, 0
        %v1003 = vsel %vm887, %v998, 0
        %1005 = vmatprep.subr.bf16.mxu0 0
        %1006 = vmatpush1.bf16.xpose.msra.mxu0 %v1003
        %1007 = vmatprep.subr.bf16.mxu0 0
        %1008 = vmatpush1.bf16.xpose.msra.mxu0 0
        %1009 = vmatprep.subr.bf16.mxu0 0
        %1010 = vmatpush1.bf16.xpose.msra.mxu0 0
        %1011 = vmatprep.subr.bf16.mxu0 0
        %1012 = vmatpush1.bf16.xpose.msra.mxu0 0
        %1013 = vmatprep.subr.bf16.mxu0 0
        %1014 = vmatpush1.bf16.xpose.msra.mxu0 0
        %1015 = vmatprep.subr.bf16.mxu0 0
        %1016 = vmatpush1.bf16.xpose.msra.mxu0 0
        %1017 = vmatprep.subr.bf16.mxu0 0
        %1018 = vmatpush1.bf16.xpose.msra.mxu0 0
        %1019 = vmatprep.subr.bf16.mxu0 0
        %1020 = vmatpush1.bf16.xpose.msra.mxu0 0
        %1021 = vmatprep.subr.bf16.mxu0 0
        %1022 = vmatpush1.bf16.xpose.msra.mxu0 0
        %1023 = vmatprep.subr.bf16.mxu0 0
        %1024 = vmatpush1.bf16.xpose.msra.mxu0 0
        %1025 = vmatprep.subr.bf16.mxu0 0
        %1026 = vmatpush1.bf16.xpose.msra.mxu0 0
        %1027 = vmatprep.subr.bf16.mxu0 0
        %1028 = vmatpush1.bf16.xpose.msra.mxu0 0
        %1029 = vmatprep.subr.bf16.mxu0 0
        %1030 = vmatpush1.bf16.xpose.msra.mxu0 0
        %1031 = vmatprep.subr.bf16.mxu0 0
        %1032 = vmatpush1.bf16.xpose.msra.mxu0 0
        %1033 = vmatprep.subr.bf16.mxu0 0
        %1034 = vmatpush1.bf16.xpose.msra.mxu0 0
        %1035 = vmatprep.subr.bf16.mxu0 0
        %1036 = vmatpush1.bf16.xpose.msra.mxu0 0
        %1037 = vmatprep.mubr.bf16.mxu0 0
        %1038 = vmatmul.mubr.bf16.gmra.mrb[0].mxu0 %v1000
        %v1039 = vpop.f32.mrb[0].mxu0
        %v1040 = vadd.f32 %v657, %v1039
        %v1041 = vpop.f32.mrb[0].mxu0
        %v1042 = vpop.f32.mrb[0].mxu0
        %v1043 = vpop.f32.mrb[0].mxu0
        %1044 = vdwg.mxu0
        %v1045 = vsel %vm887, %v1040, -inf
        %1046 = vmax.xlane.f32.xlu0 %v1045
        %v1047 = vpop.xlane.xlu0 %1046
        %v1048 = vsub.f32 %v1040, %v1047
        %v1049 = vmul.f32 %v1048, 1.442695
        %v1050 = vpow.pop %v1049
        %v1051 = vsel %vm887, %v1050, 0.0
        %1052 = vadd.xlane.f32.xlu0 %v1051
        %v1053 = vpop.xlane.xlu0 %1052
        %v1054 = vrcp.pop %v1053
        %v1055 = vpack.c.bf16 %v1050, %v1050
        %1057 = vrot.lane.b32.xlu0 %v886, 120
        %v1058 = vpop.permute.xlu0 %1057
        %v1060 = vsel %vm887, %v1055, 0
        %v1063 = vsel %vm948, %v1058, 0
        %1065 = vmatprep.subr.bf16.mxu0 0
        %1066 = vmatpush1.bf16.msra.mxu0 %v1063
        %1067 = vmatprep.subr.bf16.mxu0 0
        %1068 = vmatpush1.bf16.msra.mxu0 0
        %1069 = vmatprep.subr.bf16.mxu0 0
        %1070 = vmatpush1.bf16.msra.mxu0 0
        %1071 = vmatprep.subr.bf16.mxu0 0
        %1072 = vmatpush1.bf16.msra.mxu0 0
        %1073 = vmatprep.subr.bf16.mxu0 0
        %1074 = vmatpush1.bf16.msra.mxu0 0
        %1075 = vmatprep.subr.bf16.mxu0 0
        %1076 = vmatpush1.bf16.msra.mxu0 0
        %1077 = vmatprep.subr.bf16.mxu0 0
        %1078 = vmatpush1.bf16.msra.mxu0 0
        %1079 = vmatprep.subr.bf16.mxu0 0
        %1080 = vmatpush1.bf16.msra.mxu0 0
        %1081 = vmatprep.subr.bf16.mxu0 0
        %1082 = vmatpush1.bf16.msra.mxu0 0
        %1083 = vmatprep.subr.bf16.mxu0 0
        %1084 = vmatpush1.bf16.msra.mxu0 0
        %1085 = vmatprep.subr.bf16.mxu0 0
        %1086 = vmatpush1.bf16.msra.mxu0 0
        %1087 = vmatprep.subr.bf16.mxu0 0
        %1088 = vmatpush1.bf16.msra.mxu0 0
        %1089 = vmatprep.subr.bf16.mxu0 0
        %1090 = vmatpush1.bf16.msra.mxu0 0
        %1091 = vmatprep.subr.bf16.mxu0 0
        %1092 = vmatpush1.bf16.msra.mxu0 0
        %1093 = vmatprep.subr.bf16.mxu0 0
        %1094 = vmatpush1.bf16.msra.mxu0 0
        %1095 = vmatprep.subr.bf16.mxu0 0
        %1096 = vmatpush1.bf16.msra.mxu0 0
        %1097 = vmatprep.mubr.bf16.mxu0 0
        %1098 = vmatmul.mubr.bf16.gmra.mrb[0].mxu0 %v1060
        %v1099 = vpop.f32.mrb[0].mxu0
        %v1100 = vadd.f32 0.0, %v1099
        %v1101 = vpop.f32.mrb[0].mxu0
        %v1102 = vpop.f32.mrb[0].mxu0
        %v1103 = vpop.f32.mrb[0].mxu0
        %1104 = vdwg.mxu0
        %v1105 = vmul.f32 %v1100, %v1054
        %1106 = vrot.lane.b32.xlu0 %v884, 112
        %v1107 = vpop.permute.xlu0 %1106
        %1108 = vrot.lane.b32.xlu0 %v885, 112
        %v1109 = vpop.permute.xlu0 %1108
        %v1111 = vsel %vm887, %v1107, 0
        %v1114 = vsel %vm887, %v1109, 0
        %1116 = vmatprep.subr.bf16.mxu0 0
        %1117 = vmatpush1.bf16.xpose.msra.mxu0 %v1114
        %1118 = vmatprep.subr.bf16.mxu0 0
        %1119 = vmatpush1.bf16.xpose.msra.mxu0 0
        %1120 = vmatprep.subr.bf16.mxu0 0
        %1121 = vmatpush1.bf16.xpose.msra.mxu0 0
        %1122 = vmatprep.subr.bf16.mxu0 0
        %1123 = vmatpush1.bf16.xpose.msra.mxu0 0
        %1124 = vmatprep.subr.bf16.mxu0 0
        %1125 = vmatpush1.bf16.xpose.msra.mxu0 0
        %1126 = vmatprep.subr.bf16.mxu0 0
        %1127 = vmatpush1.bf16.xpose.msra.mxu0 0
        %1128 = vmatprep.subr.bf16.mxu0 0
        %1129 = vmatpush1.bf16.xpose.msra.mxu0 0
        %1130 = vmatprep.subr.bf16.mxu0 0
        %1131 = vmatpush1.bf16.xpose.msra.mxu0 0
        %1132 = vmatprep.subr.bf16.mxu0 0
        %1133 = vmatpush1.bf16.xpose.msra.mxu0 0
        %1134 = vmatprep.subr.bf16.mxu0 0
        %1135 = vmatpush1.bf16.xpose.msra.mxu0 0
        %1136 = vmatprep.subr.bf16.mxu0 0
        %1137 = vmatpush1.bf16.xpose.msra.mxu0 0
        %1138 = vmatprep.subr.bf16.mxu0 0
        %1139 = vmatpush1.bf16.xpose.msra.mxu0 0
        %1140 = vmatprep.subr.bf16.mxu0 0
        %1141 = vmatpush1.bf16.xpose.msra.mxu0 0
        %1142 = vmatprep.subr.bf16.mxu0 0
        %1143 = vmatpush1.bf16.xpose.msra.mxu0 0
        %1144 = vmatprep.subr.bf16.mxu0 0
        %1145 = vmatpush1.bf16.xpose.msra.mxu0 0
        %1146 = vmatprep.subr.bf16.mxu0 0
        %1147 = vmatpush1.bf16.xpose.msra.mxu0 0
        %1148 = vmatprep.mubr.bf16.mxu0 0
        %1149 = vmatmul.mubr.bf16.gmra.mrb[0].mxu0 %v1111
        %v1150 = vpop.f32.mrb[0].mxu0
        %v1151 = vadd.f32 %v657, %v1150
        %v1152 = vpop.f32.mrb[0].mxu0
        %v1153 = vpop.f32.mrb[0].mxu0
        %v1154 = vpop.f32.mrb[0].mxu0
        %1155 = vdwg.mxu0
        %v1156 = vsel %vm887, %v1151, -inf
        %1157 = vmax.xlane.f32.xlu0 %v1156
        %v1158 = vpop.xlane.xlu0 %1157
        %v1159 = vsub.f32 %v1151, %v1158
        %v1160 = vmul.f32 %v1159, 1.442695
        %v1161 = vpow.pop %v1160
        %v1162 = vsel %vm887, %v1161, 0.0
        %1163 = vadd.xlane.f32.xlu0 %v1162
        %v1164 = vpop.xlane.xlu0 %1163
        %v1165 = vrcp.pop %v1164
        %v1166 = vpack.c.bf16 %v1161, %v1161
        %1167 = vrot.lane.b32.xlu0 %v886, 112
        %v1168 = vpop.permute.xlu0 %1167
        %v1170 = vsel %vm887, %v1166, 0
        %v1173 = vsel %vm948, %v1168, 0
        %1175 = vmatprep.subr.bf16.mxu0 0
        %1176 = vmatpush1.bf16.msra.mxu0 %v1173
        %1177 = vmatprep.subr.bf16.mxu0 0
        %1178 = vmatpush1.bf16.msra.mxu0 0
        %1179 = vmatprep.subr.bf16.mxu0 0
        %1180 = vmatpush1.bf16.msra.mxu0 0
        %1181 = vmatprep.subr.bf16.mxu0 0
        %1182 = vmatpush1.bf16.msra.mxu0 0
        %1183 = vmatprep.subr.bf16.mxu0 0
        %1184 = vmatpush1.bf16.msra.mxu0 0
        %1185 = vmatprep.subr.bf16.mxu0 0
        %1186 = vmatpush1.bf16.msra.mxu0 0
        %1187 = vmatprep.subr.bf16.mxu0 0
        %1188 = vmatpush1.bf16.msra.mxu0 0
        %1189 = vmatprep.subr.bf16.mxu0 0
        %1190 = vmatpush1.bf16.msra.mxu0 0
        %1191 = vmatprep.subr.bf16.mxu0 0
        %1192 = vmatpush1.bf16.msra.mxu0 0
        %1193 = vmatprep.subr.bf16.mxu0 0
        %1194 = vmatpush1.bf16.msra.mxu0 0
        %1195 = vmatprep.subr.bf16.mxu0 0
        %1196 = vmatpush1.bf16.msra.mxu0 0
        %1197 = vmatprep.subr.bf16.mxu0 0
        %1198 = vmatpush1.bf16.msra.mxu0 0
        %1199 = vmatprep.subr.bf16.mxu0 0
        %1200 = vmatpush1.bf16.msra.mxu0 0
        %1201 = vmatprep.subr.bf16.mxu0 0
        %1202 = vmatpush1.bf16.msra.mxu0 0
        %1203 = vmatprep.subr.bf16.mxu0 0
        %1204 = vmatpush1.bf16.msra.mxu0 0
        %1205 = vmatprep.subr.bf16.mxu0 0
        %1206 = vmatpush1.bf16.msra.mxu0 0
        %1207 = vmatprep.mubr.bf16.mxu0 0
        %1208 = vmatmul.mubr.bf16.gmra.mrb[0].mxu0 %v1170
        %v1209 = vpop.f32.mrb[0].mxu0
        %v1210 = vadd.f32 0.0, %v1209
        %v1211 = vpop.f32.mrb[0].mxu0
        %v1212 = vpop.f32.mrb[0].mxu0
        %v1213 = vpop.f32.mrb[0].mxu0
        %1214 = vdwg.mxu0
        %v1215 = vmul.f32 %v1210, %v1165
        %1216 = vrot.lane.b32.xlu0 %v884, 104
        %v1217 = vpop.permute.xlu0 %1216
        %1218 = vrot.lane.b32.xlu0 %v885, 104
        %v1219 = vpop.permute.xlu0 %1218
        %v1221 = vsel %vm887, %v1217, 0
        %v1224 = vsel %vm887, %v1219, 0
        %1226 = vmatprep.subr.bf16.mxu0 0
        %1227 = vmatpush1.bf16.xpose.msra.mxu0 %v1224
        %1228 = vmatprep.subr.bf16.mxu0 0
        %1229 = vmatpush1.bf16.xpose.msra.mxu0 0
        %1230 = vmatprep.subr.bf16.mxu0 0
        %1231 = vmatpush1.bf16.xpose.msra.mxu0 0
        %1232 = vmatprep.subr.bf16.mxu0 0
        %1233 = vmatpush1.bf16.xpose.msra.mxu0 0
        %1234 = vmatprep.subr.bf16.mxu0 0
        %1235 = vmatpush1.bf16.xpose.msra.mxu0 0
        %1236 = vmatprep.subr.bf16.mxu0 0
        %1237 = vmatpush1.bf16.xpose.msra.mxu0 0
        %1238 = vmatprep.subr.bf16.mxu0 0
        %1239 = vmatpush1.bf16.xpose.msra.mxu0 0
        %1240 = vmatprep.subr.bf16.mxu0 0
        %1241 = vmatpush1.bf16.xpose.msra.mxu0 0
        %1242 = vmatprep.subr.bf16.mxu0 0
        %1243 = vmatpush1.bf16.xpose.msra.mxu0 0
        %1244 = vmatprep.subr.bf16.mxu0 0
        %1245 = vmatpush1.bf16.xpose.msra.mxu0 0
        %1246 = vmatprep.subr.bf16.mxu0 0
        %1247 = vmatpush1.bf16.xpose.msra.mxu0 0
        %1248 = vmatprep.subr.bf16.mxu0 0
        %1249 = vmatpush1.bf16.xpose.msra.mxu0 0
        %1250 = vmatprep.subr.bf16.mxu0 0
        %1251 = vmatpush1.bf16.xpose.msra.mxu0 0
        %1252 = vmatprep.subr.bf16.mxu0 0
        %1253 = vmatpush1.bf16.xpose.msra.mxu0 0
        %1254 = vmatprep.subr.bf16.mxu0 0
        %1255 = vmatpush1.bf16.xpose.msra.mxu0 0
        %1256 = vmatprep.subr.bf16.mxu0 0
        %1257 = vmatpush1.bf16.xpose.msra.mxu0 0
        %1258 = vmatprep.mubr.bf16.mxu0 0
        %1259 = vmatmul.mubr.bf16.gmra.mrb[0].mxu0 %v1221
        %v1260 = vpop.f32.mrb[0].mxu0
        %v1261 = vadd.f32 %v657, %v1260
        %v1262 = vpop.f32.mrb[0].mxu0
        %v1263 = vpop.f32.mrb[0].mxu0
        %v1264 = vpop.f32.mrb[0].mxu0
        %1265 = vdwg.mxu0
        %v1266 = vsel %vm887, %v1261, -inf
        %1267 = vmax.xlane.f32.xlu0 %v1266
        %v1268 = vpop.xlane.xlu0 %1267
        %v1269 = vsub.f32 %v1261, %v1268
        %v1270 = vmul.f32 %v1269, 1.442695
        %v1271 = vpow.pop %v1270
        %v1272 = vsel %vm887, %v1271, 0.0
        %1273 = vadd.xlane.f32.xlu0 %v1272
        %v1274 = vpop.xlane.xlu0 %1273
        %v1275 = vrcp.pop %v1274
        %v1276 = vpack.c.bf16 %v1271, %v1271
        %1277 = vrot.lane.b32.xlu0 %v886, 104
        %v1278 = vpop.permute.xlu0 %1277
        %v1280 = vsel %vm887, %v1276, 0
        %v1283 = vsel %vm948, %v1278, 0
        %1285 = vmatprep.subr.bf16.mxu0 0
        %1286 = vmatpush1.bf16.msra.mxu0 %v1283
        %1287 = vmatprep.subr.bf16.mxu0 0
        %1288 = vmatpush1.bf16.msra.mxu0 0
        %1289 = vmatprep.subr.bf16.mxu0 0
        %1290 = vmatpush1.bf16.msra.mxu0 0
        %1291 = vmatprep.subr.bf16.mxu0 0
        %1292 = vmatpush1.bf16.msra.mxu0 0
        %1293 = vmatprep.subr.bf16.mxu0 0
        %1294 = vmatpush1.bf16.msra.mxu0 0
        %1295 = vmatprep.subr.bf16.mxu0 0
        %1296 = vmatpush1.bf16.msra.mxu0 0
        %1297 = vmatprep.subr.bf16.mxu0 0
        %1298 = vmatpush1.bf16.msra.mxu0 0
        %1299 = vmatprep.subr.bf16.mxu0 0
        %1300 = vmatpush1.bf16.msra.mxu0 0
        %1301 = vmatprep.subr.bf16.mxu0 0
        %1302 = vmatpush1.bf16.msra.mxu0 0
        %1303 = vmatprep.subr.bf16.mxu0 0
        %1304 = vmatpush1.bf16.msra.mxu0 0
        %1305 = vmatprep.subr.bf16.mxu0 0
        %1306 = vmatpush1.bf16.msra.mxu0 0
        %1307 = vmatprep.subr.bf16.mxu0 0
        %1308 = vmatpush1.bf16.msra.mxu0 0
        %1309 = vmatprep.subr.bf16.mxu0 0
        %1310 = vmatpush1.bf16.msra.mxu0 0
        %1311 = vmatprep.subr.bf16.mxu0 0
        %1312 = vmatpush1.bf16.msra.mxu0 0
        %1313 = vmatprep.subr.bf16.mxu0 0
        %1314 = vmatpush1.bf16.msra.mxu0 0
        %1315 = vmatprep.subr.bf16.mxu0 0
        %1316 = vmatpush1.bf16.msra.mxu0 0
        %1317 = vmatprep.mubr.bf16.mxu0 0
        %1318 = vmatmul.mubr.bf16.gmra.mrb[0].mxu0 %v1280
        %v1319 = vpop.f32.mrb[0].mxu0
        %v1320 = vadd.f32 0.0, %v1319
        %v1321 = vpop.f32.mrb[0].mxu0
        %v1322 = vpop.f32.mrb[0].mxu0
        %v1323 = vpop.f32.mrb[0].mxu0
        %1324 = vdwg.mxu0
        %v1325 = vmul.f32 %v1320, %v1275
        %1327 = vrot.lane.b32.xlu0 %v1105, 8
        %v1328 = vpop.permute.xlu0 %1327
        %1331 = vrot.lane.b32.xlu0 %v1215, 16
        %v1332 = vpop.permute.xlu0 %1331
        %1335 = vrot.lane.b32.xlu0 %v1325, 24
        %v1336 = vpop.permute.xlu0 %1335
        %v1338 = vsel %vm887, %v992, %v1328
        %vm1339 = vcmask 130048
        %v1340 = vsel %vm1339, %v1338, %v1332
        %vm1341 = vcmask 195584
        %v1342 = vsel %vm1341, %v1340, %v1336
        %v1343 = vpack.c.bf16 %v1342, %v1342
        %v1344 = vld [vmem:[%s10] sm:$0xf]
        %v1345 = vld [vmem:[%s10 + $0x4] sm:$0xf]
        %v1346 = vld [vmem:[%s10 + $0x8] sm:$0xf]
        %v1347 = vld [vmem:[%s10 + $0xc] sm:$0xf]
        %v1352 = vunpack.c.l.b16 %v1344
        %v1353 = vunpack.c.l.b16 %v1345
        %v1354 = vunpack.c.l.b16 %v1346
        %v1355 = vunpack.c.l.b16 %v1347
        %v1356 = vpack.c.b16 %v1353, %v1352
        %v1357 = vpack.c.b16 %v1355, %v1354
        %v1361 = vsel %vm661, %v1343, 0
        %1363 = vmatprep.subr.bf16.mxu0 0
        %1364 = vmatpush1.bf16.msra.mxu0 %v1356
        %1365 = vmatprep.subr.bf16.mxu0 0
        %1366 = vmatpush1.bf16.msra.mxu0 %v1357
        %1367 = vmatprep.subr.bf16.mxu0 0
        %1368 = vmatpush1.bf16.msra.mxu0 0
        %1369 = vmatprep.subr.bf16.mxu0 0
        %1370 = vmatpush1.bf16.msra.mxu0 0
        %1371 = vmatprep.subr.bf16.mxu0 0
        %1372 = vmatpush1.bf16.msra.mxu0 0
        %1373 = vmatprep.subr.bf16.mxu0 0
        %1374 = vmatpush1.bf16.msra.mxu0 0
        %1375 = vmatprep.subr.bf16.mxu0 0
        %1376 = vmatpush1.bf16.msra.mxu0 0
        %1377 = vmatprep.subr.bf16.mxu0 0
        %1378 = vmatpush1.bf16.msra.mxu0 0
        %1379 = vmatprep.subr.bf16.mxu0 0
        %1380 = vmatpush1.bf16.msra.mxu0 0
        %1381 = vmatprep.subr.bf16.mxu0 0
        %1382 = vmatpush1.bf16.msra.mxu0 0
        %1383 = vmatprep.subr.bf16.mxu0 0
        %1384 = vmatpush1.bf16.msra.mxu0 0
        %1385 = vmatprep.subr.bf16.mxu0 0
        %1386 = vmatpush1.bf16.msra.mxu0 0
        %1387 = vmatprep.subr.bf16.mxu0 0
        %1388 = vmatpush1.bf16.msra.mxu0 0
        %1389 = vmatprep.subr.bf16.mxu0 0
        %1390 = vmatpush1.bf16.msra.mxu0 0
        %1391 = vmatprep.subr.bf16.mxu0 0
        %1392 = vmatpush1.bf16.msra.mxu0 0
        %1393 = vmatprep.subr.bf16.mxu0 0
        %1394 = vmatpush1.bf16.msra.mxu0 0
        %1395 = vmatprep.mubr.bf16.mxu0 0
        %1396 = vmatmul.mubr.bf16.gmra.mrb[0].mxu0 %v1361
        %v1397 = vpop.f32.mrb[0].mxu0
        %v1398 = vadd.f32 0.0, %v1397
        %v1399 = vpop.f32.mrb[0].mxu0
        %v1400 = vpop.f32.mrb[0].mxu0
        %v1401 = vpop.f32.mrb[0].mxu0
        %1402 = vdwg.mxu0
        %v1403 = vadd.f32 %v649, %v1398
        %v1404 = vld [vmem:[%s11] sm:$0x1]
        %v1406 = vlaneseq
        %v1407 = vshrl.u32 %v1406, 7
        %v1408 = vsub.s32 0, %v1407
        %v1409 = vrot.slane %v1404, %v1408
        %v1411 = vadd.f32 %v1403, %v1409
        %v1412 = vld [vmem:[%s12] sm:$0x1]
        %v1413 = vld [vmem:[%s13] sm:$0x1]
        %v1414 = vsel %vm661, %v1411, 0.0
        %1415 = vadd.xlane.f32.xlu0 %v1414
        %v1416 = vpop.xlane.xlu0 %1415
        %v1417 = vmul.f32 %v1416, %v665
        %v1418 = vsub.f32 %v1411, %v1417
        %v1419 = vmul.f32 %v1418, %v1418
        %v1420 = vsel %vm661, %v1419, 0.0
        %1421 = vadd.xlane.f32.xlu0 %v1420
        %v1422 = vpop.xlane.xlu0 %1421
        %v1423 = vmul.f32 %v1422, %v665
        %v1424 = vadd.f32 %v1423, 1e-05
        %v1425 = vrsqrt.pop %v1424
        %v1426 = vmul.f32 %v1418, %v1425
        %v1428 = vlaneseq
        %v1429 = vshrl.u32 %v1428, 7
        %v1430 = vsub.s32 0, %v1429
        %v1431 = vrot.slane %v1412, %v1430
        %v1433 = vmul.f32 %v1426, %v1431
        %v1435 = vlaneseq
        %v1436 = vshrl.u32 %v1435, 7
        %v1437 = vsub.s32 0, %v1436
        %v1438 = vrot.slane %v1413, %v1437
        %v1440 = vadd.f32 %v1433, %v1438
        %v1441 = vpack.c.bf16 %v1440, %v1440
        %v1442 = vld [vmem:[%s14] sm:$0xf]
        %v1443 = vld [vmem:[%s14 + $0x4] sm:$0xf]
        %v1444 = vld [vmem:[%s14 + $0x8] sm:$0xf]
        %v1445 = vld [vmem:[%s14 + $0xc] sm:$0xf]
        %v1446 = vld [vmem:[%s15] sm:$0x1]
        %v1448 = vlaneseq
        %v1449 = vshrl.u32 %v1448, 7
        %v1450 = vsub.s32 0, %v1449
        %v1451 = vrot.slane %v1446, %v1450
        %v1457 = vunpack.c.l.b16 %v1442
        %v1458 = vunpack.c.l.b16 %v1443
        %v1459 = vunpack.c.l.b16 %v1444
        %v1460 = vunpack.c.l.b16 %v1445
        %v1461 = vpack.c.b16 %v1458, %v1457
        %v1462 = vpack.c.b16 %v1460, %v1459
        %v1466 = vsel %vm661, %v1441, 0
        %1468 = vmatprep.subr.bf16.mxu0 0
        %1469 = vmatpush1.bf16.msra.mxu0 %v1461
        %1470 = vmatprep.subr.bf16.mxu0 0
        %1471 = vmatpush1.bf16.msra.mxu0 %v1462
        %1472 = vmatprep.subr.bf16.mxu0 0
        %1473 = vmatpush1.bf16.msra.mxu0 0
        %1474 = vmatprep.subr.bf16.mxu0 0
        %1475 = vmatpush1.bf16.msra.mxu0 0
        %1476 = vmatprep.subr.bf16.mxu0 0
        %1477 = vmatpush1.bf16.msra.mxu0 0
        %1478 = vmatprep.subr.bf16.mxu0 0
        %1479 = vmatpush1.bf16.msra.mxu0 0
        %1480 = vmatprep.subr.bf16.mxu0 0
        %1481 = vmatpush1.bf16.msra.mxu0 0
        %1482 = vmatprep.subr.bf16.mxu0 0
        %1483 = vmatpush1.bf16.msra.mxu0 0
        %1484 = vmatprep.subr.bf16.mxu0 0
        %1485 = vmatpush1.bf16.msra.mxu0 0
        %1486 = vmatprep.subr.bf16.mxu0 0
        %1487 = vmatpush1.bf16.msra.mxu0 0
        %1488 = vmatprep.subr.bf16.mxu0 0
        %1489 = vmatpush1.bf16.msra.mxu0 0
        %1490 = vmatprep.subr.bf16.mxu0 0
        %1491 = vmatpush1.bf16.msra.mxu0 0
        %1492 = vmatprep.subr.bf16.mxu0 0
        %1493 = vmatpush1.bf16.msra.mxu0 0
        %1494 = vmatprep.subr.bf16.mxu0 0
        %1495 = vmatpush1.bf16.msra.mxu0 0
        %1496 = vmatprep.subr.bf16.mxu0 0
        %1497 = vmatpush1.bf16.msra.mxu0 0
        %1498 = vmatprep.subr.bf16.mxu0 0
        %1499 = vmatpush1.bf16.msra.mxu0 0
        %1500 = vmatprep.mubr.bf16.mxu0 0
        %1501 = vmatmul.mubr.bf16.gmra.mrb[0].mxu0 %v1466
        %v1502 = vpop.f32.mrb[0].mxu0
        %v1503 = vadd.f32 %v1451, %v1502
        %v1504 = vpop.f32.mrb[0].mxu0
        %v1505 = vpop.f32.mrb[0].mxu0
        %v1506 = vpop.f32.mrb[0].mxu0
        %1507 = vdwg.mxu0
        %v1508 = vmul.f32 %v1503, %v1503
        %v1509 = vmul.f32 %v1503, %v1508
        %v1510 = vmul.f32 %v1509, 0.044715
        %v1511 = vadd.f32 %v1503, %v1510
        %v1512 = vmul.f32 %v1511, 0.7978846
        %v1513 = vtanh.pop %v1512
        %v1514 = vadd.f32 %v1513, 1.0
        %v1515 = vmul.f32 %v1514, 0.5
        %v1516 = vmul.f32 %v1503, %v1515
        %v1517 = vpack.c.bf16 %v1516, %v1516
        %v1518 = vld [vmem:[%s16] sm:$0xf]
        %v1519 = vld [vmem:[%s16 + $0x4] sm:$0xf]
        %v1520 = vld [vmem:[%s16 + $0x8] sm:$0xf]
        %v1521 = vld [vmem:[%s16 + $0xc] sm:$0xf]
        %1522 = vrot.lane.b32.xlu0 %v1461, 96
        %v1523 = vpop.permute.xlu0 %1522
        %1524 = vrot.lane.b32.xlu0 %v1462, 96
        %v1525 = vpop.permute.xlu0 %1524
        %1528 = vrot.lane.b32.xlu0 %v1451, 96
        %v1529 = vpop.permute.xlu0 %1528
        %1531 = vmatprep.subr.bf16.mxu0 0
        %1532 = vmatpush1.bf16.msra.mxu0 %v1523
        %1533 = vmatprep.subr.bf16.mxu0 0
        %1534 = vmatpush1.bf16.msra.mxu0 %v1525
        %1535 = vmatprep.subr.bf16.mxu0 0
        %1536 = vmatpush1.bf16.msra.mxu0 0
        %1537 = vmatprep.subr.bf16.mxu0 0
        %1538 = vmatpush1.bf16.msra.mxu0 0
        %1539 = vmatprep.subr.bf16.mxu0 0
        %1540 = vmatpush1.bf16.msra.mxu0 0
        %1541 = vmatprep.subr.bf16.mxu0 0
        %1542 = vmatpush1.bf16.msra.mxu0 0
        %1543 = vmatprep.subr.bf16.mxu0 0
        %1544 = vmatpush1.bf16.msra.mxu0 0
        %1545 = vmatprep.subr.bf16.mxu0 0
        %1546 = vmatpush1.bf16.msra.mxu0 0
        %1547 = vmatprep.subr.bf16.mxu0 0
        %1548 = vmatpush1.bf16.msra.mxu0 0
        %1549 = vmatprep.subr.bf16.mxu0 0
        %1550 = vmatpush1.bf16.msra.mxu0 0
        %1551 = vmatprep.subr.bf16.mxu0 0
        %1552 = vmatpush1.bf16.msra.mxu0 0
        %1553 = vmatprep.subr.bf16.mxu0 0
        %1554 = vmatpush1.bf16.msra.mxu0 0
        %1555 = vmatprep.subr.bf16.mxu0 0
        %1556 = vmatpush1.bf16.msra.mxu0 0
        %1557 = vmatprep.subr.bf16.mxu0 0
        %1558 = vmatpush1.bf16.msra.mxu0 0
        %1559 = vmatprep.subr.bf16.mxu0 0
        %1560 = vmatpush1.bf16.msra.mxu0 0
        %1561 = vmatprep.subr.bf16.mxu0 0
        %1562 = vmatpush1.bf16.msra.mxu0 0
        %1563 = vmatprep.mubr.bf16.mxu0 0
        %1564 = vmatmul.mubr.bf16.gmra.mrb[0].mxu0 %v1466
        %v1565 = vpop.f32.mrb[0].mxu0
        %v1566 = vadd.f32 %v1529, %v1565
        %v1567 = vpop.f32.mrb[0].mxu0
        %v1568 = vpop.f32.mrb[0].mxu0
        %v1569 = vpop.f32.mrb[0].mxu0
        %1570 = vdwg.mxu0
        %v1571 = vmul.f32 %v1566, %v1566
        %v1572 = vmul.f32 %v1566, %v1571
        %v1573 = vmul.f32 %v1572, 0.044715
        %v1574 = vadd.f32 %v1566, %v1573
        %v1575 = vmul.f32 %v1574, 0.7978846
        %v1576 = vtanh.pop %v1575
        %v1577 = vadd.f32 %v1576, 1.0
        %v1578 = vmul.f32 %v1577, 0.5
        %v1579 = vmul.f32 %v1566, %v1578
        %v1580 = vpack.c.bf16 %v1579, %v1579
        %v1581 = vld [vmem:[%s16 + $0x10] sm:$0xf]
        %v1582 = vld [vmem:[%s16 + $0x14] sm:$0xf]
        %v1583 = vld [vmem:[%s16 + $0x18] sm:$0xf]
        %v1584 = vld [vmem:[%s16 + $0x1c] sm:$0xf]
        %v1589 = vunpack.c.l.b16 %v1581
        %v1590 = vunpack.c.l.b16 %v1582
        %v1591 = vunpack.c.l.b16 %v1583
        %v1592 = vunpack.c.l.b16 %v1584
        %v1593 = vpack.c.b16 %v1590, %v1589
        %v1594 = vpack.c.b16 %v1592, %v1591
        %v1598 = vsel %vm661, %v1580, 0
        %1600 = vmatprep.subr.bf16.mxu0 0
        %1601 = vmatpush1.bf16.msra.mxu0 %v1593
        %1602 = vmatprep.subr.bf16.mxu0 0
        %1603 = vmatpush1.bf16.msra.mxu0 %v1594
        %1604 = vmatprep.subr.bf16.mxu0 0
        %1605 = vmatpush1.bf16.msra.mxu0 0
        %1606 = vmatprep.subr.bf16.mxu0 0
        %1607 = vmatpush1.bf16.msra.mxu0 0
        %1608 = vmatprep.subr.bf16.mxu0 0
        %1609 = vmatpush1.bf16.msra.mxu0 0
        %1610 = vmatprep.subr.bf16.mxu0 0
        %1611 = vmatpush1.bf16.msra.mxu0 0
        %1612 = vmatprep.subr.bf16.mxu0 0
        %1613 = vmatpush1.bf16.msra.mxu0 0
        %1614 = vmatprep.subr.bf16.mxu0 0
        %1615 = vmatpush1.bf16.msra.mxu0 0
        %1616 = vmatprep.subr.bf16.mxu0 0
        %1617 = vmatpush1.bf16.msra.mxu0 0
        %1618 = vmatprep.subr.bf16.mxu0 0
        %1619 = vmatpush1.bf16.msra.mxu0 0
        %1620 = vmatprep.subr.bf16.mxu0 0
        %1621 = vmatpush1.bf16.msra.mxu0 0
        %1622 = vmatprep.subr.bf16.mxu0 0
        %1623 = vmatpush1.bf16.msra.mxu0 0
        %1624 = vmatprep.subr.bf16.mxu0 0
        %1625 = vmatpush1.bf16.msra.mxu0 0
        %1626 = vmatprep.subr.bf16.mxu0 0
        %1627 = vmatpush1.bf16.msra.mxu0 0
        %1628 = vmatprep.subr.bf16.mxu0 0
        %1629 = vmatpush1.bf16.msra.mxu0 0
        %1630 = vmatprep.subr.bf16.mxu0 0
        %1631 = vmatpush1.bf16.msra.mxu0 0
        %1632 = vmatprep.mubr.bf16.mxu0 0
        %1633 = vmatmul.mubr.bf16.gmra.mrb[0].mxu0 %v1598
        %v1634 = vpop.f32.mrb[0].mxu0
        %v1635 = vadd.f32 0.0, %v1634
        %v1636 = vpop.f32.mrb[0].mxu0
        %v1637 = vpop.f32.mrb[0].mxu0
        %v1638 = vpop.f32.mrb[0].mxu0
        %1639 = vdwg.mxu0
        %v1644 = vunpack.c.l.b16 %v1518
        %v1645 = vunpack.c.l.b16 %v1519
        %v1646 = vunpack.c.l.b16 %v1520
        %v1647 = vunpack.c.l.b16 %v1521
        %v1648 = vpack.c.b16 %v1645, %v1644
        %v1649 = vpack.c.b16 %v1647, %v1646
        %v1653 = vsel %vm661, %v1517, 0
        %1655 = vmatprep.subr.bf16.mxu0 0
        %1656 = vmatpush1.bf16.msra.mxu0 %v1648
        %1657 = vmatprep.subr.bf16.mxu0 0
        %1658 = vmatpush1.bf16.msra.mxu0 %v1649
        %1659 = vmatprep.subr.bf16.mxu0 0
        %1660 = vmatpush1.bf16.msra.mxu0 0
        %1661 = vmatprep.subr.bf16.mxu0 0
        %1662 = vmatpush1.bf16.msra.mxu0 0
        %1663 = vmatprep.subr.bf16.mxu0 0
        %1664 = vmatpush1.bf16.msra.mxu0 0
        %1665 = vmatprep.subr.bf16.mxu0 0
        %1666 = vmatpush1.bf16.msra.mxu0 0
        %1667 = vmatprep.subr.bf16.mxu0 0
        %1668 = vmatpush1.bf16.msra.mxu0 0
        %1669 = vmatprep.subr.bf16.mxu0 0
        %1670 = vmatpush1.bf16.msra.mxu0 0
        %1671 = vmatprep.subr.bf16.mxu0 0
        %1672 = vmatpush1.bf16.msra.mxu0 0
        %1673 = vmatprep.subr.bf16.mxu0 0
        %1674 = vmatpush1.bf16.msra.mxu0 0
        %1675 = vmatprep.subr.bf16.mxu0 0
        %1676 = vmatpush1.bf16.msra.mxu0 0
        %1677 = vmatprep.subr.bf16.mxu0 0
        %1678 = vmatpush1.bf16.msra.mxu0 0
        %1679 = vmatprep.subr.bf16.mxu0 0
        %1680 = vmatpush1.bf16.msra.mxu0 0
        %1681 = vmatprep.subr.bf16.mxu0 0
        %1682 = vmatpush1.bf16.msra.mxu0 0
        %1683 = vmatprep.subr.bf16.mxu0 0
        %1684 = vmatpush1.bf16.msra.mxu0 0
        %1685 = vmatprep.subr.bf16.mxu0 0
        %1686 = vmatpush1.bf16.msra.mxu0 0
        %1687 = vmatprep.mubr.bf16.mxu0 0
        %1688 = vmatmul.mubr.bf16.gmra.mrb[0].mxu0 %v1653
        %v1689 = vpop.f32.mrb[0].mxu0
        %v1690 = vadd.f32 %v1635, %v1689
        %v1691 = vpop.f32.mrb[0].mxu0
        %v1692 = vpop.f32.mrb[0].mxu0
        %v1693 = vpop.f32.mrb[0].mxu0
        %1694 = vdwg.mxu0
        %1695 = vrot.lane.b32.xlu0 %v1461, 64
        %v1696 = vpop.permute.xlu0 %1695
        %1697 = vrot.lane.b32.xlu0 %v1462, 64
        %v1698 = vpop.permute.xlu0 %1697
        %1701 = vrot.lane.b32.xlu0 %v1451, 64
        %v1702 = vpop.permute.xlu0 %1701
        %1704 = vmatprep.subr.bf16.mxu0 0
        %1705 = vmatpush1.bf16.msra.mxu0 %v1696
        %1706 = vmatprep.subr.bf16.mxu0 0
        %1707 = vmatpush1.bf16.msra.mxu0 %v1698
        %1708 = vmatprep.subr.bf16.mxu0 0
        %1709 = vmatpush1.bf16.msra.mxu0 0
        %1710 = vmatprep.subr.bf16.mxu0 0
        %1711 = vmatpush1.bf16.msra.mxu0 0
        %1712 = vmatprep.subr.bf16.mxu0 0
        %1713 = vmatpush1.bf16.msra.mxu0 0
        %1714 = vmatprep.subr.bf16.mxu0 0
        %1715 = vmatpush1.bf16.msra.mxu0 0
        %1716 = vmatprep.subr.bf16.mxu0 0
        %1717 = vmatpush1.bf16.msra.mxu0 0
        %1718 = vmatprep.subr.bf16.mxu0 0
        %1719 = vmatpush1.bf16.msra.mxu0 0
        %1720 = vmatprep.subr.bf16.mxu0 0
        %1721 = vmatpush1.bf16.msra.mxu0 0
        %1722 = vmatprep.subr.bf16.mxu0 0
        %1723 = vmatpush1.bf16.msra.mxu0 0
        %1724 = vmatprep.subr.bf16.mxu0 0
        %1725 = vmatpush1.bf16.msra.mxu0 0
        %1726 = vmatprep.subr.bf16.mxu0 0
        %1727 = vmatpush1.bf16.msra.mxu0 0
        %1728 = vmatprep.subr.bf16.mxu0 0
        %1729 = vmatpush1.bf16.msra.mxu0 0
        %1730 = vmatprep.subr.bf16.mxu0 0
        %1731 = vmatpush1.bf16.msra.mxu0 0
        %1732 = vmatprep.subr.bf16.mxu0 0
        %1733 = vmatpush1.bf16.msra.mxu0 0
        %1734 = vmatprep.subr.bf16.mxu0 0
        %1735 = vmatpush1.bf16.msra.mxu0 0
        %1736 = vmatprep.mubr.bf16.mxu0 0
        %1737 = vmatmul.mubr.bf16.gmra.mrb[0].mxu0 %v1466
        %v1738 = vpop.f32.mrb[0].mxu0
        %v1739 = vadd.f32 %v1702, %v1738
        %v1740 = vpop.f32.mrb[0].mxu0
        %v1741 = vpop.f32.mrb[0].mxu0
        %v1742 = vpop.f32.mrb[0].mxu0
        %1743 = vdwg.mxu0
        %v1744 = vmul.f32 %v1739, %v1739
        %v1745 = vmul.f32 %v1739, %v1744
        %v1746 = vmul.f32 %v1745, 0.044715
        %v1747 = vadd.f32 %v1739, %v1746
        %v1748 = vmul.f32 %v1747, 0.7978846
        %v1749 = vtanh.pop %v1748
        %v1750 = vadd.f32 %v1749, 1.0
        %v1751 = vmul.f32 %v1750, 0.5
        %v1752 = vmul.f32 %v1739, %v1751
        %v1753 = vpack.c.bf16 %v1752, %v1752
        %v1754 = vld [vmem:[%s16 + $0x20] sm:$0xf]
        %v1755 = vld [vmem:[%s16 + $0x24] sm:$0xf]
        %v1756 = vld [vmem:[%s16 + $0x28] sm:$0xf]
        %v1757 = vld [vmem:[%s16 + $0x2c] sm:$0xf]
        %v1762 = vunpack.c.l.b16 %v1754
        %v1763 = vunpack.c.l.b16 %v1755
        %v1764 = vunpack.c.l.b16 %v1756
        %v1765 = vunpack.c.l.b16 %v1757
        %v1766 = vpack.c.b16 %v1763, %v1762
        %v1767 = vpack.c.b16 %v1765, %v1764
        %v1771 = vsel %vm661, %v1753, 0
        %1773 = vmatprep.subr.bf16.mxu0 0
        %1774 = vmatpush1.bf16.msra.mxu0 %v1766
        %1775 = vmatprep.subr.bf16.mxu0 0
        %1776 = vmatpush1.bf16.msra.mxu0 %v1767
        %1777 = vmatprep.subr.bf16.mxu0 0
        %1778 = vmatpush1.bf16.msra.mxu0 0
        %1779 = vmatprep.subr.bf16.mxu0 0
        %1780 = vmatpush1.bf16.msra.mxu0 0
        %1781 = vmatprep.subr.bf16.mxu0 0
        %1782 = vmatpush1.bf16.msra.mxu0 0
        %1783 = vmatprep.subr.bf16.mxu0 0
        %1784 = vmatpush1.bf16.msra.mxu0 0
        %1785 = vmatprep.subr.bf16.mxu0 0
        %1786 = vmatpush1.bf16.msra.mxu0 0
        %1787 = vmatprep.subr.bf16.mxu0 0
        %1788 = vmatpush1.bf16.msra.mxu0 0
        %1789 = vmatprep.subr.bf16.mxu0 0
        %1790 = vmatpush1.bf16.msra.mxu0 0
        %1791 = vmatprep.subr.bf16.mxu0 0
        %1792 = vmatpush1.bf16.msra.mxu0 0
        %1793 = vmatprep.subr.bf16.mxu0 0
        %1794 = vmatpush1.bf16.msra.mxu0 0
        %1795 = vmatprep.subr.bf16.mxu0 0
        %1796 = vmatpush1.bf16.msra.mxu0 0
        %1797 = vmatprep.subr.bf16.mxu0 0
        %1798 = vmatpush1.bf16.msra.mxu0 0
        %1799 = vmatprep.subr.bf16.mxu0 0
        %1800 = vmatpush1.bf16.msra.mxu0 0
        %1801 = vmatprep.subr.bf16.mxu0 0
        %1802 = vmatpush1.bf16.msra.mxu0 0
        %1803 = vmatprep.subr.bf16.mxu0 0
        %1804 = vmatpush1.bf16.msra.mxu0 0
        %1805 = vmatprep.mubr.bf16.mxu0 0
        %1806 = vmatmul.mubr.bf16.gmra.mrb[0].mxu0 %v1771
        %v1807 = vpop.f32.mrb[0].mxu0
        %v1808 = vadd.f32 0.0, %v1807
        %v1809 = vpop.f32.mrb[0].mxu0
        %v1810 = vpop.f32.mrb[0].mxu0
        %v1811 = vpop.f32.mrb[0].mxu0
        %1812 = vdwg.mxu0
        %v1813 = vadd.f32 %v1690, %v1808
        %1814 = vrot.lane.b32.xlu0 %v1461, 32
        %v1815 = vpop.permute.xlu0 %1814
        %1816 = vrot.lane.b32.xlu0 %v1462, 32
        %v1817 = vpop.permute.xlu0 %1816
        %1820 = vrot.lane.b32.xlu0 %v1451, 32
        %v1821 = vpop.permute.xlu0 %1820
        %1823 = vmatprep.subr.bf16.mxu0 0
        %1824 = vmatpush1.bf16.msra.mxu0 %v1815
        %1825 = vmatprep.subr.bf16.mxu0 0
        %1826 = vmatpush1.bf16.msra.mxu0 %v1817
        %1827 = vmatprep.subr.bf16.mxu0 0
        %1828 = vmatpush1.bf16.msra.mxu0 0
        %1829 = vmatprep.subr.bf16.mxu0 0
        %1830 = vmatpush1.bf16.msra.mxu0 0
        %1831 = vmatprep.subr.bf16.mxu0 0
        %1832 = vmatpush1.bf16.msra.mxu0 0
        %1833 = vmatprep.subr.bf16.mxu0 0
        %1834 = vmatpush1.bf16.msra.mxu0 0
        %1835 = vmatprep.subr.bf16.mxu0 0
        %1836 = vmatpush1.bf16.msra.mxu0 0
        %1837 = vmatprep.subr.bf16.mxu0 0
        %1838 = vmatpush1.bf16.msra.mxu0 0
        %1839 = vmatprep.subr.bf16.mxu0 0
        %1840 = vmatpush1.bf16.msra.mxu0 0
        %1841 = vmatprep.subr.bf16.mxu0 0
        %1842 = vmatpush1.bf16.msra.mxu0 0
        %1843 = vmatprep.subr.bf16.mxu0 0
        %1844 = vmatpush1.bf16.msra.mxu0 0
        %1845 = vmatprep.subr.bf16.mxu0 0
        %1846 = vmatpush1.bf16.msra.mxu0 0
        %1847 = vmatprep.subr.bf16.mxu0 0
        %1848 = vmatpush1.bf16.msra.mxu0 0
        %1849 = vmatprep.subr.bf16.mxu0 0
        %1850 = vmatpush1.bf16.msra.mxu0 0
        %1851 = vmatprep.subr.bf16.mxu0 0
        %1852 = vmatpush1.bf16.msra.mxu0 0
        %1853 = vmatprep.subr.bf16.mxu0 0
        %1854 = vmatpush1.bf16.msra.mxu0 0
        %1855 = vmatprep.mubr.bf16.mxu0 0
        %1856 = vmatmul.mubr.bf16.gmra.mrb[0].mxu0 %v1466
        %v1857 = vpop.f32.mrb[0].mxu0
        %v1858 = vadd.f32 %v1821, %v1857
        %v1859 = vpop.f32.mrb[0].mxu0
        %v1860 = vpop.f32.mrb[0].mxu0
        %v1861 = vpop.f32.mrb[0].mxu0
        %1862 = vdwg.mxu0
        %v1863 = vmul.f32 %v1858, %v1858
        %v1864 = vmul.f32 %v1858, %v1863
        %v1865 = vmul.f32 %v1864, 0.044715
        %v1866 = vadd.f32 %v1858, %v1865
        %v1867 = vmul.f32 %v1866, 0.7978846
        %v1868 = vtanh.pop %v1867
        %v1869 = vadd.f32 %v1868, 1.0
        %v1870 = vmul.f32 %v1869, 0.5
        %v1871 = vmul.f32 %v1858, %v1870
        %v1872 = vpack.c.bf16 %v1871, %v1871
        %v1873 = vld [vmem:[%s16 + $0x30] sm:$0xf]
        %v1874 = vld [vmem:[%s16 + $0x34] sm:$0xf]
        %v1875 = vld [vmem:[%s16 + $0x38] sm:$0xf]
        %v1876 = vld [vmem:[%s16 + $0x3c] sm:$0xf]
        %v1881 = vunpack.c.l.b16 %v1873
        %v1882 = vunpack.c.l.b16 %v1874
        %v1883 = vunpack.c.l.b16 %v1875
        %v1884 = vunpack.c.l.b16 %v1876
        %v1885 = vpack.c.b16 %v1882, %v1881
        %v1886 = vpack.c.b16 %v1884, %v1883
        %v1890 = vsel %vm661, %v1872, 0
        %1892 = vmatprep.subr.bf16.mxu0 0
        %1893 = vmatpush1.bf16.msra.mxu0 %v1885
        %1894 = vmatprep.subr.bf16.mxu0 0
        %1895 = vmatpush1.bf16.msra.mxu0 %v1886
        %1896 = vmatprep.subr.bf16.mxu0 0
        %1897 = vmatpush1.bf16.msra.mxu0 0
        %1898 = vmatprep.subr.bf16.mxu0 0
        %1899 = vmatpush1.bf16.msra.mxu0 0
        %1900 = vmatprep.subr.bf16.mxu0 0
        %1901 = vmatpush1.bf16.msra.mxu0 0
        %1902 = vmatprep.subr.bf16.mxu0 0
        %1903 = vmatpush1.bf16.msra.mxu0 0
        %1904 = vmatprep.subr.bf16.mxu0 0
        %1905 = vmatpush1.bf16.msra.mxu0 0
        %1906 = vmatprep.subr.bf16.mxu0 0
        %1907 = vmatpush1.bf16.msra.mxu0 0
        %1908 = vmatprep.subr.bf16.mxu0 0
        %1909 = vmatpush1.bf16.msra.mxu0 0
        %1910 = vmatprep.subr.bf16.mxu0 0
        %1911 = vmatpush1.bf16.msra.mxu0 0
        %1912 = vmatprep.subr.bf16.mxu0 0
        %1913 = vmatpush1.bf16.msra.mxu0 0
        %1914 = vmatprep.subr.bf16.mxu0 0
        %1915 = vmatpush1.bf16.msra.mxu0 0
        %1916 = vmatprep.subr.bf16.mxu0 0
        %1917 = vmatpush1.bf16.msra.mxu0 0
        %1918 = vmatprep.subr.bf16.mxu0 0
        %1919 = vmatpush1.bf16.msra.mxu0 0
        %1920 = vmatprep.subr.bf16.mxu0 0
        %1921 = vmatpush1.bf16.msra.mxu0 0
        %1922 = vmatprep.subr.bf16.mxu0 0
        %1923 = vmatpush1.bf16.msra.mxu0 0
        %1924 = vmatprep.mubr.bf16.mxu0 0
        %1925 = vmatmul.mubr.bf16.gmra.mrb[0].mxu0 %v1890
        %v1926 = vpop.f32.mrb[0].mxu0
        %v1927 = vadd.f32 0.0, %v1926
        %v1928 = vpop.f32.mrb[0].mxu0
        %v1929 = vpop.f32.mrb[0].mxu0
        %v1930 = vpop.f32.mrb[0].mxu0
        %1931 = vdwg.mxu0
        %v1932 = vadd.f32 %v1813, %v1927
        %v1933 = vadd.f32 %v1411, %v1932
        %v1934 = vld [vmem:[%s17] sm:$0x1]
        %v1936 = vlaneseq
        %v1937 = vshrl.u32 %v1936, 7
        %v1938 = vsub.s32 0, %v1937
        %v1939 = vrot.slane %v1934, %v1938
        %v1941 = vadd.f32 %v1933, %v1939
        %1942 = vst.msk [vmem:[%s640] sm:$0xff] %vm661, %v1941
        %s1943 = sand.u32 %s431, 1
        %s1944 = scalar_lea.sflag [#allocation4], %s1943
        %s1945 = sand.u32 %s431, 1
        %s1946 = smul.addr %s1945, 8
        %s1947 = scalar_lea.vmem [#allocation11], %s1946
        // Predicated region
        $region113: #{tpu_custom_call.1} parent=91 // pred_check
          %p1948 = pneg %p441
        $region114: #{tpu_custom_call.1} parent=91 // pred_check_branch
          %1950 = sbr.rel (%p1948) target = $region116
        $region115: #{tpu_custom_call.1} parent=91 // pred_region
          %s1952 = ssub.s32 128, 128
          %1953 = vsyncadd %s1944, %s1952
          %s1954 = smul.addr %s35, 128
          %s1955 = scalar_lea.hbm %s18, %s1954
          %s1957 = sshll.u32 %s1947, 4
          %s1958 = int_to_ptr.vmem [resolvable:$true] %s1957
          %1960 = dma.vmem_to_hbm [thread:$0]  %s1958, 128, %s1955, %s1944
        $region116: #{tpu_custom_call.1} parent=91 // pred_fallthru
          _
      $region92: #{tpu_custom_call.1} parent=5 // pred_fallthru
        _
      %p1961 = scmp.le.s32.totalorder 2, %s30
      // Predicated region
      $region117: #{tpu_custom_call.1} parent=5 // pred_check
        %p1962 = pneg %p1961
      $region118: #{tpu_custom_call.1} parent=5 // pred_check_branch
        %1964 = sbr.rel (%p1962) target = $region120
      $region119: #{tpu_custom_call.1} parent=5 // pred_region
        %s1965 = ssub.s32 %s30, 2
        // Predicated region
        $region121: #{tpu_custom_call.1} parent=119 // pred_check
          %p1966 = pneg %p447
        $region122: #{tpu_custom_call.1} parent=119 // pred_check_branch
          %1968 = sbr.rel (%p1966) target = $region124
        $region123: #{tpu_custom_call.1} parent=119 // pred_region
          %s1969 = sand.u32 %s432, 1
          %s1970 = scalar_lea.sflag [#allocation4], %s1969
          %s1971 = sand.u32 %s432, 1
          %s1972 = smul.addr %s1971, 8
          %s1973 = scalar_lea.vmem [#allocation11], %s1972
          %1974 = dma.done %s1970, 128
        $region124: #{tpu_custom_call.1} parent=119 // pred_fallthru
          _
      $region120: #{tpu_custom_call.1} parent=5 // pred_fallthru
        _
    $region6: #{tpu_custom_call.1} parent=1 // loop_footer
      %s34 = sadd.s32 1, %s30
    $region7: #{tpu_custom_call.1} parent=1 // loop_footer_branch
      %29 = sbr.rel target = $region3
    $region8: #{tpu_custom_call.1} parent=1 // loop_exit
      _
    %1975 = vsyncpa [#allocation3], 1
    %s1976 = scalar_lea.sflag [#allocation3], 1
    %1977 = vsyncpa %s1976, 1
    %1978 = vsyncpa [#allocation6], 1
    %1979 = vsyncpa [#allocation9], 1
    %1980 = vsyncpa [#allocation4], 1
    %s1981 = scalar_lea.sflag [#allocation4], 1
    %1982 = vsyncpa %s1981, 1

// kernel: tpu_custom_call.1
$region0: #{tpu_custom_call.1}
  #allocation0 [shape = 'u32[]', space=smem, size = 0x4, offset = 0x4, fixed_abs, tag = 'smem constant byte address 0x4 - core index']
  #allocation1 [shape = 'u32[144,128]{1,0:T(1,128)}', space=vmem, size = 0x12000, scoped, tag = 'internal scratch']
  %s0 = inlined_call_operand.vmem [shape: f32[2,8,32], index: 0, kind: input, shape index: {}]
  %s1 = inlined_call_operand.vmem [shape: f32[2,1,8], index: 1, kind: input, shape index: {}]
  %s2 = inlined_call_operand.hbm [shape: f32[1,32], index: 2, kind: input, shape index: {}]
  %s3 = inlined_call_operand.hbm [shape: f32[1,32], index: 3, kind: input, shape index: {}]
  %s4 = inlined_call_operand.vmem [shape: bf16[32,32], index: 4, kind: input, shape index: {}]
  %s5 = inlined_call_operand.hbm [shape: f32[1,32], index: 5, kind: input, shape index: {}]
  %s6 = inlined_call_operand.vmem [shape: bf16[32,32], index: 6, kind: input, shape index: {}]
  %s7 = inlined_call_operand.hbm [shape: f32[1,32], index: 7, kind: input, shape index: {}]
  %s8 = inlined_call_operand.vmem [shape: bf16[32,32], index: 8, kind: input, shape index: {}]
  %s9 = inlined_call_operand.hbm [shape: f32[1,32], index: 9, kind: input, shape index: {}]
  %s10 = inlined_call_operand.vmem [shape: bf16[32,32], index: 10, kind: input, shape index: {}]
  %s11 = inlined_call_operand.vmem [shape: f32[1,32], index: 11, kind: input, shape index: {}]
  %s12 = inlined_call_operand.vmem [shape: f32[1,32], index: 12, kind: input, shape index: {}]
  %s13 = inlined_call_operand.vmem [shape: f32[1,32], index: 13, kind: input, shape index: {}]
  %s14 = inlined_call_operand.vmem [shape: bf16[32,128], index: 14, kind: input, shape index: {}]
  %s15 = inlined_call_operand.vmem [shape: f32[1,128], index: 15, kind: input, shape index: {}]
  %s16 = inlined_call_operand.vmem [shape: bf16[128,32], index: 16, kind: input, shape index: {}]
  %s17 = inlined_call_operand.vmem [shape: f32[1,32], index: 17, kind: input, shape index: {}]
  %s18 = inlined_call_operand.hbm [shape: f32[2,8,32], index: 18, kind: output, shape index: {}]
  %s19 = sld [smem:[#allocation0]]
  $region125: #{tpu_custom_call.1} parent=0
    _
  %s21 = ssub.s32 1, %s19
  %s22 = scalar_select 0, %s21, %s19
  $region1: #{tpu_custom_call.1} parent=0
    #allocation2 [shape = 'u8[512]{0}', space=vmem, size = 0x400, scoped, tag = 'input window, operand 2, single buffered']
    #allocation3 [shape = 's32[2]{0}', space=sflag, size = 0x8, scoped, tag = 'scoped memory for tpu_custom_call.1']
    #allocation4 [shape = 's32[2]{0}', space=sflag, size = 0x8, scoped, tag = 'scoped memory for tpu_custom_call.1']
    #allocation5 [shape = 'u8[512]{0}', space=vmem, size = 0x400, scoped, tag = 'input window, operand 3, single buffered']
    #allocation6 [shape = 's32[1]{0}', space=sflag, size = 0x4, scoped, tag = 'scoped memory for tpu_custom_call.1']
    #allocation7 [shape = 'u8[512]{0}', space=vmem, size = 0x400, scoped, tag = 'input window, operand 5, single buffered']
    #allocation8 [shape = 'u8[512]{0}', space=vmem, size = 0x400, scoped, tag = 'input window, operand 7, single buffered']
    #allocation9 [shape = 's32[1]{0}', space=sflag, size = 0x4, scoped, tag = 'scoped memory for tpu_custom_call.1']
    #allocation10 [shape = 'u8[512]{0}', space=vmem, size = 0x400, scoped, tag = 'input window, operand 9, single buffered']
    #allocation11 [shape = 'u8[8192]{0}', space=vmem, size = 0x2000, scoped, tag = 'output window, operand 0']
    %23 = vsyncpa [#allocation3], 0
    %24 = vsyncpa [#allocation6], 0
    %25 = vsyncpa [#allocation9], 0
    %26 = vsyncpa [#allocation4], 0
    %s27 = scalar_lea.sflag [#allocation4], 1
    %28 = vsyncpa %s27, 0
    loop: start=0, step=1, limit=4
    $region2: #{tpu_custom_call.1} parent=1 // loop_pre_header
      _
    $region3: #{tpu_custom_call.1} parent=1 // loop_header
      %s30 = sphi 0, %s34
      %p31 = scmp.ge.s32.totalorder %s30, 4
      %s40 = sphi 0, %s42
      %s43 = sphi 0, %s40
      %s44 = sphi 0, %s43
      %s60 = sphi 0, %s44
      %s66 = sphi 0, %s68
      %s69 = sphi 0, %s66
      %s70 = sphi 0, %s69
      %s86 = sphi 0, %s70
      %s90 = sphi 0, %s90
      %s92 = sphi 0, %s90
      %s93 = sphi 0, %s92
      %s107 = sphi 0, %s93
      %s111 = sphi 0, %s111
      %s113 = sphi 0, %s111
      %s114 = sphi 0, %s113
      %s128 = sphi 0, %s114
      %s132 = sphi 0, %s132
      %s134 = sphi 0, %s132
      %s135 = sphi 0, %s134
      %s149 = sphi 0, %s135
      %s153 = sphi 0, %s153
      %s155 = sphi 0, %s153
      %s156 = sphi 0, %s155
      %s170 = sphi 0, %s156
      %s174 = sphi 0, %s174
      %s176 = sphi 0, %s174
      %s177 = sphi 0, %s176
      %s191 = sphi 0, %s177
      %s195 = sphi 0, %s195
      %s197 = sphi 0, %s195
      %s198 = sphi 0, %s197
      %s212 = sphi 0, %s198
      %s216 = sphi 0, %s216
      %s218 = sphi 0, %s216
      %s219 = sphi 0, %s218
      %s233 = sphi 0, %s219
      %s237 = sphi 0, %s237
      %s239 = sphi 0, %s237
      %s240 = sphi 0, %s239
      %s254 = sphi 0, %s240
      %s258 = sphi 0, %s258
      %s260 = sphi 0, %s258
      %s261 = sphi 0, %s260
      %s275 = sphi 0, %s261
      %s279 = sphi 0, %s279
      %s281 = sphi 0, %s279
      %s282 = sphi 0, %s281
      %s296 = sphi 0, %s282
      %s300 = sphi 0, %s300
      %s302 = sphi 0, %s300
      %s303 = sphi 0, %s302
      %s317 = sphi 0, %s303
      %s321 = sphi 0, %s321
      %s323 = sphi 0, %s321
      %s324 = sphi 0, %s323
      %s338 = sphi 0, %s324
      %s342 = sphi 0, %s342
      %s344 = sphi 0, %s342
      %s345 = sphi 0, %s344
      %s359 = sphi 0, %s345
      %s363 = sphi 0, %s363
      %s365 = sphi 0, %s363
      %s366 = sphi 0, %s365
      %s380 = sphi 0, %s366
      %s384 = sphi 0, %s384
      %s386 = sphi 0, %s384
      %s387 = sphi 0, %s386
      %s401 = sphi 0, %s387
      %s405 = sphi 0, %s405
      %s407 = sphi 0, %s405
      %s408 = sphi 0, %s407
      %s422 = sphi 0, %s408
      %s428 = sphi 0, %s430
      %s431 = sphi 0, %s428
      %s432 = sphi 0, %s431
      %s448 = sphi 0, %s432
    $region4: #{tpu_custom_call.1} parent=1 // loop_header_branch
      %33 = sbr.rel (%p31) target = $region8
    $region5: #{tpu_custom_call.1} parent=1 // loop_body
      %s35 = ssub.s32 %s30, 1
      %s36 = ssub.s32 %s30, 2
      %s37 = sadd.s32 %s30, 1
      %s38 = ssub.s32 %s30, %s37
      %p39 = scmp.eq.s32.totalorder %s38, 0
      %s41 = sadd.s32 %s40, 1
      %s42 = scalar_select %p39, %s40, %s41
      %p45 = pneg %p39
      %p46 = scmp.eq.s32.totalorder %s30, 1
      %p47 = por %p45, %p46
      %p48 = scmp.ne.s32.totalorder %s40, %s43
      %p49 = scmp.eq.s32.totalorder %s30, 0
      %p50 = por %p48, %p49
      %p51 = scmp.ne.s32.totalorder %s40, %s43
      %p52 = scmp.eq.s32.totalorder %s35, 1
      %p53 = por %p51, %p52
      %p54 = scmp.ne.s32.totalorder %s43, %s44
      %p55 = scmp.eq.s32.totalorder %s35, 0
      %p56 = por %p54, %p55
      %p57 = scmp.ne.s32.totalorder %s43, %s44
      %p58 = scmp.eq.s32.totalorder %s36, 1
      %p59 = por %p57, %p58
      %p61 = scmp.ne.s32.totalorder %s44, %s60
      %p62 = scmp.eq.s32.totalorder %s36, 0
      %p63 = por %p61, %p62
      %s64 = ssub.s32 %s30, %s37
      %p65 = scmp.eq.s32.totalorder %s64, 0
      %s67 = sadd.s32 %s66, 1
      %s68 = scalar_select %p65, %s66, %s67
      %p71 = pneg %p65
      %p72 = scmp.eq.s32.totalorder %s30, 1
      %p73 = por %p71, %p72
      %p74 = scmp.ne.s32.totalorder %s66, %s69
      %p75 = scmp.eq.s32.totalorder %s30, 0
      %p76 = por %p74, %p75
      %p77 = scmp.ne.s32.totalorder %s66, %s69
      %p78 = scmp.eq.s32.totalorder %s35, 1
      %p79 = por %p77, %p78
      %p80 = scmp.ne.s32.totalorder %s69, %s70
      %p81 = scmp.eq.s32.totalorder %s35, 0
      %p82 = por %p80, %p81
      %p83 = scmp.ne.s32.totalorder %s69, %s70
      %p84 = scmp.eq.s32.totalorder %s36, 1
      %p85 = por %p83, %p84
      %p87 = scmp.ne.s32.totalorder %s70, %s86
      %p88 = scmp.eq.s32.totalorder %s36, 0
      %p89 = por %p87, %p88
      %s91 = sadd.s32 %s90, 1
      %p94 = scmp.eq.s32.totalorder %s30, 1
      %p95 = scmp.ne.s32.totalorder %s90, %s92
      %p96 = scmp.eq.s32.totalorder %s30, 0
      %p97 = por %p95, %p96
      %p98 = scmp.ne.s32.totalorder %s90, %s92
      %p99 = scmp.eq.s32.totalorder %s35, 1
      %p100 = por %p98, %p99
      %p101 = scmp.ne.s32.totalorder %s92, %s93
      %p102 = scmp.eq.s32.totalorder %s35, 0
      %p103 = por %p101, %p102
      %p104 = scmp.ne.s32.totalorder %s92, %s93
      %p105 = scmp.eq.s32.totalorder %s36, 1
      %p106 = por %p104, %p105
      %p108 = scmp.ne.s32.totalorder %s93, %s107
      %p109 = scmp.eq.s32.totalorder %s36, 0
      %p110 = por %p108, %p109
      %s112 = sadd.s32 %s111, 1
      %p115 = scmp.eq.s32.totalorder %s30, 1
      %p116 = scmp.ne.s32.totalorder %s111, %s113
      %p117 = scmp.eq.s32.totalorder %s30, 0
      %p118 = por %p116, %p117
      %p119 = scmp.ne.s32.totalorder %s111, %s113
      %p120 = scmp.eq.s32.totalorder %s35, 1
      %p121 = por %p119, %p120
      %p122 = scmp.ne.s32.totalorder %s113, %s114
      %p123 = scmp.eq.s32.totalorder %s35, 0
      %p124 = por %p122, %p123
      %p125 = scmp.ne.s32.totalorder %s113, %s114
      %p126 = scmp.eq.s32.totalorder %s36, 1
      %p127 = por %p125, %p126
      %p129 = scmp.ne.s32.totalorder %s114, %s128
      %p130 = scmp.eq.s32.totalorder %s36, 0
      %p131 = por %p129, %p130
      %s133 = sadd.s32 %s132, 1
      %p136 = scmp.eq.s32.totalorder %s30, 1
      %p137 = scmp.ne.s32.totalorder %s132, %s134
      %p138 = scmp.eq.s32.totalorder %s30, 0
      %p139 = por %p137, %p138
      %p140 = scmp.ne.s32.totalorder %s132, %s134
      %p141 = scmp.eq.s32.totalorder %s35, 1
      %p142 = por %p140, %p141
      %p143 = scmp.ne.s32.totalorder %s134, %s135
      %p144 = scmp.eq.s32.totalorder %s35, 0
      %p145 = por %p143, %p144
      %p146 = scmp.ne.s32.totalorder %s134, %s135
      %p147 = scmp.eq.s32.totalorder %s36, 1
      %p148 = por %p146, %p147
      %p150 = scmp.ne.s32.totalorder %s135, %s149
      %p151 = scmp.eq.s32.totalorder %s36, 0
      %p152 = por %p150, %p151
      %s154 = sadd.s32 %s153, 1
      %p157 = scmp.eq.s32.totalorder %s30, 1
      %p158 = scmp.ne.s32.totalorder %s153, %s155
      %p159 = scmp.eq.s32.totalorder %s30, 0
      %p160 = por %p158, %p159
      %p161 = scmp.ne.s32.totalorder %s153, %s155
      %p162 = scmp.eq.s32.totalorder %s35, 1
      %p163 = por %p161, %p162
      %p164 = scmp.ne.s32.totalorder %s155, %s156
      %p165 = scmp.eq.s32.totalorder %s35, 0
      %p166 = por %p164, %p165
      %p167 = scmp.ne.s32.totalorder %s155, %s156
      %p168 = scmp.eq.s32.totalorder %s36, 1
      %p169 = por %p167, %p168
      %p171 = scmp.ne.s32.totalorder %s156, %s170
      %p172 = scmp.eq.s32.totalorder %s36, 0
      %p173 = por %p171, %p172
      %s175 = sadd.s32 %s174, 1
      %p178 = scmp.eq.s32.totalorder %s30, 1
      %p179 = scmp.ne.s32.totalorder %s174, %s176
      %p180 = scmp.eq.s32.totalorder %s30, 0
      %p181 = por %p179, %p180
      %p182 = scmp.ne.s32.totalorder %s174, %s176
      %p183 = scmp.eq.s32.totalorder %s35, 1
      %p184 = por %p182, %p183
      %p185 = scmp.ne.s32.totalorder %s176, %s177
      %p186 = scmp.eq.s32.totalorder %s35, 0
      %p187 = por %p185, %p186
      %p188 = scmp.ne.s32.totalorder %s176, %s177
      %p189 = scmp.eq.s32.totalorder %s36, 1
      %p190 = por %p188, %p189
      %p192 = scmp.ne.s32.totalorder %s177, %s191
      %p193 = scmp.eq.s32.totalorder %s36, 0
      %p194 = por %p192, %p193
      %s196 = sadd.s32 %s195, 1
      %p199 = scmp.eq.s32.totalorder %s30, 1
      %p200 = scmp.ne.s32.totalorder %s195, %s197
      %p201 = scmp.eq.s32.totalorder %s30, 0
      %p202 = por %p200, %p201
      %p203 = scmp.ne.s32.totalorder %s195, %s197
      %p204 = scmp.eq.s32.totalorder %s35, 1
      %p205 = por %p203, %p204
      %p206 = scmp.ne.s32.totalorder %s197, %s198
      %p207 = scmp.eq.s32.totalorder %s35, 0
      %p208 = por %p206, %p207
      %p209 = scmp.ne.s32.totalorder %s197, %s198
      %p210 = scmp.eq.s32.totalorder %s36, 1
      %p211 = por %p209, %p210
      %p213 = scmp.ne.s32.totalorder %s198, %s212
      %p214 = scmp.eq.s32.totalorder %s36, 0
      %p215 = por %p213, %p214
      %s217 = sadd.s32 %s216, 1
      %p220 = scmp.eq.s32.totalorder %s30, 1
      %p221 = scmp.ne.s32.totalorder %s216, %s218
      %p222 = scmp.eq.s32.totalorder %s30, 0
      %p223 = por %p221, %p222
      %p224 = scmp.ne.s32.totalorder %s216, %s218
      %p225 = scmp.eq.s32.totalorder %s35, 1
      %p226 = por %p224, %p225
      %p227 = scmp.ne.s32.totalorder %s218, %s219
      %p228 = scmp.eq.s32.totalorder %s35, 0
      %p229 = por %p227, %p228
      %p230 = scmp.ne.s32.totalorder %s218, %s219
      %p231 = scmp.eq.s32.totalorder %s36, 1
      %p232 = por %p230, %p231
      %p234 = scmp.ne.s32.totalorder %s219, %s233
      %p235 = scmp.eq.s32.totalorder %s36, 0
      %p236 = por %p234, %p235
      %s238 = sadd.s32 %s237, 1
      %p241 = scmp.eq.s32.totalorder %s30, 1
      %p242 = scmp.ne.s32.totalorder %s237, %s239
      %p243 = scmp.eq.s32.totalorder %s30, 0
      %p244 = por %p242, %p243
      %p245 = scmp.ne.s32.totalorder %s237, %s239
      %p246 = scmp.eq.s32.totalorder %s35, 1
      %p247 = por %p245, %p246
      %p248 = scmp.ne.s32.totalorder %s239, %s240
      %p249 = scmp.eq.s32.totalorder %s35, 0
      %p250 = por %p248, %p249
      %p251 = scmp.ne.s32.totalorder %s239, %s240
      %p252 = scmp.eq.s32.totalorder %s36, 1
      %p253 = por %p251, %p252
      %p255 = scmp.ne.s32.totalorder %s240, %s254
      %p256 = scmp.eq.s32.totalorder %s36, 0
      %p257 = por %p255, %p256
      %s259 = sadd.s32 %s258, 1
      %p262 = scmp.eq.s32.totalorder %s30, 1
      %p263 = scmp.ne.s32.totalorder %s258, %s260
      %p264 = scmp.eq.s32.totalorder %s30, 0
      %p265 = por %p263, %p264
      %p266 = scmp.ne.s32.totalorder %s258, %s260
      %p267 = scmp.eq.s32.totalorder %s35, 1
      %p268 = por %p266, %p267
      %p269 = scmp.ne.s32.totalorder %s260, %s261
      %p270 = scmp.eq.s32.totalorder %s35, 0
      %p271 = por %p269, %p270
      %p272 = scmp.ne.s32.totalorder %s260, %s261
      %p273 = scmp.eq.s32.totalorder %s36, 1
      %p274 = por %p272, %p273
      %p276 = scmp.ne.s32.totalorder %s261, %s275
      %p277 = scmp.eq.s32.totalorder %s36, 0
      %p278 = por %p276, %p277
      %s280 = sadd.s32 %s279, 1
      %p283 = scmp.eq.s32.totalorder %s30, 1
      %p284 = scmp.ne.s32.totalorder %s279, %s281
      %p285 = scmp.eq.s32.totalorder %s30, 0
      %p286 = por %p284, %p285
      %p287 = scmp.ne.s32.totalorder %s279, %s281
      %p288 = scmp.eq.s32.totalorder %s35, 1
      %p289 = por %p287, %p288
      %p290 = scmp.ne.s32.totalorder %s281, %s282
      %p291 = scmp.eq.s32.totalorder %s35, 0
      %p292 = por %p290, %p291
      %p293 = scmp.ne.s32.totalorder %s281, %s282
      %p294 = scmp.eq.s32.totalorder %s36, 1
      %p295 = por %p293, %p294
      %p297 = scmp.ne.s32.totalorder %s282, %s296
      %p298 = scmp.eq.s32.totalorder %s36, 0
      %p299 = por %p297, %p298
      %s301 = sadd.s32 %s300, 1
      %p304 = scmp.eq.s32.totalorder %s30, 1
      %p305 = scmp.ne.s32.totalorder %s300, %s302
      %p306 = scmp.eq.s32.totalorder %s30, 0
      %p307 = por %p305, %p306
      %p308 = scmp.ne.s32.totalorder %s300, %s302
      %p309 = scmp.eq.s32.totalorder %s35, 1
      %p310 = por %p308, %p309
      %p311 = scmp.ne.s32.totalorder %s302, %s303
      %p312 = scmp.eq.s32.totalorder %s35, 0
      %p313 = por %p311, %p312
      %p314 = scmp.ne.s32.totalorder %s302, %s303
      %p315 = scmp.eq.s32.totalorder %s36, 1
      %p316 = por %p314, %p315
      %p318 = scmp.ne.s32.totalorder %s303, %s317
      %p319 = scmp.eq.s32.totalorder %s36, 0
      %p320 = por %p318, %p319
      %s322 = sadd.s32 %s321, 1
      %p325 = scmp.eq.s32.totalorder %s30, 1
      %p326 = scmp.ne.s32.totalorder %s321, %s323
      %p327 = scmp.eq.s32.totalorder %s30, 0
      %p328 = por %p326, %p327
      %p329 = scmp.ne.s32.totalorder %s321, %s323
      %p330 = scmp.eq.s32.totalorder %s35, 1
      %p331 = por %p329, %p330
      %p332 = scmp.ne.s32.totalorder %s323, %s324
      %p333 = scmp.eq.s32.totalorder %s35, 0
      %p334 = por %p332, %p333
      %p335 = scmp.ne.s32.totalorder %s323, %s324
      %p336 = scmp.eq.s32.totalorder %s36, 1
      %p337 = por %p335, %p336
      %p339 = scmp.ne.s32.totalorder %s324, %s338
      %p340 = scmp.eq.s32.totalorder %s36, 0
      %p341 = por %p339, %p340
      %s343 = sadd.s32 %s342, 1
      %p346 = scmp.eq.s32.totalorder %s30, 1
      %p347 = scmp.ne.s32.totalorder %s342, %s344
      %p348 = scmp.eq.s32.totalorder %s30, 0
      %p349 = por %p347, %p348
      %p350 = scmp.ne.s32.totalorder %s342, %s344
      %p351 = scmp.eq.s32.totalorder %s35, 1
      %p352 = por %p350, %p351
      %p353 = scmp.ne.s32.totalorder %s344, %s345
      %p354 = scmp.eq.s32.totalorder %s35, 0
      %p355 = por %p353, %p354
      %p356 = scmp.ne.s32.totalorder %s344, %s345
      %p357 = scmp.eq.s32.totalorder %s36, 1
      %p358 = por %p356, %p357
      %p360 = scmp.ne.s32.totalorder %s345, %s359
      %p361 = scmp.eq.s32.totalorder %s36, 0
      %p362 = por %p360, %p361
      %s364 = sadd.s32 %s363, 1
      %p367 = scmp.eq.s32.totalorder %s30, 1
      %p368 = scmp.ne.s32.totalorder %s363, %s365
      %p369 = scmp.eq.s32.totalorder %s30, 0
      %p370 = por %p368, %p369
      %p371 = scmp.ne.s32.totalorder %s363, %s365
      %p372 = scmp.eq.s32.totalorder %s35, 1
      %p373 = por %p371, %p372
      %p374 = scmp.ne.s32.totalorder %s365, %s366
      %p375 = scmp.eq.s32.totalorder %s35, 0
      %p376 = por %p374, %p375
      %p377 = scmp.ne.s32.totalorder %s365, %s366
      %p378 = scmp.eq.s32.totalorder %s36, 1
      %p379 = por %p377, %p378
      %p381 = scmp.ne.s32.totalorder %s366, %s380
      %p382 = scmp.eq.s32.totalorder %s36, 0
      %p383 = por %p381, %p382
      %s385 = sadd.s32 %s384, 1
      %p388 = scmp.eq.s32.totalorder %s30, 1
      %p389 = scmp.ne.s32.totalorder %s384, %s386
      %p390 = scmp.eq.s32.totalorder %s30, 0
      %p391 = por %p389, %p390
      %p392 = scmp.ne.s32.totalorder %s384, %s386
      %p393 = scmp.eq.s32.totalorder %s35, 1
      %p394 = por %p392, %p393
      %p395 = scmp.ne.s32.totalorder %s386, %s387
      %p396 = scmp.eq.s32.totalorder %s35, 0
      %p397 = por %p395, %p396
      %p398 = scmp.ne.s32.totalorder %s386, %s387
      %p399 = scmp.eq.s32.totalorder %s36, 1
      %p400 = por %p398, %p399
      %p402 = scmp.ne.s32.totalorder %s387, %s401
      %p403 = scmp.eq.s32.totalorder %s36, 0
      %p404 = por %p402, %p403
      %s406 = sadd.s32 %s405, 1
      %p409 = scmp.eq.s32.totalorder %s30, 1
      %p410 = scmp.ne.s32.totalorder %s405, %s407
      %p411 = scmp.eq.s32.totalorder %s30, 0
      %p412 = por %p410, %p411
      %p413 = scmp.ne.s32.totalorder %s405, %s407
      %p414 = scmp.eq.s32.totalorder %s35, 1
      %p415 = por %p413, %p414
      %p416 = scmp.ne.s32.totalorder %s407, %s408
      %p417 = scmp.eq.s32.totalorder %s35, 0
      %p418 = por %p416, %p417
      %p419 = scmp.ne.s32.totalorder %s407, %s408
      %p420 = scmp.eq.s32.totalorder %s36, 1
      %p421 = por %p419, %p420
      %p423 = scmp.ne.s32.totalorder %s408, %s422
      %p424 = scmp.eq.s32.totalorder %s36, 0
      %p425 = por %p423, %p424
      %s426 = ssub.s32 %s30, %s37
      %p427 = scmp.eq.s32.totalorder %s426, 0
      %s429 = sadd.s32 %s428, 1
      %s430 = scalar_select %p427, %s428, %s429
      %p433 = pneg %p427
      %p434 = scmp.eq.s32.totalorder %s30, 1
      %p435 = por %p433, %p434
      %p436 = scmp.ne.s32.totalorder %s428, %s431
      %p437 = scmp.eq.s32.totalorder %s30, 0
      %p438 = por %p436, %p437
      %p439 = scmp.ne.s32.totalorder %s428, %s431
      %p440 = scmp.eq.s32.totalorder %s35, 1
      %p441 = por %p439, %p440
      %p442 = scmp.ne.s32.totalorder %s431, %s432
      %p443 = scmp.eq.s32.totalorder %s35, 0
      %p444 = por %p442, %p443
      %p445 = scmp.ne.s32.totalorder %s431, %s432
      %p446 = scmp.eq.s32.totalorder %s36, 1
      %p447 = por %p445, %p446
      %p449 = scmp.ne.s32.totalorder %s432, %s448
      %p450 = scmp.eq.s32.totalorder %s36, 0
      %p451 = por %p449, %p450
      %p452 = scmp.le.s32.totalorder 1, %s30
      %p453 = scmp.lt.s32.totalorder %s30, 3
      %p454 = pnand %p452, %p453
      %p455 = pneg %p454
      // Predicated region
      $region9: #{tpu_custom_call.1} parent=5 // pred_check
        _
      $region10: #{tpu_custom_call.1} parent=5 // pred_check_branch
        %457 = sbr.rel (%p454) target = $region12
      $region11: #{tpu_custom_call.1} parent=5 // pred_region
        %s458 = ssub.s32 %s30, 1
        // Predicated region
        $region13: #{tpu_custom_call.1} parent=11 // pred_check
          %p459 = pneg %p103
        $region14: #{tpu_custom_call.1} parent=11 // pred_check_branch
          %461 = sbr.rel (%p459) target = $region16
        $region15: #{tpu_custom_call.1} parent=11 // pred_region
          %s463 = ssub.s32 16, 16
          %464 = vsyncadd [#allocation3], %s463
          %s466 = sshll.u32 [#allocation2], 4
          %s467 = int_to_ptr.vmem [resolvable:$true] %s466
          %469 = dma.hbm_to_vmem [thread:$0]  %s2, 16, %s467, [#allocation3]
        $region16: #{tpu_custom_call.1} parent=11 // pred_fallthru
          _
        // Predicated region
        $region17: #{tpu_custom_call.1} parent=11 // pred_check
          %p470 = pneg %p124
        $region18: #{tpu_custom_call.1} parent=11 // pred_check_branch
          %472 = sbr.rel (%p470) target = $region20
        $region19: #{tpu_custom_call.1} parent=11 // pred_region
          %s474 = ssub.s32 16, 16
          %475 = vsyncadd [#allocation6], %s474
          %s477 = sshll.u32 [#allocation5], 4
          %s478 = int_to_ptr.vmem [resolvable:$true] %s477
          %480 = dma.hbm_to_vmem [thread:$0]  %s3, 16, %s478, [#allocation6]
        $region20: #{tpu_custom_call.1} parent=11 // pred_fallthru
          _
        // Predicated region
        $region21: #{tpu_custom_call.1} parent=11 // pred_check
          %p481 = pneg %p145
        $region22: #{tpu_custom_call.1} parent=11 // pred_check_branch
          %483 = sbr.rel (%p481) target = $region24
        $region23: #{tpu_custom_call.1} parent=11 // pred_region
          _
        $region24: #{tpu_custom_call.1} parent=11 // pred_fallthru
          _
        // Predicated region
        $region25: #{tpu_custom_call.1} parent=11 // pred_check
          %p484 = pneg %p166
        $region26: #{tpu_custom_call.1} parent=11 // pred_check_branch
          %486 = sbr.rel (%p484) target = $region28
        $region27: #{tpu_custom_call.1} parent=11 // pred_region
          %s488 = ssub.s32 16, 16
          %489 = vsyncadd [#allocation6], %s488
          %s491 = sshll.u32 [#allocation7], 4
          %s492 = int_to_ptr.vmem [resolvable:$true] %s491
          %494 = dma.hbm_to_vmem [thread:$0]  %s5, 16, %s492, [#allocation6]
        $region28: #{tpu_custom_call.1} parent=11 // pred_fallthru
          _
        // Predicated region
        $region29: #{tpu_custom_call.1} parent=11 // pred_check
          %p495 = pneg %p187
        $region30: #{tpu_custom_call.1} parent=11 // pred_check_branch
          %497 = sbr.rel (%p495) target = $region32
        $region31: #{tpu_custom_call.1} parent=11 // pred_region
          _
        $region32: #{tpu_custom_call.1} parent=11 // pred_fallthru
          _
        // Predicated region
        $region33: #{tpu_custom_call.1} parent=11 // pred_check
          %p498 = pneg %p208
        $region34: #{tpu_custom_call.1} parent=11 // pred_check_branch
          %500 = sbr.rel (%p498) target = $region36
        $region35: #{tpu_custom_call.1} parent=11 // pred_region
          %s502 = ssub.s32 16, 16
          %503 = vsyncadd [#allocation9], %s502
          %s505 = sshll.u32 [#allocation8], 4
          %s506 = int_to_ptr.vmem [resolvable:$true] %s505
          %508 = dma.hbm_to_vmem [thread:$0]  %s7, 16, %s506, [#allocation9]
        $region36: #{tpu_custom_call.1} parent=11 // pred_fallthru
          _
        // Predicated region
        $region37: #{tpu_custom_call.1} parent=11 // pred_check
          %p509 = pneg %p229
        $region38: #{tpu_custom_call.1} parent=11 // pred_check_branch
          %511 = sbr.rel (%p509) target = $region40
        $region39: #{tpu_custom_call.1} parent=11 // pred_region
          _
        $region40: #{tpu_custom_call.1} parent=11 // pred_fallthru
          _
        // Predicated region
        $region41: #{tpu_custom_call.1} parent=11 // pred_check
          %p512 = pneg %p250
        $region42: #{tpu_custom_call.1} parent=11 // pred_check_branch
          %514 = sbr.rel (%p512) target = $region44
        $region43: #{tpu_custom_call.1} parent=11 // pred_region
          %s516 = ssub.s32 16, 16
          %517 = vsyncadd [#allocation9], %s516
          %s519 = sshll.u32 [#allocation10], 4
          %s520 = int_to_ptr.vmem [resolvable:$true] %s519
          %522 = dma.hbm_to_vmem [thread:$0]  %s9, 16, %s520, [#allocation9]
        $region44: #{tpu_custom_call.1} parent=11 // pred_fallthru
          _
        // Predicated region
        $region45: #{tpu_custom_call.1} parent=11 // pred_check
          %p523 = pneg %p271
        $region46: #{tpu_custom_call.1} parent=11 // pred_check_branch
          %525 = sbr.rel (%p523) target = $region48
        $region47: #{tpu_custom_call.1} parent=11 // pred_region
          _
        $region48: #{tpu_custom_call.1} parent=11 // pred_fallthru
          _
        // Predicated region
        $region49: #{tpu_custom_call.1} parent=11 // pred_check
          %p526 = pneg %p292
        $region50: #{tpu_custom_call.1} parent=11 // pred_check_branch
          %528 = sbr.rel (%p526) target = $region52
        $region51: #{tpu_custom_call.1} parent=11 // pred_region
          _
        $region52: #{tpu_custom_call.1} parent=11 // pred_fallthru
          _
        // Predicated region
        $region53: #{tpu_custom_call.1} parent=11 // pred_check
          %p529 = pneg %p313
        $region54: #{tpu_custom_call.1} parent=11 // pred_check_branch
          %531 = sbr.rel (%p529) target = $region56
        $region55: #{tpu_custom_call.1} parent=11 // pred_region
          _
        $region56: #{tpu_custom_call.1} parent=11 // pred_fallthru
          _
        // Predicated region
        $region57: #{tpu_custom_call.1} parent=11 // pred_check
          %p532 = pneg %p334
        $region58: #{tpu_custom_call.1} parent=11 // pred_check_branch
          %534 = sbr.rel (%p532) target = $region60
        $region59: #{tpu_custom_call.1} parent=11 // pred_region
          _
        $region60: #{tpu_custom_call.1} parent=11 // pred_fallthru
          _
        // Predicated region
        $region61: #{tpu_custom_call.1} parent=11 // pred_check
          %p535 = pneg %p355
        $region62: #{tpu_custom_call.1} parent=11 // pred_check_branch
          %537 = sbr.rel (%p535) target = $region64
        $region63: #{tpu_custom_call.1} parent=11 // pred_region
          _
        $region64: #{tpu_custom_call.1} parent=11 // pred_fallthru
          _
        // Predicated region
        $region65: #{tpu_custom_call.1} parent=11 // pred_check
          %p538 = pneg %p376
        $region66: #{tpu_custom_call.1} parent=11 // pred_check_branch
          %540 = sbr.rel (%p538) target = $region68
        $region67: #{tpu_custom_call.1} parent=11 // pred_region
          _
        $region68: #{tpu_custom_call.1} parent=11 // pred_fallthru
          _
        // Predicated region
        $region69: #{tpu_custom_call.1} parent=11 // pred_check
          %p541 = pneg %p397
        $region70: #{tpu_custom_call.1} parent=11 // pred_check_branch
          %543 = sbr.rel (%p541) target = $region72
        $region71: #{tpu_custom_call.1} parent=11 // pred_region
          _
        $region72: #{tpu_custom_call.1} parent=11 // pred_fallthru
          _
        // Predicated region
        $region73: #{tpu_custom_call.1} parent=11 // pred_check
          %p544 = pneg %p418
        $region74: #{tpu_custom_call.1} parent=11 // pred_check_branch
          %546 = sbr.rel (%p544) target = $region76
        $region75: #{tpu_custom_call.1} parent=11 // pred_region
          _
        $region76: #{tpu_custom_call.1} parent=11 // pred_fallthru
          _
      $region12: #{tpu_custom_call.1} parent=5 // pred_fallthru
        _
      %p547 = scmp.lt.s32.totalorder %s30, 2
      // Predicated region
      $region77: #{tpu_custom_call.1} parent=5 // pred_check
        %p548 = pneg %p547
      $region78: #{tpu_custom_call.1} parent=5 // pred_check_branch
        %550 = sbr.rel (%p548) target = $region80
      $region79: #{tpu_custom_call.1} parent=5 // pred_region
        // Predicated region
        $region81: #{tpu_custom_call.1} parent=79 // pred_check
          %p551 = pneg %p50
        $region82: #{tpu_custom_call.1} parent=79 // pred_check_branch
          %553 = sbr.rel (%p551) target = $region84
        $region83: #{tpu_custom_call.1} parent=79 // pred_region
          %p554 = scmp.lt.s32.totalorder %s30, 1
          %s555 = scalar_select %p554, %s30, 1
          %s556 = smul.addr %s555, 8
          %s557 = scalar_lea.vmem %s0, %s556
        $region84: #{tpu_custom_call.1} parent=79 // pred_fallthru
          _
        // Predicated region
        $region85: #{tpu_custom_call.1} parent=79 // pred_check
          %p558 = pneg %p76
        $region86: #{tpu_custom_call.1} parent=79 // pred_check_branch
          %560 = sbr.rel (%p558) target = $region88
        $region87: #{tpu_custom_call.1} parent=79 // pred_region
          %p561 = scmp.lt.s32.totalorder %s30, 1
          %s562 = scalar_select %p561, %s30, 1
          %s563 = scalar_lea.vmem %s1, %s562
        $region88: #{tpu_custom_call.1} parent=79 // pred_fallthru
          _
      $region80: #{tpu_custom_call.1} parent=5 // pred_fallthru
        _
      %p564 = scmp.le.s32.totalorder 1, %s30
      %p565 = scmp.lt.s32.totalorder %s30, 3
      %p566 = pnand %p564, %p565
      %p567 = pneg %p566
      // Predicated region
      $region89: #{tpu_custom_call.1} parent=5 // pred_check
        _
      $region90: #{tpu_custom_call.1} parent=5 // pred_check_branch
        %569 = sbr.rel (%p566) target = $region92
      $region91: #{tpu_custom_call.1} parent=5 // pred_region
        %s570 = ssub.s32 %s30, 1
        // Predicated region
        $region93: #{tpu_custom_call.1} parent=91 // pred_check
          %p571 = pneg %p103
        $region94: #{tpu_custom_call.1} parent=91 // pred_check_branch
          %573 = sbr.rel (%p571) target = $region96
        $region95: #{tpu_custom_call.1} parent=91 // pred_region
          %574 = dma.done [#allocation3], 16
        $region96: #{tpu_custom_call.1} parent=91 // pred_fallthru
          _
        // Predicated region
        $region97: #{tpu_custom_call.1} parent=91 // pred_check
          %p575 = pneg %p124
        $region98: #{tpu_custom_call.1} parent=91 // pred_check_branch
          %577 = sbr.rel (%p575) target = $region100
        $region99: #{tpu_custom_call.1} parent=91 // pred_region
          %578 = dma.done [#allocation6], 16
        $region100: #{tpu_custom_call.1} parent=91 // pred_fallthru
          _
        // Predicated region
        $region101: #{tpu_custom_call.1} parent=91 // pred_check
          %p579 = pneg %p166
        $region102: #{tpu_custom_call.1} parent=91 // pred_check_branch
          %581 = sbr.rel (%p579) target = $region104
        $region103: #{tpu_custom_call.1} parent=91 // pred_region
          %582 = dma.done [#allocation6], 16
        $region104: #{tpu_custom_call.1} parent=91 // pred_fallthru
          _
        // Predicated region
        $region105: #{tpu_custom_call.1} parent=91 // pred_check
          %p583 = pneg %p208
        $region106: #{tpu_custom_call.1} parent=91 // pred_check_branch
          %585 = sbr.rel (%p583) target = $region108
        $region107: #{tpu_custom_call.1} parent=91 // pred_region
          %586 = dma.done [#allocation9], 16
        $region108: #{tpu_custom_call.1} parent=91 // pred_fallthru
          _
        // Predicated region
        $region109: #{tpu_custom_call.1} parent=91 // pred_check
          %p587 = pneg %p250
        $region110: #{tpu_custom_call.1} parent=91 // pred_check_branch
          %589 = sbr.rel (%p587) target = $region112
        $region111: #{tpu_custom_call.1} parent=91 // pred_region
          %590 = dma.done [#allocation9], 16
        $region112: #{tpu_custom_call.1} parent=91 // pred_fallthru
          _
        %p591 = scmp.lt.s32.totalorder %s35, 1
        %s592 = scalar_select %p591, %s35, 1
        %s593 = smul.addr %s592, 8
        %s594 = scalar_lea.vmem %s0, %s593
        %p595 = pneg %p56
        %p596 = pneg %p53
        %p597 = scmp.lt.s32.totalorder %s35, 1
        %s598 = scalar_select %p597, %s35, 1
        %s599 = scalar_lea.vmem %s1, %s598
        %p600 = pneg %p82
        %p601 = pneg %p79
        %p602 = pneg %p103
        %p603 = pneg %p100
        %p604 = pneg %p124
        %p605 = pneg %p121
        %p606 = pneg %p145
        %p607 = pneg %p142
        %p608 = pneg %p166
        %p609 = pneg %p163
        %p610 = pneg %p187
        %p611 = pneg %p184
        %p612 = pneg %p208
        %p613 = pneg %p205
        %p614 = pneg %p229
        %p615 = pneg %p226
        %p616 = pneg %p250
        %p617 = pneg %p247
        %p618 = pneg %p271
        %p619 = pneg %p268
        %p620 = pneg %p292
        %p621 = pneg %p289
        %p622 = pneg %p313
        %p623 = pneg %p310
        %p624 = pneg %p334
        %p625 = pneg %p331
        %p626 = pneg %p355
        %p627 = pneg %p352
        %p628 = pneg %p376
        %p629 = pneg %p373
        %p630 = pneg %p397
        %p631 = pneg %p394
        %p632 = pneg %p418
        %p633 = pneg %p415
        %p634 = pneg %p444
        %p635 = pneg %p441
        %s636 = sand.u32 %s431, 1
        %s637 = scalar_lea.sflag [#allocation4], %s636
        %s638 = sand.u32 %s431, 1
        %s639 = smul.addr %s638, 8
        %s640 = scalar_lea.vmem [#allocation11], %s639
        %p641 = scmp.lt.s32.totalorder %s35, 1
        %s642 = scalar_select %p641, %s35, 1
        %s643 = smul.addr %s642, 8
        %s644 = scalar_lea.vmem %s0, %s643
        %p645 = scmp.lt.s32.totalorder %s35, 1
        %s646 = scalar_select %p645, %s35, 1
        %s647 = scalar_lea.vmem %s1, %s646
        %v649 = vld [vmem:[%s644] sm:$0xff]
        %v650 = vld [vmem:[%s647] sm:$0x1]
        %vm651 = vcmp.gt.f32.partialorder %v650, 0.0
        %v652 = vsel %vm651, 0.0, -1e+09
        %v654 = vlaneseq
        %v655 = vshrl.u32 %v654, 7
        %v656 = vsub.s32 0, %v655
        %v657 = vrot.slane %v652, %v656
        %v659 = vld [vmem:[#allocation2] sm:$0x1]
        %v660 = vld [vmem:[#allocation5] sm:$0x1]
        %vm661 = vcmask 261120
        %v662 = vsel %vm661, %v649, 0.0
        %663 = vadd.xlane.f32.xlu0 %v662
        %v664 = vpop.xlane.xlu0 %663
        %v665 = vrcp.pop 32.0
        %v666 = vmul.f32 %v664, %v665
        %v667 = vsub.f32 %v649, %v666
        %v668 = vmul.f32 %v667, %v667
        %v669 = vsel %vm661, %v668, 0.0
        %670 = vadd.xlane.f32.xlu0 %v669
        %v671 = vpop.xlane.xlu0 %670
        %v672 = vmul.f32 %v671, %v665
        %v673 = vadd.f32 %v672, 1e-05
        %v674 = vrsqrt.pop %v673
        %v675 = vmul.f32 %v667, %v674
        %v677 = vlaneseq
        %v678 = vshrl.u32 %v677, 7
        %v679 = vsub.s32 0, %v678
        %v680 = vrot.slane %v659, %v679
        %v682 = vmul.f32 %v675, %v680
        %v684 = vlaneseq
        %v685 = vshrl.u32 %v684, 7
        %v686 = vsub.s32 0, %v685
        %v687 = vrot.slane %v660, %v686
        %v689 = vadd.f32 %v682, %v687
        %v690 = vpack.c.bf16 %v689, %v689
        %v691 = vld [vmem:[%s4] sm:$0xf]
        %v692 = vld [vmem:[%s4 + $0x4] sm:$0xf]
        %v693 = vld [vmem:[%s4 + $0x8] sm:$0xf]
        %v694 = vld [vmem:[%s4 + $0xc] sm:$0xf]
        %v695 = vld [vmem:[#allocation7] sm:$0x1]
        %v697 = vlaneseq
        %v698 = vshrl.u32 %v697, 7
        %v699 = vsub.s32 0, %v698
        %v700 = vrot.slane %v695, %v699
        %v706 = vunpack.c.l.b16 %v691
        %v707 = vunpack.c.l.b16 %v692
        %v708 = vunpack.c.l.b16 %v693
        %v709 = vunpack.c.l.b16 %v694
        %v710 = vpack.c.b16 %v707, %v706
        %v711 = vpack.c.b16 %v709, %v708
        %v715 = vsel %vm661, %v690, 0
        %717 = vmatprep.subr.bf16.mxu0 0
        %718 = vmatpush1.bf16.msra.mxu0 %v710
        %719 = vmatprep.subr.bf16.mxu0 0
        %720 = vmatpush1.bf16.msra.mxu0 %v711
        %721 = vmatprep.subr.bf16.mxu0 0
        %722 = vmatpush1.bf16.msra.mxu0 0
        %723 = vmatprep.subr.bf16.mxu0 0
        %724 = vmatpush1.bf16.msra.mxu0 0
        %725 = vmatprep.subr.bf16.mxu0 0
        %726 = vmatpush1.bf16.msra.mxu0 0
        %727 = vmatprep.subr.bf16.mxu0 0
        %728 = vmatpush1.bf16.msra.mxu0 0
        %729 = vmatprep.subr.bf16.mxu0 0
        %730 = vmatpush1.bf16.msra.mxu0 0
        %731 = vmatprep.subr.bf16.mxu0 0
        %732 = vmatpush1.bf16.msra.mxu0 0
        %733 = vmatprep.subr.bf16.mxu0 0
        %734 = vmatpush1.bf16.msra.mxu0 0
        %735 = vmatprep.subr.bf16.mxu0 0
        %736 = vmatpush1.bf16.msra.mxu0 0
        %737 = vmatprep.subr.bf16.mxu0 0
        %738 = vmatpush1.bf16.msra.mxu0 0
        %739 = vmatprep.subr.bf16.mxu0 0
        %740 = vmatpush1.bf16.msra.mxu0 0
        %741 = vmatprep.subr.bf16.mxu0 0
        %742 = vmatpush1.bf16.msra.mxu0 0
        %743 = vmatprep.subr.bf16.mxu0 0
        %744 = vmatpush1.bf16.msra.mxu0 0
        %745 = vmatprep.subr.bf16.mxu0 0
        %746 = vmatpush1.bf16.msra.mxu0 0
        %747 = vmatprep.subr.bf16.mxu0 0
        %748 = vmatpush1.bf16.msra.mxu0 0
        %749 = vmatprep.mubr.bf16.mxu0 0
        %750 = vmatmul.mubr.bf16.gmra.mrb[0].mxu0 %v715
        %v751 = vpop.f32.mrb[0].mxu0
        %v752 = vadd.f32 %v700, %v751
        %v753 = vpop.f32.mrb[0].mxu0
        %v754 = vpop.f32.mrb[0].mxu0
        %v755 = vpop.f32.mrb[0].mxu0
        %756 = vdwg.mxu0
        %v757 = vld [vmem:[%s6] sm:$0xf]
        %v758 = vld [vmem:[%s6 + $0x4] sm:$0xf]
        %v759 = vld [vmem:[%s6 + $0x8] sm:$0xf]
        %v760 = vld [vmem:[%s6 + $0xc] sm:$0xf]
        %v761 = vld [vmem:[#allocation8] sm:$0x1]
        %v763 = vlaneseq
        %v764 = vshrl.u32 %v763, 7
        %v765 = vsub.s32 0, %v764
        %v766 = vrot.slane %v761, %v765
        %v772 = vunpack.c.l.b16 %v757
        %v773 = vunpack.c.l.b16 %v758
        %v774 = vunpack.c.l.b16 %v759
        %v775 = vunpack.c.l.b16 %v760
        %v776 = vpack.c.b16 %v773, %v772
        %v777 = vpack.c.b16 %v775, %v774
        %780 = vmatprep.subr.bf16.mxu0 0
        %781 = vmatpush1.bf16.msra.mxu0 %v776
        %782 = vmatprep.subr.bf16.mxu0 0
        %783 = vmatpush1.bf16.msra.mxu0 %v777
        %784 = vmatprep.subr.bf16.mxu0 0
        %785 = vmatpush1.bf16.msra.mxu0 0
        %786 = vmatprep.subr.bf16.mxu0 0
        %787 = vmatpush1.bf16.msra.mxu0 0
        %788 = vmatprep.subr.bf16.mxu0 0
        %789 = vmatpush1.bf16.msra.mxu0 0
        %790 = vmatprep.subr.bf16.mxu0 0
        %791 = vmatpush1.bf16.msra.mxu0 0
        %792 = vmatprep.subr.bf16.mxu0 0
        %793 = vmatpush1.bf16.msra.mxu0 0
        %794 = vmatprep.subr.bf16.mxu0 0
        %795 = vmatpush1.bf16.msra.mxu0 0
        %796 = vmatprep.subr.bf16.mxu0 0
        %797 = vmatpush1.bf16.msra.mxu0 0
        %798 = vmatprep.subr.bf16.mxu0 0
        %799 = vmatpush1.bf16.msra.mxu0 0
        %800 = vmatprep.subr.bf16.mxu0 0
        %801 = vmatpush1.bf16.msra.mxu0 0
        %802 = vmatprep.subr.bf16.mxu0 0
        %803 = vmatpush1.bf16.msra.mxu0 0
        %804 = vmatprep.subr.bf16.mxu0 0
        %805 = vmatpush1.bf16.msra.mxu0 0
        %806 = vmatprep.subr.bf16.mxu0 0
        %807 = vmatpush1.bf16.msra.mxu0 0
        %808 = vmatprep.subr.bf16.mxu0 0
        %809 = vmatpush1.bf16.msra.mxu0 0
        %810 = vmatprep.subr.bf16.mxu0 0
        %811 = vmatpush1.bf16.msra.mxu0 0
        %812 = vmatprep.mubr.bf16.mxu0 0
        %813 = vmatmul.mubr.bf16.gmra.mrb[0].mxu0 %v715
        %v814 = vpop.f32.mrb[0].mxu0
        %v815 = vadd.f32 %v766, %v814
        %v816 = vpop.f32.mrb[0].mxu0
        %v817 = vpop.f32.mrb[0].mxu0
        %v818 = vpop.f32.mrb[0].mxu0
        %819 = vdwg.mxu0
        %v820 = vld [vmem:[%s8] sm:$0xf]
        %v821 = vld [vmem:[%s8 + $0x4] sm:$0xf]
        %v822 = vld [vmem:[%s8 + $0x8] sm:$0xf]
        %v823 = vld [vmem:[%s8 + $0xc] sm:$0xf]
        %v824 = vld [vmem:[#allocation10] sm:$0x1]
        %v826 = vlaneseq
        %v827 = vshrl.u32 %v826, 7
        %v828 = vsub.s32 0, %v827
        %v829 = vrot.slane %v824, %v828
        %v835 = vunpack.c.l.b16 %v820
        %v836 = vunpack.c.l.b16 %v821
        %v837 = vunpack.c.l.b16 %v822
        %v838 = vunpack.c.l.b16 %v823
        %v839 = vpack.c.b16 %v836, %v835
        %v840 = vpack.c.b16 %v838, %v837
        %843 = vmatprep.subr.bf16.mxu0 0
        %844 = vmatpush1.bf16.msra.mxu0 %v839
        %845 = vmatprep.subr.bf16.mxu0 0
        %846 = vmatpush1.bf16.msra.mxu0 %v840
        %847 = vmatprep.subr.bf16.mxu0 0
        %848 = vmatpush1.bf16.msra.mxu0 0
        %849 = vmatprep.subr.bf16.mxu0 0
        %850 = vmatpush1.bf16.msra.mxu0 0
        %851 = vmatprep.subr.bf16.mxu0 0
        %852 = vmatpush1.bf16.msra.mxu0 0
        %853 = vmatprep.subr.bf16.mxu0 0
        %854 = vmatpush1.bf16.msra.mxu0 0
        %855 = vmatprep.subr.bf16.mxu0 0
        %856 = vmatpush1.bf16.msra.mxu0 0
        %857 = vmatprep.subr.bf16.mxu0 0
        %858 = vmatpush1.bf16.msra.mxu0 0
        %859 = vmatprep.subr.bf16.mxu0 0
        %860 = vmatpush1.bf16.msra.mxu0 0
        %861 = vmatprep.subr.bf16.mxu0 0
        %862 = vmatpush1.bf16.msra.mxu0 0
        %863 = vmatprep.subr.bf16.mxu0 0
        %864 = vmatpush1.bf16.msra.mxu0 0
        %865 = vmatprep.subr.bf16.mxu0 0
        %866 = vmatpush1.bf16.msra.mxu0 0
        %867 = vmatprep.subr.bf16.mxu0 0
        %868 = vmatpush1.bf16.msra.mxu0 0
        %869 = vmatprep.subr.bf16.mxu0 0
        %870 = vmatpush1.bf16.msra.mxu0 0
        %871 = vmatprep.subr.bf16.mxu0 0
        %872 = vmatpush1.bf16.msra.mxu0 0
        %873 = vmatprep.subr.bf16.mxu0 0
        %874 = vmatpush1.bf16.msra.mxu0 0
        %875 = vmatprep.mubr.bf16.mxu0 0
        %876 = vmatmul.mubr.bf16.gmra.mrb[0].mxu0 %v715
        %v877 = vpop.f32.mrb[0].mxu0
        %v878 = vadd.f32 %v829, %v877
        %v879 = vpop.f32.mrb[0].mxu0
        %v880 = vpop.f32.mrb[0].mxu0
        %v881 = vpop.f32.mrb[0].mxu0
        %882 = vdwg.mxu0
        %v883 = vmul.f32 %v752, 0.35355338
        %v884 = vpack.c.bf16 %v883, %v883
        %v885 = vpack.c.bf16 %v815, %v815
        %v886 = vpack.c.bf16 %v878, %v878
        %vm887 = vcmask 64512
        %v889 = vsel %vm887, %v884, 0
        %v892 = vsel %vm887, %v885, 0
        %894 = vmatprep.subr.bf16.mxu0 0
        %895 = vmatpush1.bf16.xpose.msra.mxu0 %v892
        %896 = vmatprep.subr.bf16.mxu0 0
        %897 = vmatpush1.bf16.xpose.msra.mxu0 0
        %898 = vmatprep.subr.bf16.mxu0 0
        %899 = vmatpush1.bf16.xpose.msra.mxu0 0
        %900 = vmatprep.subr.bf16.mxu0 0
        %901 = vmatpush1.bf16.xpose.msra.mxu0 0
        %902 = vmatprep.subr.bf16.mxu0 0
        %903 = vmatpush1.bf16.xpose.msra.mxu0 0
        %904 = vmatprep.subr.bf16.mxu0 0
        %905 = vmatpush1.bf16.xpose.msra.mxu0 0
        %906 = vmatprep.subr.bf16.mxu0 0
        %907 = vmatpush1.bf16.xpose.msra.mxu0 0
        %908 = vmatprep.subr.bf16.mxu0 0
        %909 = vmatpush1.bf16.xpose.msra.mxu0 0
        %910 = vmatprep.subr.bf16.mxu0 0
        %911 = vmatpush1.bf16.xpose.msra.mxu0 0
        %912 = vmatprep.subr.bf16.mxu0 0
        %913 = vmatpush1.bf16.xpose.msra.mxu0 0
        %914 = vmatprep.subr.bf16.mxu0 0
        %915 = vmatpush1.bf16.xpose.msra.mxu0 0
        %916 = vmatprep.subr.bf16.mxu0 0
        %917 = vmatpush1.bf16.xpose.msra.mxu0 0
        %918 = vmatprep.subr.bf16.mxu0 0
        %919 = vmatpush1.bf16.xpose.msra.mxu0 0
        %920 = vmatprep.subr.bf16.mxu0 0
        %921 = vmatpush1.bf16.xpose.msra.mxu0 0
        %922 = vmatprep.subr.bf16.mxu0 0
        %923 = vmatpush1.bf16.xpose.msra.mxu0 0
        %924 = vmatprep.subr.bf16.mxu0 0
        %925 = vmatpush1.bf16.xpose.msra.mxu0 0
        %926 = vmatprep.mubr.bf16.mxu0 0
        %927 = vmatmul.mubr.bf16.gmra.mrb[0].mxu0 %v889
        %v928 = vpop.f32.mrb[0].mxu0
        %v929 = vadd.f32 %v657, %v928
        %v930 = vpop.f32.mrb[0].mxu0
        %v931 = vpop.f32.mrb[0].mxu0
        %v932 = vpop.f32.mrb[0].mxu0
        %933 = vdwg.mxu0
        %v934 = vsel %vm887, %v929, -inf
        %935 = vmax.xlane.f32.xlu0 %v934
        %v936 = vpop.xlane.xlu0 %935
        %v937 = vsub.f32 %v929, %v936
        %v938 = vmul.f32 %v937, 1.442695
        %v939 = vpow.pop %v938
        %v940 = vsel %vm887, %v939, 0.0
        %941 = vadd.xlane.f32.xlu0 %v940
        %v942 = vpop.xlane.xlu0 %941
        %v943 = vrcp.pop %v942
        %v944 = vpack.c.bf16 %v939, %v939
        %v946 = vsel %vm887, %v944, 0
        %vm948 = vcmask 1043456
        %v950 = vsel %vm948, %v886, 0
        %952 = vmatprep.subr.bf16.mxu0 0
        %953 = vmatpush1.bf16.msra.mxu0 %v950
        %954 = vmatprep.subr.bf16.mxu0 0
        %955 = vmatpush1.bf16.msra.mxu0 0
        %956 = vmatprep.subr.bf16.mxu0 0
        %957 = vmatpush1.bf16.msra.mxu0 0
        %958 = vmatprep.subr.bf16.mxu0 0
        %959 = vmatpush1.bf16.msra.mxu0 0
        %960 = vmatprep.subr.bf16.mxu0 0
        %961 = vmatpush1.bf16.msra.mxu0 0
        %962 = vmatprep.subr.bf16.mxu0 0
        %963 = vmatpush1.bf16.msra.mxu0 0
        %964 = vmatprep.subr.bf16.mxu0 0
        %965 = vmatpush1.bf16.msra.mxu0 0
        %966 = vmatprep.subr.bf16.mxu0 0
        %967 = vmatpush1.bf16.msra.mxu0 0
        %968 = vmatprep.subr.bf16.mxu0 0
        %969 = vmatpush1.bf16.msra.mxu0 0
        %970 = vmatprep.subr.bf16.mxu0 0
        %971 = vmatpush1.bf16.msra.mxu0 0
        %972 = vmatprep.subr.bf16.mxu0 0
        %973 = vmatpush1.bf16.msra.mxu0 0
        %974 = vmatprep.subr.bf16.mxu0 0
        %975 = vmatpush1.bf16.msra.mxu0 0
        %976 = vmatprep.subr.bf16.mxu0 0
        %977 = vmatpush1.bf16.msra.mxu0 0
        %978 = vmatprep.subr.bf16.mxu0 0
        %979 = vmatpush1.bf16.msra.mxu0 0
        %980 = vmatprep.subr.bf16.mxu0 0
        %981 = vmatpush1.bf16.msra.mxu0 0
        %982 = vmatprep.subr.bf16.mxu0 0
        %983 = vmatpush1.bf16.msra.mxu0 0
        %984 = vmatprep.mubr.bf16.mxu0 0
        %985 = vmatmul.mubr.bf16.gmra.mrb[0].mxu0 %v946
        %v986 = vpop.f32.mrb[0].mxu0
        %v987 = vadd.f32 0.0, %v986
        %v988 = vpop.f32.mrb[0].mxu0
        %v989 = vpop.f32.mrb[0].mxu0
        %v990 = vpop.f32.mrb[0].mxu0
        %991 = vdwg.mxu0
        %v992 = vmul.f32 %v987, %v943
        %994 = vrot.lane.b32.xlu0 %v884, 120
        %v995 = vpop.permute.xlu0 %994
        %997 = vrot.lane.b32.xlu0 %v885, 120
        %v998 = vpop.permute.xlu0 %997
        %v1000 = vsel %vm887, %v995, 0
        %v1003 = vsel %vm887, %v998, 0
        %1005 = vmatprep.subr.bf16.mxu0 0
        %1006 = vmatpush1.bf16.xpose.msra.mxu0 %v1003
        %1007 = vmatprep.subr.bf16.mxu0 0
        %1008 = vmatpush1.bf16.xpose.msra.mxu0 0
        %1009 = vmatprep.subr.bf16.mxu0 0
        %1010 = vmatpush1.bf16.xpose.msra.mxu0 0
        %1011 = vmatprep.subr.bf16.mxu0 0
        %1012 = vmatpush1.bf16.xpose.msra.mxu0 0
        %1013 = vmatprep.subr.bf16.mxu0 0
        %1014 = vmatpush1.bf16.xpose.msra.mxu0 0
        %1015 = vmatprep.subr.bf16.mxu0 0
        %1016 = vmatpush1.bf16.xpose.msra.mxu0 0
        %1017 = vmatprep.subr.bf16.mxu0 0
        %1018 = vmatpush1.bf16.xpose.msra.mxu0 0
        %1019 = vmatprep.subr.bf16.mxu0 0
        %1020 = vmatpush1.bf16.xpose.msra.mxu0 0
        %1021 = vmatprep.subr.bf16.mxu0 0
        %1022 = vmatpush1.bf16.xpose.msra.mxu0 0
        %1023 = vmatprep.subr.bf16.mxu0 0
        %1024 = vmatpush1.bf16.xpose.msra.mxu0 0
        %1025 = vmatprep.subr.bf16.mxu0 0
        %1026 = vmatpush1.bf16.xpose.msra.mxu0 0
        %1027 = vmatprep.subr.bf16.mxu0 0
        %1028 = vmatpush1.bf16.xpose.msra.mxu0 0
        %1029 = vmatprep.subr.bf16.mxu0 0
        %1030 = vmatpush1.bf16.xpose.msra.mxu0 0
        %1031 = vmatprep.subr.bf16.mxu0 0
        %1032 = vmatpush1.bf16.xpose.msra.mxu0 0
        %1033 = vmatprep.subr.bf16.mxu0 0
        %1034 = vmatpush1.bf16.xpose.msra.mxu0 0
        %1035 = vmatprep.subr.bf16.mxu0 0
        %1036 = vmatpush1.bf16.xpose.msra.mxu0 0
        %1037 = vmatprep.mubr.bf16.mxu0 0
        %1038 = vmatmul.mubr.bf16.gmra.mrb[0].mxu0 %v1000
        %v1039 = vpop.f32.mrb[0].mxu0
        %v1040 = vadd.f32 %v657, %v1039
        %v1041 = vpop.f32.mrb[0].mxu0
        %v1042 = vpop.f32.mrb[0].mxu0
        %v1043 = vpop.f32.mrb[0].mxu0
        %1044 = vdwg.mxu0
        %v1045 = vsel %vm887, %v1040, -inf
        %1046 = vmax.xlane.f32.xlu0 %v1045
        %v1047 = vpop.xlane.xlu0 %1046
        %v1048 = vsub.f32 %v1040, %v1047
        %v1049 = vmul.f32 %v1048, 1.442695
        %v1050 = vpow.pop %v1049
        %v1051 = vsel %vm887, %v1050, 0.0
        %1052 = vadd.xlane.f32.xlu0 %v1051
        %v1053 = vpop.xlane.xlu0 %1052
        %v1054 = vrcp.pop %v1053
        %v1055 = vpack.c.bf16 %v1050, %v1050
        %1057 = vrot.lane.b32.xlu0 %v886, 120
        %v1058 = vpop.permute.xlu0 %1057
        %v1060 = vsel %vm887, %v1055, 0
        %v1063 = vsel %vm948, %v1058, 0
        %1065 = vmatprep.subr.bf16.mxu0 0
        %1066 = vmatpush1.bf16.msra.mxu0 %v1063
        %1067 = vmatprep.subr.bf16.mxu0 0
        %1068 = vmatpush1.bf16.msra.mxu0 0
        %1069 = vmatprep.subr.bf16.mxu0 0
        %1070 = vmatpush1.bf16.msra.mxu0 0
        %1071 = vmatprep.subr.bf16.mxu0 0
        %1072 = vmatpush1.bf16.msra.mxu0 0
        %1073 = vmatprep.subr.bf16.mxu0 0
        %1074 = vmatpush1.bf16.msra.mxu0 0
        %1075 = vmatprep.subr.bf16.mxu0 0
        %1076 = vmatpush1.bf16.msra.mxu0 0
        %1077 = vmatprep.subr.bf16.mxu0 0
        %1078 = vmatpush1.bf16.msra.mxu0 0
        %1079 = vmatprep.subr.bf16.mxu0 0
        %1080 = vmatpush1.bf16.msra.mxu0 0
        %1081 = vmatprep.subr.bf16.mxu0 0
        %1082 = vmatpush1.bf16.msra.mxu0 0
        %1083 = vmatprep.subr.bf16.mxu0 0
        %1084 = vmatpush1.bf16.msra.mxu0 0
        %1085 = vmatprep.subr.bf16.mxu0 0
        %1086 = vmatpush1.bf16.msra.mxu0 0
        %1087 = vmatprep.subr.bf16.mxu0 0
        %1088 = vmatpush1.bf16.msra.mxu0 0
        %1089 = vmatprep.subr.bf16.mxu0 0
        %1090 = vmatpush1.bf16.msra.mxu0 0
        %1091 = vmatprep.subr.bf16.mxu0 0
        %1092 = vmatpush1.bf16.msra.mxu0 0
        %1093 = vmatprep.subr.bf16.mxu0 0
        %1094 = vmatpush1.bf16.msra.mxu0 0
        %1095 = vmatprep.subr.bf16.mxu0 0
        %1096 = vmatpush1.bf16.msra.mxu0 0
        %1097 = vmatprep.mubr.bf16.mxu0 0
        %1098 = vmatmul.mubr.bf16.gmra.mrb[0].mxu0 %v1060
        %v1099 = vpop.f32.mrb[0].mxu0
        %v1100 = vadd.f32 0.0, %v1099
        %v1101 = vpop.f32.mrb[0].mxu0
        %v1102 = vpop.f32.mrb[0].mxu0
        %v1103 = vpop.f32.mrb[0].mxu0
        %1104 = vdwg.mxu0
        %v1105 = vmul.f32 %v1100, %v1054
        %1106 = vrot.lane.b32.xlu0 %v884, 112
        %v1107 = vpop.permute.xlu0 %1106
        %1108 = vrot.lane.b32.xlu0 %v885, 112
        %v1109 = vpop.permute.xlu0 %1108
        %v1111 = vsel %vm887, %v1107, 0
        %v1114 = vsel %vm887, %v1109, 0
        %1116 = vmatprep.subr.bf16.mxu0 0
        %1117 = vmatpush1.bf16.xpose.msra.mxu0 %v1114
        %1118 = vmatprep.subr.bf16.mxu0 0
        %1119 = vmatpush1.bf16.xpose.msra.mxu0 0
        %1120 = vmatprep.subr.bf16.mxu0 0
        %1121 = vmatpush1.bf16.xpose.msra.mxu0 0
        %1122 = vmatprep.subr.bf16.mxu0 0
        %1123 = vmatpush1.bf16.xpose.msra.mxu0 0
        %1124 = vmatprep.subr.bf16.mxu0 0
        %1125 = vmatpush1.bf16.xpose.msra.mxu0 0
        %1126 = vmatprep.subr.bf16.mxu0 0
        %1127 = vmatpush1.bf16.xpose.msra.mxu0 0
        %1128 = vmatprep.subr.bf16.mxu0 0
        %1129 = vmatpush1.bf16.xpose.msra.mxu0 0
        %1130 = vmatprep.subr.bf16.mxu0 0
        %1131 = vmatpush1.bf16.xpose.msra.mxu0 0
        %1132 = vmatprep.subr.bf16.mxu0 0
        %1133 = vmatpush1.bf16.xpose.msra.mxu0 0
        %1134 = vmatprep.subr.bf16.mxu0 0
        %1135 = vmatpush1.bf16.xpose.msra.mxu0 0
        %1136 = vmatprep.subr.bf16.mxu0 0
        %1137 = vmatpush1.bf16.xpose.msra.mxu0 0
        %1138 = vmatprep.subr.bf16.mxu0 0
        %1139 = vmatpush1.bf16.xpose.msra.mxu0 0
        %1140 = vmatprep.subr.bf16.mxu0 0
        %1141 = vmatpush1.bf16.xpose.msra.mxu0 0
        %1142 = vmatprep.subr.bf16.mxu0 0
        %1143 = vmatpush1.bf16.xpose.msra.mxu0 0
        %1144 = vmatprep.subr.bf16.mxu0 0
        %1145 = vmatpush1.bf16.xpose.msra.mxu0 0
        %1146 = vmatprep.subr.bf16.mxu0 0
        %1147 = vmatpush1.bf16.xpose.msra.mxu0 0
        %1148 = vmatprep.mubr.bf16.mxu0 0
        %1149 = vmatmul.mubr.bf16.gmra.mrb[0].mxu0 %v1111
        %v1150 = vpop.f32.mrb[0].mxu0
        %v1151 = vadd.f32 %v657, %v1150
        %v1152 = vpop.f32.mrb[0].mxu0
        %v1153 = vpop.f32.mrb[0].mxu0
        %v1154 = vpop.f32.mrb[0].mxu0
        %1155 = vdwg.mxu0
        %v1156 = vsel %vm887, %v1151, -inf
        %1157 = vmax.xlane.f32.xlu0 %v1156
        %v1158 = vpop.xlane.xlu0 %1157
        %v1159 = vsub.f32 %v1151, %v1158
        %v1160 = vmul.f32 %v1159, 1.442695
        %v1161 = vpow.pop %v1160
        %v1162 = vsel %vm887, %v1161, 0.0
        %1163 = vadd.xlane.f32.xlu0 %v1162
        %v1164 = vpop.xlane.xlu0 %1163
        %v1165 = vrcp.pop %v1164
        %v1166 = vpack.c.bf16 %v1161, %v1161
        %1167 = vrot.lane.b32.xlu0 %v886, 112
        %v1168 = vpop.permute.xlu0 %1167
        %v1170 = vsel %vm887, %v1166, 0
        %v1173 = vsel %vm948, %v1168, 0
        %1175 = vmatprep.subr.bf16.mxu0 0
        %1176 = vmatpush1.bf16.msra.mxu0 %v1173
        %1177 = vmatprep.subr.bf16.mxu0 0
        %1178 = vmatpush1.bf16.msra.mxu0 0
        %1179 = vmatprep.subr.bf16.mxu0 0
        %1180 = vmatpush1.bf16.msra.mxu0 0
        %1181 = vmatprep.subr.bf16.mxu0 0
        %1182 = vmatpush1.bf16.msra.mxu0 0
        %1183 = vmatprep.subr.bf16.mxu0 0
        %1184 = vmatpush1.bf16.msra.mxu0 0
        %1185 = vmatprep.subr.bf16.mxu0 0
        %1186 = vmatpush1.bf16.msra.mxu0 0
        %1187 = vmatprep.subr.bf16.mxu0 0
        %1188 = vmatpush1.bf16.msra.mxu0 0
        %1189 = vmatprep.subr.bf16.mxu0 0
        %1190 = vmatpush1.bf16.msra.mxu0 0
        %1191 = vmatprep.subr.bf16.mxu0 0
        %1192 = vmatpush1.bf16.msra.mxu0 0
        %1193 = vmatprep.subr.bf16.mxu0 0
        %1194 = vmatpush1.bf16.msra.mxu0 0
        %1195 = vmatprep.subr.bf16.mxu0 0
        %1196 = vmatpush1.bf16.msra.mxu0 0
        %1197 = vmatprep.subr.bf16.mxu0 0
        %1198 = vmatpush1.bf16.msra.mxu0 0
        %1199 = vmatprep.subr.bf16.mxu0 0
        %1200 = vmatpush1.bf16.msra.mxu0 0
        %1201 = vmatprep.subr.bf16.mxu0 0
        %1202 = vmatpush1.bf16.msra.mxu0 0
        %1203 = vmatprep.subr.bf16.mxu0 0
        %1204 = vmatpush1.bf16.msra.mxu0 0
        %1205 = vmatprep.subr.bf16.mxu0 0
        %1206 = vmatpush1.bf16.msra.mxu0 0
        %1207 = vmatprep.mubr.bf16.mxu0 0
        %1208 = vmatmul.mubr.bf16.gmra.mrb[0].mxu0 %v1170
        %v1209 = vpop.f32.mrb[0].mxu0
        %v1210 = vadd.f32 0.0, %v1209
        %v1211 = vpop.f32.mrb[0].mxu0
        %v1212 = vpop.f32.mrb[0].mxu0
        %v1213 = vpop.f32.mrb[0].mxu0
        %1214 = vdwg.mxu0
        %v1215 = vmul.f32 %v1210, %v1165
        %1216 = vrot.lane.b32.xlu0 %v884, 104
        %v1217 = vpop.permute.xlu0 %1216
        %1218 = vrot.lane.b32.xlu0 %v885, 104
        %v1219 = vpop.permute.xlu0 %1218
        %v1221 = vsel %vm887, %v1217, 0
        %v1224 = vsel %vm887, %v1219, 0
        %1226 = vmatprep.subr.bf16.mxu0 0
        %1227 = vmatpush1.bf16.xpose.msra.mxu0 %v1224
        %1228 = vmatprep.subr.bf16.mxu0 0
        %1229 = vmatpush1.bf16.xpose.msra.mxu0 0
        %1230 = vmatprep.subr.bf16.mxu0 0
        %1231 = vmatpush1.bf16.xpose.msra.mxu0 0
        %1232 = vmatprep.subr.bf16.mxu0 0
        %1233 = vmatpush1.bf16.xpose.msra.mxu0 0
        %1234 = vmatprep.subr.bf16.mxu0 0
        %1235 = vmatpush1.bf16.xpose.msra.mxu0 0
        %1236 = vmatprep.subr.bf16.mxu0 0
        %1237 = vmatpush1.bf16.xpose.msra.mxu0 0
        %1238 = vmatprep.subr.bf16.mxu0 0
        %1239 = vmatpush1.bf16.xpose.msra.mxu0 0
        %1240 = vmatprep.subr.bf16.mxu0 0
        %1241 = vmatpush1.bf16.xpose.msra.mxu0 0
        %1242 = vmatprep.subr.bf16.mxu0 0
        %1243 = vmatpush1.bf16.xpose.msra.mxu0 0
        %1244 = vmatprep.subr.bf16.mxu0 0
        %1245 = vmatpush1.bf16.xpose.msra.mxu0 0
        %1246 = vmatprep.subr.bf16.mxu0 0
        %1247 = vmatpush1.bf16.xpose.msra.mxu0 0
        %1248 = vmatprep.subr.bf16.mxu0 0
        %1249 = vmatpush1.bf16.xpose.msra.mxu0 0
        %1250 = vmatprep.subr.bf16.mxu0 0
        %1251 = vmatpush1.bf16.xpose.msra.mxu0 0
        %1252 = vmatprep.subr.bf16.mxu0 0
        %1253 = vmatpush1.bf16.xpose.msra.mxu0 0
        %1254 = vmatprep.subr.bf16.mxu0 0
        %1255 = vmatpush1.bf16.xpose.msra.mxu0 0
        %1256 = vmatprep.subr.bf16.mxu0 0
        %1257 = vmatpush1.bf16.xpose.msra.mxu0 0
        %1258 = vmatprep.mubr.bf16.mxu0 0
        %1259 = vmatmul.mubr.bf16.gmra.mrb[0].mxu0 %v1221
        %v1260 = vpop.f32.mrb[0].mxu0
        %v1261 = vadd.f32 %v657, %v1260
        %v1262 = vpop.f32.mrb[0].mxu0
        %v1263 = vpop.f32.mrb[0].mxu0
        %v1264 = vpop.f32.mrb[0].mxu0
        %1265 = vdwg.mxu0
        %v1266 = vsel %vm887, %v1261, -inf
        %1267 = vmax.xlane.f32.xlu0 %v1266
        %v1268 = vpop.xlane.xlu0 %1267
        %v1269 = vsub.f32 %v1261, %v1268
        %v1270 = vmul.f32 %v1269, 1.442695
        %v1271 = vpow.pop %v1270
        %v1272 = vsel %vm887, %v1271, 0.0
        %1273 = vadd.xlane.f32.xlu0 %v1272
        %v1274 = vpop.xlane.xlu0 %1273
        %v1275 = vrcp.pop %v1274
        %v1276 = vpack.c.bf16 %v1271, %v1271
        %1277 = vrot.lane.b32.xlu0 %v886, 104
        %v1278 = vpop.permute.xlu0 %1277
        %v1280 = vsel %vm887, %v1276, 0
        %v1283 = vsel %vm948, %v1278, 0
        %1285 = vmatprep.subr.bf16.mxu0 0
        %1286 = vmatpush1.bf16.msra.mxu0 %v1283
        %1287 = vmatprep.subr.bf16.mxu0 0
        %1288 = vmatpush1.bf16.msra.mxu0 0
        %1289 = vmatprep.subr.bf16.mxu0 0
        %1290 = vmatpush1.bf16.msra.mxu0 0
        %1291 = vmatprep.subr.bf16.mxu0 0
        %1292 = vmatpush1.bf16.msra.mxu0 0
        %1293 = vmatprep.subr.bf16.mxu0 0
        %1294 = vmatpush1.bf16.msra.mxu0 0
        %1295 = vmatprep.subr.bf16.mxu0 0
        %1296 = vmatpush1.bf16.msra.mxu0 0
        %1297 = vmatprep.subr.bf16.mxu0 0
        %1298 = vmatpush1.bf16.msra.mxu0 0
        %1299 = vmatprep.subr.bf16.mxu0 0
        %1300 = vmatpush1.bf16.msra.mxu0 0
        %1301 = vmatprep.subr.bf16.mxu0 0
        %1302 = vmatpush1.bf16.msra.mxu0 0
        %1303 = vmatprep.subr.bf16.mxu0 0
        %1304 = vmatpush1.bf16.msra.mxu0 0
        %1305 = vmatprep.subr.bf16.mxu0 0
        %1306 = vmatpush1.bf16.msra.mxu0 0
        %1307 = vmatprep.subr.bf16.mxu0 0
        %1308 = vmatpush1.bf16.msra.mxu0 0
        %1309 = vmatprep.subr.bf16.mxu0 0
        %1310 = vmatpush1.bf16.msra.mxu0 0
        %1311 = vmatprep.subr.bf16.mxu0 0
        %1312 = vmatpush1.bf16.msra.mxu0 0
        %1313 = vmatprep.subr.bf16.mxu0 0
        %1314 = vmatpush1.bf16.msra.mxu0 0
        %1315 = vmatprep.subr.bf16.mxu0 0
        %1316 = vmatpush1.bf16.msra.mxu0 0
        %1317 = vmatprep.mubr.bf16.mxu0 0
        %1318 = vmatmul.mubr.bf16.gmra.mrb[0].mxu0 %v1280
        %v1319 = vpop.f32.mrb[0].mxu0
        %v1320 = vadd.f32 0.0, %v1319
        %v1321 = vpop.f32.mrb[0].mxu0
        %v1322 = vpop.f32.mrb[0].mxu0
        %v1323 = vpop.f32.mrb[0].mxu0
        %1324 = vdwg.mxu0
        %v1325 = vmul.f32 %v1320, %v1275
        %1327 = vrot.lane.b32.xlu0 %v1105, 8
        %v1328 = vpop.permute.xlu0 %1327
        %1331 = vrot.lane.b32.xlu0 %v1215, 16
        %v1332 = vpop.permute.xlu0 %1331
        %1335 = vrot.lane.b32.xlu0 %v1325, 24
        %v1336 = vpop.permute.xlu0 %1335
        %v1338 = vsel %vm887, %v992, %v1328
        %vm1339 = vcmask 130048
        %v1340 = vsel %vm1339, %v1338, %v1332
        %vm1341 = vcmask 195584
        %v1342 = vsel %vm1341, %v1340, %v1336
        %v1343 = vpack.c.bf16 %v1342, %v1342
        %v1344 = vld [vmem:[%s10] sm:$0xf]
        %v1345 = vld [vmem:[%s10 + $0x4] sm:$0xf]
        %v1346 = vld [vmem:[%s10 + $0x8] sm:$0xf]
        %v1347 = vld [vmem:[%s10 + $0xc] sm:$0xf]
        %v1352 = vunpack.c.l.b16 %v1344
        %v1353 = vunpack.c.l.b16 %v1345
        %v1354 = vunpack.c.l.b16 %v1346
        %v1355 = vunpack.c.l.b16 %v1347
        %v1356 = vpack.c.b16 %v1353, %v1352
        %v1357 = vpack.c.b16 %v1355, %v1354
        %v1361 = vsel %vm661, %v1343, 0
        %1363 = vmatprep.subr.bf16.mxu0 0
        %1364 = vmatpush1.bf16.msra.mxu0 %v1356
        %1365 = vmatprep.subr.bf16.mxu0 0
        %1366 = vmatpush1.bf16.msra.mxu0 %v1357
        %1367 = vmatprep.subr.bf16.mxu0 0
        %1368 = vmatpush1.bf16.msra.mxu0 0
        %1369 = vmatprep.subr.bf16.mxu0 0
        %1370 = vmatpush1.bf16.msra.mxu0 0
        %1371 = vmatprep.subr.bf16.mxu0 0
        %1372 = vmatpush1.bf16.msra.mxu0 0
        %1373 = vmatprep.subr.bf16.mxu0 0
        %1374 = vmatpush1.bf16.msra.mxu0 0
        %1375 = vmatprep.subr.bf16.mxu0 0
        %1376 = vmatpush1.bf16.msra.mxu0 0
        %1377 = vmatprep.subr.bf16.mxu0 0
        %1378 = vmatpush1.bf16.msra.mxu0 0
        %1379 = vmatprep.subr.bf16.mxu0 0
        %1380 = vmatpush1.bf16.msra.mxu0 0
        %1381 = vmatprep.subr.bf16.mxu0 0
        %1382 = vmatpush1.bf16.msra.mxu0 0
        %1383 = vmatprep.subr.bf16.mxu0 0
        %1384 = vmatpush1.bf16.msra.mxu0 0
        %1385 = vmatprep.subr.bf16.mxu0 0
        %1386 = vmatpush1.bf16.msra.mxu0 0
        %1387 = vmatprep.subr.bf16.mxu0 0
        %1388 = vmatpush1.bf16.msra.mxu0 0
        %1389 = vmatprep.subr.bf16.mxu0 0
        %1390 = vmatpush1.bf16.msra.mxu0 0
        %1391 = vmatprep.subr.bf16.mxu0 0
        %1392 = vmatpush1.bf16.msra.mxu0 0
        %1393 = vmatprep.subr.bf16.mxu0 0
        %1394 = vmatpush1.bf16.msra.mxu0 0
        %1395 = vmatprep.mubr.bf16.mxu0 0
        %1396 = vmatmul.mubr.bf16.gmra.mrb[0].mxu0 %v1361
        %v1397 = vpop.f32.mrb[0].mxu0
        %v1398 = vadd.f32 0.0, %v1397
        %v1399 = vpop.f32.mrb[0].mxu0
        %v1400 = vpop.f32.mrb[0].mxu0
        %v1401 = vpop.f32.mrb[0].mxu0
        %1402 = vdwg.mxu0
        %v1403 = vadd.f32 %v649, %v1398
        %v1404 = vld [vmem:[%s11] sm:$0x1]
        %v1406 = vlaneseq
        %v1407 = vshrl.u32 %v1406, 7
        %v1408 = vsub.s32 0, %v1407
        %v1409 = vrot.slane %v1404, %v1408
        %v1411 = vadd.f32 %v1403, %v1409
        %v1412 = vld [vmem:[%s12] sm:$0x1]
        %v1413 = vld [vmem:[%s13] sm:$0x1]
        %v1414 = vsel %vm661, %v1411, 0.0
        %1415 = vadd.xlane.f32.xlu0 %v1414
        %v1416 = vpop.xlane.xlu0 %1415
        %v1417 = vmul.f32 %v1416, %v665
        %v1418 = vsub.f32 %v1411, %v1417
        %v1419 = vmul.f32 %v1418, %v1418
        %v1420 = vsel %vm661, %v1419, 0.0
        %1421 = vadd.xlane.f32.xlu0 %v1420
        %v1422 = vpop.xlane.xlu0 %1421
        %v1423 = vmul.f32 %v1422, %v665
        %v1424 = vadd.f32 %v1423, 1e-05
        %v1425 = vrsqrt.pop %v1424
        %v1426 = vmul.f32 %v1418, %v1425
        %v1428 = vlaneseq
        %v1429 = vshrl.u32 %v1428, 7
        %v1430 = vsub.s32 0, %v1429
        %v1431 = vrot.slane %v1412, %v1430
        %v1433 = vmul.f32 %v1426, %v1431
        %v1435 = vlaneseq
        %v1436 = vshrl.u32 %v1435, 7
        %v1437 = vsub.s32 0, %v1436
        %v1438 = vrot.slane %v1413, %v1437
        %v1440 = vadd.f32 %v1433, %v1438
        %v1441 = vpack.c.bf16 %v1440, %v1440
        %v1442 = vld [vmem:[%s14] sm:$0xf]
        %v1443 = vld [vmem:[%s14 + $0x4] sm:$0xf]
        %v1444 = vld [vmem:[%s14 + $0x8] sm:$0xf]
        %v1445 = vld [vmem:[%s14 + $0xc] sm:$0xf]
        %v1446 = vld [vmem:[%s15] sm:$0x1]
        %v1448 = vlaneseq
        %v1449 = vshrl.u32 %v1448, 7
        %v1450 = vsub.s32 0, %v1449
        %v1451 = vrot.slane %v1446, %v1450
        %v1457 = vunpack.c.l.b16 %v1442
        %v1458 = vunpack.c.l.b16 %v1443
        %v1459 = vunpack.c.l.b16 %v1444
        %v1460 = vunpack.c.l.b16 %v1445
        %v1461 = vpack.c.b16 %v1458, %v1457
        %v1462 = vpack.c.b16 %v1460, %v1459
        %v1466 = vsel %vm661, %v1441, 0
        %1468 = vmatprep.subr.bf16.mxu0 0
        %1469 = vmatpush1.bf16.msra.mxu0 %v1461
        %1470 = vmatprep.subr.bf16.mxu0 0
        %1471 = vmatpush1.bf16.msra.mxu0 %v1462
        %1472 = vmatprep.subr.bf16.mxu0 0
        %1473 = vmatpush1.bf16.msra.mxu0 0
        %1474 = vmatprep.subr.bf16.mxu0 0
        %1475 = vmatpush1.bf16.msra.mxu0 0
        %1476 = vmatprep.subr.bf16.mxu0 0
        %1477 = vmatpush1.bf16.msra.mxu0 0
        %1478 = vmatprep.subr.bf16.mxu0 0
        %1479 = vmatpush1.bf16.msra.mxu0 0
        %1480 = vmatprep.subr.bf16.mxu0 0
        %1481 = vmatpush1.bf16.msra.mxu0 0
        %1482 = vmatprep.subr.bf16.mxu0 0
        %1483 = vmatpush1.bf16.msra.mxu0 0
        %1484 = vmatprep.subr.bf16.mxu0 0
        %1485 = vmatpush1.bf16.msra.mxu0 0
        %1486 = vmatprep.subr.bf16.mxu0 0
        %1487 = vmatpush1.bf16.msra.mxu0 0
        %1488 = vmatprep.subr.bf16.mxu0 0
        %1489 = vmatpush1.bf16.msra.mxu0 0
        %1490 = vmatprep.subr.bf16.mxu0 0
        %1491 = vmatpush1.bf16.msra.mxu0 0
        %1492 = vmatprep.subr.bf16.mxu0 0
        %1493 = vmatpush1.bf16.msra.mxu0 0
        %1494 = vmatprep.subr.bf16.mxu0 0
        %1495 = vmatpush1.bf16.msra.mxu0 0
        %1496 = vmatprep.subr.bf16.mxu0 0
        %1497 = vmatpush1.bf16.msra.mxu0 0
        %1498 = vmatprep.subr.bf16.mxu0 0
        %1499 = vmatpush1.bf16.msra.mxu0 0
        %1500 = vmatprep.mubr.bf16.mxu0 0
        %1501 = vmatmul.mubr.bf16.gmra.mrb[0].mxu0 %v1466
        %v1502 = vpop.f32.mrb[0].mxu0
        %v1503 = vadd.f32 %v1451, %v1502
        %v1504 = vpop.f32.mrb[0].mxu0
        %v1505 = vpop.f32.mrb[0].mxu0
        %v1506 = vpop.f32.mrb[0].mxu0
        %1507 = vdwg.mxu0
        %v1508 = vmul.f32 %v1503, %v1503
        %v1509 = vmul.f32 %v1503, %v1508
        %v1510 = vmul.f32 %v1509, 0.044715
        %v1511 = vadd.f32 %v1503, %v1510
        %v1512 = vmul.f32 %v1511, 0.7978846
        %v1513 = vtanh.pop %v1512
        %v1514 = vadd.f32 %v1513, 1.0
        %v1515 = vmul.f32 %v1514, 0.5
        %v1516 = vmul.f32 %v1503, %v1515
        %v1517 = vpack.c.bf16 %v1516, %v1516
        %v1518 = vld [vmem:[%s16] sm:$0xf]
        %v1519 = vld [vmem:[%s16 + $0x4] sm:$0xf]
        %v1520 = vld [vmem:[%s16 + $0x8] sm:$0xf]
        %v1521 = vld [vmem:[%s16 + $0xc] sm:$0xf]
        %1522 = vrot.lane.b32.xlu0 %v1461, 96
        %v1523 = vpop.permute.xlu0 %1522
        %1524 = vrot.lane.b32.xlu0 %v1462, 96
        %v1525 = vpop.permute.xlu0 %1524
        %1528 = vrot.lane.b32.xlu0 %v1451, 96
        %v1529 = vpop.permute.xlu0 %1528
        %1531 = vmatprep.subr.bf16.mxu0 0
        %1532 = vmatpush1.bf16.msra.mxu0 %v1523
        %1533 = vmatprep.subr.bf16.mxu0 0
        %1534 = vmatpush1.bf16.msra.mxu0 %v1525
        %1535 = vmatprep.subr.bf16.mxu0 0
        %1536 = vmatpush1.bf16.msra.mxu0 0
        %1537 = vmatprep.subr.bf16.mxu0 0
        %1538 = vmatpush1.bf16.msra.mxu0 0
        %1539 = vmatprep.subr.bf16.mxu0 0
        %1540 = vmatpush1.bf16.msra.mxu0 0
        %1541 = vmatprep.subr.bf16.mxu0 0
        %1542 = vmatpush1.bf16.msra.mxu0 0
        %1543 = vmatprep.subr.bf16.mxu0 0
        %1544 = vmatpush1.bf16.msra.mxu0 0
        %1545 = vmatprep.subr.bf16.mxu0 0
        %1546 = vmatpush1.bf16.msra.mxu0 0
        %1547 = vmatprep.subr.bf16.mxu0 0
        %1548 = vmatpush1.bf16.msra.mxu0 0
        %1549 = vmatprep.subr.bf16.mxu0 0
        %1550 = vmatpush1.bf16.msra.mxu0 0
        %1551 = vmatprep.subr.bf16.mxu0 0
        %1552 = vmatpush1.bf16.msra.mxu0 0
        %1553 = vmatprep.subr.bf16.mxu0 0
        %1554 = vmatpush1.bf16.msra.mxu0 0
        %1555 = vmatprep.subr.bf16.mxu0 0
        %1556 = vmatpush1.bf16.msra.mxu0 0
        %1557 = vmatprep.subr.bf16.mxu0 0
        %1558 = vmatpush1.bf16.msra.mxu0 0
        %1559 = vmatprep.subr.bf16.mxu0 0
        %1560 = vmatpush1.bf16.msra.mxu0 0
        %1561 = vmatprep.subr.bf16.mxu0 0
        %1562 = vmatpush1.bf16.msra.mxu0 0
        %1563 = vmatprep.mubr.bf16.mxu0 0
        %1564 = vmatmul.mubr.bf16.gmra.mrb[0].mxu0 %v1466
        %v1565 = vpop.f32.mrb[0].mxu0
        %v1566 = vadd.f32 %v1529, %v1565
        %v1567 = vpop.f32.mrb[0].mxu0
        %v1568 = vpop.f32.mrb[0].mxu0
        %v1569 = vpop.f32.mrb[0].mxu0
        %1570 = vdwg.mxu0
        %v1571 = vmul.f32 %v1566, %v1566
        %v1572 = vmul.f32 %v1566, %v1571
        %v1573 = vmul.f32 %v1572, 0.044715
        %v1574 = vadd.f32 %v1566, %v1573
        %v1575 = vmul.f32 %v1574, 0.7978846
        %v1576 = vtanh.pop %v1575
        %v1577 = vadd.f32 %v1576, 1.0
        %v1578 = vmul.f32 %v1577, 0.5
        %v1579 = vmul.f32 %v1566, %v1578
        %v1580 = vpack.c.bf16 %v1579, %v1579
        %v1581 = vld [vmem:[%s16 + $0x10] sm:$0xf]
        %v1582 = vld [vmem:[%s16 + $0x14] sm:$0xf]
        %v1583 = vld [vmem:[%s16 + $0x18] sm:$0xf]
        %v1584 = vld [vmem:[%s16 + $0x1c] sm:$0xf]
        %v1589 = vunpack.c.l.b16 %v1581
        %v1590 = vunpack.c.l.b16 %v1582
        %v1591 = vunpack.c.l.b16 %v1583
        %v1592 = vunpack.c.l.b16 %v1584
        %v1593 = vpack.c.b16 %v1590, %v1589
        %v1594 = vpack.c.b16 %v1592, %v1591
        %v1598 = vsel %vm661, %v1580, 0
        %1600 = vmatprep.subr.bf16.mxu0 0
        %1601 = vmatpush1.bf16.msra.mxu0 %v1593
        %1602 = vmatprep.subr.bf16.mxu0 0
        %1603 = vmatpush1.bf16.msra.mxu0 %v1594
        %1604 = vmatprep.subr.bf16.mxu0 0
        %1605 = vmatpush1.bf16.msra.mxu0 0
        %1606 = vmatprep.subr.bf16.mxu0 0
        %1607 = vmatpush1.bf16.msra.mxu0 0
        %1608 = vmatprep.subr.bf16.mxu0 0
        %1609 = vmatpush1.bf16.msra.mxu0 0
        %1610 = vmatprep.subr.bf16.mxu0 0
        %1611 = vmatpush1.bf16.msra.mxu0 0
        %1612 = vmatprep.subr.bf16.mxu0 0
        %1613 = vmatpush1.bf16.msra.mxu0 0
        %1614 = vmatprep.subr.bf16.mxu0 0
        %1615 = vmatpush1.bf16.msra.mxu0 0
        %1616 = vmatprep.subr.bf16.mxu0 0
        %1617 = vmatpush1.bf16.msra.mxu0 0
        %1618 = vmatprep.subr.bf16.mxu0 0
        %1619 = vmatpush1.bf16.msra.mxu0 0
        %1620 = vmatprep.subr.bf16.mxu0 0
        %1621 = vmatpush1.bf16.msra.mxu0 0
        %1622 = vmatprep.subr.bf16.mxu0 0
        %1623 = vmatpush1.bf16.msra.mxu0 0
        %1624 = vmatprep.subr.bf16.mxu0 0
        %1625 = vmatpush1.bf16.msra.mxu0 0
        %1626 = vmatprep.subr.bf16.mxu0 0
        %1627 = vmatpush1.bf16.msra.mxu0 0
        %1628 = vmatprep.subr.bf16.mxu0 0
        %1629 = vmatpush1.bf16.msra.mxu0 0
        %1630 = vmatprep.subr.bf16.mxu0 0
        %1631 = vmatpush1.bf16.msra.mxu0 0
        %1632 = vmatprep.mubr.bf16.mxu0 0
        %1633 = vmatmul.mubr.bf16.gmra.mrb[0].mxu0 %v1598
        %v1634 = vpop.f32.mrb[0].mxu0
        %v1635 = vadd.f32 0.0, %v1634
        %v1636 = vpop.f32.mrb[0].mxu0
        %v1637 = vpop.f32.mrb[0].mxu0
        %v1638 = vpop.f32.mrb[0].mxu0
        %1639 = vdwg.mxu0
        %v1644 = vunpack.c.l.b16 %v1518
        %v1645 = vunpack.c.l.b16 %v1519
        %v1646 = vunpack.c.l.b16 %v1520
        %v1647 = vunpack.c.l.b16 %v1521
        %v1648 = vpack.c.b16 %v1645, %v1644
        %v1649 = vpack.c.b16 %v1647, %v1646
        %v1653 = vsel %vm661, %v1517, 0
        %1655 = vmatprep.subr.bf16.mxu0 0
        %1656 = vmatpush1.bf16.msra.mxu0 %v1648
        %1657 = vmatprep.subr.bf16.mxu0 0
        %1658 = vmatpush1.bf16.msra.mxu0 %v1649
        %1659 = vmatprep.subr.bf16.mxu0 0
        %1660 = vmatpush1.bf16.msra.mxu0 0
        %1661 = vmatprep.subr.bf16.mxu0 0
        %1662 = vmatpush1.bf16.msra.mxu0 0
        %1663 = vmatprep.subr.bf16.mxu0 0
        %1664 = vmatpush1.bf16.msra.mxu0 0
        %1665 = vmatprep.subr.bf16.mxu0 0
        %1666 = vmatpush1.bf16.msra.mxu0 0
        %1667 = vmatprep.subr.bf16.mxu0 0
        %1668 = vmatpush1.bf16.msra.mxu0 0
        %1669 = vmatprep.subr.bf16.mxu0 0
        %1670 = vmatpush1.bf16.msra.mxu0 0
        %1671 = vmatprep.subr.bf16.mxu0 0
        %1672 = vmatpush1.bf16.msra.mxu0 0
        %1673 = vmatprep.subr.bf16.mxu0 0
        %1674 = vmatpush1.bf16.msra.mxu0 0
        %1675 = vmatprep.subr.bf16.mxu0 0
        %1676 = vmatpush1.bf16.msra.mxu0 0
        %1677 = vmatprep.subr.bf16.mxu0 0
        %1678 = vmatpush1.bf16.msra.mxu0 0
        %1679 = vmatprep.subr.bf16.mxu0 0
        %1680 = vmatpush1.bf16.msra.mxu0 0
        %1681 = vmatprep.subr.bf16.mxu0 0
        %1682 = vmatpush1.bf16.msra.mxu0 0
        %1683 = vmatprep.subr.bf16.mxu0 0
        %1684 = vmatpush1.bf16.msra.mxu0 0
        %1685 = vmatprep.subr.bf16.mxu0 0
        %1686 = vmatpush1.bf16.msra.mxu0 0
        %1687 = vmatprep.mubr.bf16.mxu0 0
        %1688 = vmatmul.mubr.bf16.gmra.mrb[0].mxu0 %v1653
        %v1689 = vpop.f32.mrb[0].mxu0
        %v1690 = vadd.f32 %v1635, %v1689
        %v1691 = vpop.f32.mrb[0].mxu0
        %v1692 = vpop.f32.mrb[0].mxu0
        %v1693 = vpop.f32.mrb[0].mxu0
        %1694 = vdwg.mxu0
        %1695 = vrot.lane.b32.xlu0 %v1461, 64
        %v1696 = vpop.permute.xlu0 %1695
        %1697 = vrot.lane.b32.xlu0 %v1462, 64
        %v1698 = vpop.permute.xlu0 %1697
        %1701 = vrot.lane.b32.xlu0 %v1451, 64
        %v1702 = vpop.permute.xlu0 %1701
        %1704 = vmatprep.subr.bf16.mxu0 0
        %1705 = vmatpush1.bf16.msra.mxu0 %v1696
        %1706 = vmatprep.subr.bf16.mxu0 0
        %1707 = vmatpush1.bf16.msra.mxu0 %v1698
        %1708 = vmatprep.subr.bf16.mxu0 0
        %1709 = vmatpush1.bf16.msra.mxu0 0
        %1710 = vmatprep.subr.bf16.mxu0 0
        %1711 = vmatpush1.bf16.msra.mxu0 0
        %1712 = vmatprep.subr.bf16.mxu0 0
        %1713 = vmatpush1.bf16.msra.mxu0 0
        %1714 = vmatprep.subr.bf16.mxu0 0
        %1715 = vmatpush1.bf16.msra.mxu0 0
        %1716 = vmatprep.subr.bf16.mxu0 0
        %1717 = vmatpush1.bf16.msra.mxu0 0
        %1718 = vmatprep.subr.bf16.mxu0 0
        %1719 = vmatpush1.bf16.msra.mxu0 0
        %1720 = vmatprep.subr.bf16.mxu0 0
        %1721 = vmatpush1.bf16.msra.mxu0 0
        %1722 = vmatprep.subr.bf16.mxu0 0
        %1723 = vmatpush1.bf16.msra.mxu0 0
        %1724 = vmatprep.subr.bf16.mxu0 0
        %1725 = vmatpush1.bf16.msra.mxu0 0
        %1726 = vmatprep.subr.bf16.mxu0 0
        %1727 = vmatpush1.bf16.msra.mxu0 0
        %1728 = vmatprep.subr.bf16.mxu0 0
        %1729 = vmatpush1.bf16.msra.mxu0 0
        %1730 = vmatprep.subr.bf16.mxu0 0
        %1731 = vmatpush1.bf16.msra.mxu0 0
        %1732 = vmatprep.subr.bf16.mxu0 0
        %1733 = vmatpush1.bf16.msra.mxu0 0
        %1734 = vmatprep.subr.bf16.mxu0 0
        %1735 = vmatpush1.bf16.msra.mxu0 0
        %1736 = vmatprep.mubr.bf16.mxu0 0
        %1737 = vmatmul.mubr.bf16.gmra.mrb[0].mxu0 %v1466
        %v1738 = vpop.f32.mrb[0].mxu0
        %v1739 = vadd.f32 %v1702, %v1738
        %v1740 = vpop.f32.mrb[0].mxu0
        %v1741 = vpop.f32.mrb[0].mxu0
        %v1742 = vpop.f32.mrb[0].mxu0
        %1743 = vdwg.mxu0
        %v1744 = vmul.f32 %v1739, %v1739
        %v1745 = vmul.f32 %v1739, %v1744
        %v1746 = vmul.f32 %v1745, 0.044715
        %v1747 = vadd.f32 %v1739, %v1746
        %v1748 = vmul.f32 %v1747, 0.7978846
        %v1749 = vtanh.pop %v1748
        %v1750 = vadd.f32 %v1749, 1.0
        %v1751 = vmul.f32 %v1750, 0.5
        %v1752 = vmul.f32 %v1739, %v1751
        %v1753 = vpack.c.bf16 %v1752, %v1752
        %v1754 = vld [vmem:[%s16 + $0x20] sm:$0xf]
        %v1755 = vld [vmem:[%s16 + $0x24] sm:$0xf]
        %v1756 = vld [vmem:[%s16 + $0x28] sm:$0xf]
        %v1757 = vld [vmem:[%s16 + $0x2c] sm:$0xf]
        %v1762 = vunpack.c.l.b16 %v1754
        %v1763 = vunpack.c.l.b16 %v1755
        %v1764 = vunpack.c.l.b16 %v1756
        %v1765 = vunpack.c.l.b16 %v1757
        %v1766 = vpack.c.b16 %v1763, %v1762
        %v1767 = vpack.c.b16 %v1765, %v1764
        %v1771 = vsel %vm661, %v1753, 0
        %1773 = vmatprep.subr.bf16.mxu0 0
        %1774 = vmatpush1.bf16.msra.mxu0 %v1766
        %1775 = vmatprep.subr.bf16.mxu0 0
        %1776 = vmatpush1.bf16.msra.mxu0 %v1767
        %1777 = vmatprep.subr.bf16.mxu0 0
        %1778 = vmatpush1.bf16.msra.mxu0 0
        %1779 = vmatprep.subr.bf16.mxu0 0
        %1780 = vmatpush1.bf16.msra.mxu0 0
        %1781 = vmatprep.subr.bf16.mxu0 0
        %1782 = vmatpush1.bf16.msra.mxu0 0
        %1783 = vmatprep.subr.bf16.mxu0 0
        %1784 = vmatpush1.bf16.msra.mxu0 0
        %1785 = vmatprep.subr.bf16.mxu0 0
        %1786 = vmatpush1.bf16.msra.mxu0 0
        %1787 = vmatprep.subr.bf16.mxu0 0
        %1788 = vmatpush1.bf16.msra.mxu0 0
        %1789 = vmatprep.subr.bf16.mxu0 0
        %1790 = vmatpush1.bf16.msra.mxu0 0
        %1791 = vmatprep.subr.bf16.mxu0 0
        %1792 = vmatpush1.bf16.msra.mxu0 0
        %1793 = vmatprep.subr.bf16.mxu0 0
        %1794 = vmatpush1.bf16.msra.mxu0 0
        %1795 = vmatprep.subr.bf16.mxu0 0
        %1796 = vmatpush1.bf16.msra.mxu0 0
        %1797 = vmatprep.subr.bf16.mxu0 0
        %1798 = vmatpush1.bf16.msra.mxu0 0
        %1799 = vmatprep.subr.bf16.mxu0 0
        %1800 = vmatpush1.bf16.msra.mxu0 0
        %1801 = vmatprep.subr.bf16.mxu0 0
        %1802 = vmatpush1.bf16.msra.mxu0 0
        %1803 = vmatprep.subr.bf16.mxu0 0
        %1804 = vmatpush1.bf16.msra.mxu0 0
        %1805 = vmatprep.mubr.bf16.mxu0 0
        %1806 = vmatmul.mubr.bf16.gmra.mrb[0].mxu0 %v1771
        %v1807 = vpop.f32.mrb[0].mxu0
        %v1808 = vadd.f32 0.0, %v1807
        %v1809 = vpop.f32.mrb[0].mxu0
        %v1810 = vpop.f32.mrb[0].mxu0
        %v1811 = vpop.f32.mrb[0].mxu0
        %1812 = vdwg.mxu0
        %v1813 = vadd.f32 %v1690, %v1808
        %1814 = vrot.lane.b32.xlu0 %v1461, 32
        %v1815 = vpop.permute.xlu0 %1814
        %1816 = vrot.lane.b32.xlu0 %v1462, 32
        %v1817 = vpop.permute.xlu0 %1816
        %1820 = vrot.lane.b32.xlu0 %v1451, 32
        %v1821 = vpop.permute.xlu0 %1820
        %1823 = vmatprep.subr.bf16.mxu0 0
        %1824 = vmatpush1.bf16.msra.mxu0 %v1815
        %1825 = vmatprep.subr.bf16.mxu0 0
        %1826 = vmatpush1.bf16.msra.mxu0 %v1817
        %1827 = vmatprep.subr.bf16.mxu0 0
        %1828 = vmatpush1.bf16.msra.mxu0 0
        %1829 = vmatprep.subr.bf16.mxu0 0
        %1830 = vmatpush1.bf16.msra.mxu0 0
        %1831 = vmatprep.subr.bf16.mxu0 0
        %1832 = vmatpush1.bf16.msra.mxu0 0
        %1833 = vmatprep.subr.bf16.mxu0 0
        %1834 = vmatpush1.bf16.msra.mxu0 0
        %1835 = vmatprep.subr.bf16.mxu0 0
        %1836 = vmatpush1.bf16.msra.mxu0 0
        %1837 = vmatprep.subr.bf16.mxu0 0
        %1838 = vmatpush1.bf16.msra.mxu0 0
        %1839 = vmatprep.subr.bf16.mxu0 0
        %1840 = vmatpush1.bf16.msra.mxu0 0
        %1841 = vmatprep.subr.bf16.mxu0 0
        %1842 = vmatpush1.bf16.msra.mxu0 0
        %1843 = vmatprep.subr.bf16.mxu0 0
        %1844 = vmatpush1.bf16.msra.mxu0 0
        %1845 = vmatprep.subr.bf16.mxu0 0
        %1846 = vmatpush1.bf16.msra.mxu0 0
        %1847 = vmatprep.subr.bf16.mxu0 0
        %1848 = vmatpush1.bf16.msra.mxu0 0
        %1849 = vmatprep.subr.bf16.mxu0 0
        %1850 = vmatpush1.bf16.msra.mxu0 0
        %1851 = vmatprep.subr.bf16.mxu0 0
        %1852 = vmatpush1.bf16.msra.mxu0 0
        %1853 = vmatprep.subr.bf16.mxu0 0
        %1854 = vmatpush1.bf16.msra.mxu0 0
        %1855 = vmatprep.mubr.bf16.mxu0 0
        %1856 = vmatmul.mubr.bf16.gmra.mrb[0].mxu0 %v1466
        %v1857 = vpop.f32.mrb[0].mxu0
        %v1858 = vadd.f32 %v1821, %v1857
        %v1859 = vpop.f32.mrb[0].mxu0
        %v1860 = vpop.f32.mrb[0].mxu0
        %v1861 = vpop.f32.mrb[0].mxu0
        %1862 = vdwg.mxu0
        %v1863 = vmul.f32 %v1858, %v1858
        %v1864 = vmul.f32 %v1858, %v1863
        %v1865 = vmul.f32 %v1864, 0.044715
        %v1866 = vadd.f32 %v1858, %v1865
        %v1867 = vmul.f32 %v1866, 0.7978846
        %v1868 = vtanh.pop %v1867
        %v1869 = vadd.f32 %v1868, 1.0
        %v1870 = vmul.f32 %v1869, 0.5
        %v1871 = vmul.f32 %v1858, %v1870
        %v1872 = vpack.c.bf16 %v1871, %v1871
        %v1873 = vld [vmem:[%s16 + $0x30] sm:$0xf]
        %v1874 = vld [vmem:[%s16 + $0x34] sm:$0xf]
        %v1875 = vld [vmem:[%s16 + $0x38] sm:$0xf]
        %v1876 = vld [vmem:[%s16 + $0x3c] sm:$0xf]
        %v1881 = vunpack.c.l.b16 %v1873
        %v1882 = vunpack.c.l.b16 %v1874
        %v1883 = vunpack.c.l.b16 %v1875
        %v1884 = vunpack.c.l.b16 %v1876
        %v1885 = vpack.c.b16 %v1882, %v1881
        %v1886 = vpack.c.b16 %v1884, %v1883
        %v1890 = vsel %vm661, %v1872, 0
        %1892 = vmatprep.subr.bf16.mxu0 0
        %1893 = vmatpush1.bf16.msra.mxu0 %v1885
        %1894 = vmatprep.subr.bf16.mxu0 0
        %1895 = vmatpush1.bf16.msra.mxu0 %v1886
        %1896 = vmatprep.subr.bf16.mxu0 0
        %1897 = vmatpush1.bf16.msra.mxu0 0
        %1898 = vmatprep.subr.bf16.mxu0 0
        %1899 = vmatpush1.bf16.msra.mxu0 0
        %1900 = vmatprep.subr.bf16.mxu0 0
        %1901 = vmatpush1.bf16.msra.mxu0 0
        %1902 = vmatprep.subr.bf16.mxu0 0
        %1903 = vmatpush1.bf16.msra.mxu0 0
        %1904 = vmatprep.subr.bf16.mxu0 0
        %1905 = vmatpush1.bf16.msra.mxu0 0
        %1906 = vmatprep.subr.bf16.mxu0 0
        %1907 = vmatpush1.bf16.msra.mxu0 0
        %1908 = vmatprep.subr.bf16.mxu0 0
        %1909 = vmatpush1.bf16.msra.mxu0 0
        %1910 = vmatprep.subr.bf16.mxu0 0
        %1911 = vmatpush1.bf16.msra.mxu0 0
        %1912 = vmatprep.subr.bf16.mxu0 0
        %1913 = vmatpush1.bf16.msra.mxu0 0
        %1914 = vmatprep.subr.bf16.mxu0 0
        %1915 = vmatpush1.bf16.msra.mxu0 0
        %1916 = vmatprep.subr.bf16.mxu0 0
        %1917 = vmatpush1.bf16.msra.mxu0 0
        %1918 = vmatprep.subr.bf16.mxu0 0
        %1919 = vmatpush1.bf16.msra.mxu0 0
        %1920 = vmatprep.subr.bf16.mxu0 0
        %1921 = vmatpush1.bf16.msra.mxu0 0
        %1922 = vmatprep.subr.bf16.mxu0 0
        %1923 = vmatpush1.bf16.msra.mxu0 0
        %1924 = vmatprep.mubr.bf16.mxu0 0
        %1925 = vmatmul.mubr.bf16.gmra.mrb[0].mxu0 %v1890
        %v1926 = vpop.f32.mrb[0].mxu0
        %v1927 = vadd.f32 0.0, %v1926
        %v1928 = vpop.f32.mrb[0].mxu0
        %v1929 = vpop.f32.mrb[0].mxu0
        %v1930 = vpop.f32.mrb[0].mxu0
        %1931 = vdwg.mxu0
        %v1932 = vadd.f32 %v1813, %v1927
        %v1933 = vadd.f32 %v1411, %v1932
        %v1934 = vld [vmem:[%s17] sm:$0x1]
        %v1936 = vlaneseq
        %v1937 = vshrl.u32 %v1936, 7
        %v1938 = vsub.s32 0, %v1937
        %v1939 = vrot.slane %v1934, %v1938
        %v1941 = vadd.f32 %v1933, %v1939
        %1942 = vst.msk [vmem:[%s640] sm:$0xff] %vm661, %v1941
        %s1943 = sand.u32 %s431, 1
        %s1944 = scalar_lea.sflag [#allocation4], %s1943
        %s1945 = sand.u32 %s431, 1
        %s1946 = smul.addr %s1945, 8
        %s1947 = scalar_lea.vmem [#allocation11], %s1946
        // Predicated region
        $region113: #{tpu_custom_call.1} parent=91 // pred_check
          %p1948 = pneg %p441
        $region114: #{tpu_custom_call.1} parent=91 // pred_check_branch
          %1950 = sbr.rel (%p1948) target = $region116
        $region115: #{tpu_custom_call.1} parent=91 // pred_region
          %s1952 = ssub.s32 128, 128
          %1953 = vsyncadd %s1944, %s1952
          %s1954 = smul.addr %s35, 128
          %s1955 = scalar_lea.hbm %s18, %s1954
          %s1957 = sshll.u32 %s1947, 4
          %s1958 = int_to_ptr.vmem [resolvable:$true] %s1957
          %1960 = dma.vmem_to_hbm [thread:$0]  %s1958, 128, %s1955, %s1944
        $region116: #{tpu_custom_call.1} parent=91 // pred_fallthru
          _
      $region92: #{tpu_custom_call.1} parent=5 // pred_fallthru
        _
      %p1961 = scmp.le.s32.totalorder 2, %s30
      // Predicated region
      $region117: #{tpu_custom_call.1} parent=5 // pred_check
        %p1962 = pneg %p1961
      $region118: #{tpu_custom_call.1} parent=5 // pred_check_branch
        %1964 = sbr.rel (%p1962) target = $region120
      $region119: #{tpu_custom_call.1} parent=5 // pred_region
        %s1965 = ssub.s32 %s30, 2
        // Predicated region
        $region121: #{tpu_custom_call.1} parent=119 // pred_check
          %p1966 = pneg %p447
        $region122: #{tpu_custom_call.1} parent=119 // pred_check_branch
          %1968 = sbr.rel (%p1966) target = $region124
        $region123: #{tpu_custom_call.1} parent=119 // pred_region
          %s1969 = sand.u32 %s432, 1
          %s1970 = scalar_lea.sflag [#allocation4], %s1969
          %s1971 = sand.u32 %s432, 1
          %s1972 = smul.addr %s1971, 8
          %s1973 = scalar_lea.vmem [#allocation11], %s1972
          %1974 = dma.done %s1970, 128
        $region124: #{tpu_custom_call.1} parent=119 // pred_fallthru
          _
      $region120: #{tpu_custom_call.1} parent=5 // pred_fallthru
        _
    $region6: #{tpu_custom_call.1} parent=1 // loop_footer
      %s34 = sadd.s32 1, %s30
    $region7: #{tpu_custom_call.1} parent=1 // loop_footer_branch
      %29 = sbr.rel target = $region3
    $region8: #{tpu_custom_call.1} parent=1 // loop_exit
      _
    %1975 = vsyncpa [#allocation3], 1
    %s1976 = scalar_lea.sflag [#allocation3], 1
    %1977 = vsyncpa %s1976, 1
    %1978 = vsyncpa [#allocation6], 1
    %1979 = vsyncpa [#allocation9], 1
    %1980 = vsyncpa [#allocation4], 1
    %s1981 = scalar_lea.sflag [#allocation4], 1
    %1982 = vsyncpa %s1981, 1

</llo_original>
